<compile_context>
chip_gen: v5e
topology: v5e:2x2
jax: 0.10.0
libtpu: 0.0.40
codegen_flags: <defaults>
</compile_context>

<pallas_src>
import jax
import jax.numpy as jnp
from jax import lax
from jax.experimental import pallas as pl
from jax.experimental.pallas import tpu as pltpu


def _make_bottleneck_kernel(H, W, C, Cmid, margin):
    """Builds the fused kernel for a fixed (H, W, C) geometry."""
    L = H * W
    M = margin

    def kernel(x_ref, w1_ref, b1_ref, w2_ref, b2_ref, out_ref, xe_ref, he_ref):
        # x_ref / out_ref : (Nb, C, L)     lane-dense blocks (L = H*W)
        # w1_ref (9*C*Cmid,), b1_ref (Cmid,), w2_ref (9*Cmid*C,), b2_ref (C,)
        #                     : SMEM (HWIO-flattened weights, biases)
        # xe_ref : (Nb, C,    M + L + M) VMEM staging buffer (margin lanes
        # he_ref : (Nb, Cmid, M + L + M)  are scratch and never selected)
        Nb = x_ref.shape[0]
        f32 = jnp.float32

        # Border masks on the flat spatial index (built once, lane-dense).
        u = lax.broadcasted_iota(jnp.int32, (Nb, L), 1)
        col = u % W
        top = u < W                 # image row i == 0
        bottom = u >= L - W         # image row i == H - 1
        left = col == 0             # image col j == 0
        right = col == W - 1        # image col j == W - 1

        # Stage x into the margin buffer: one contiguous, lane-aligned copy.
        xe_ref[:, :, M:M + L] = x_ref[...].astype(f32)

        def tap(src_ref, ci, dy, dx):
            """Reflect-padded 3x3 tap (dy, dx) of channel ci on the flat
            layout: constant flat shift + masked border corrections."""
            def shifted(a, b):
                s = M + a * W + b
                return src_ref[:, ci, s:s + L]          # (Nb, L)

            v = shifted(dy, dx)
            # Column reflection (j + dx outside [0, W)).
            if dx == -1:
                v = jnp.where(left, shifted(dy, 1), v)
            elif dx == 1:
                v = jnp.where(right, shifted(dy, -1), v)
            # Row reflection (i + dy outside [0, H)); the reflected row's
            # value needs its own column reflection at the corners.
            if dy != 0:
                ry = -dy
                r = shifted(ry, dx)
                if dx == -1:
                    r = jnp.where(left, shifted(ry, 1), r)
                elif dx == 1:
                    r = jnp.where(right, shifted(ry, -1), r)
                v = jnp.where(top if dy == -1 else bottom, r, v)
            return v

        def conv3x3_relu(src_ref, Cin, Cout, w_ref, b_ref, store):
            # Per-(co, dy) partial accumulators: small live set + extra ILP.
            acc = [[jnp.zeros((Nb, L), f32) for _ in range(3)]
                   for _ in range(Cout)]
            for dyi, dy in enumerate((-1, 0, 1)):
                for dx in (-1, 0, 1):
                    ky, kx = dy + 1, dx + 1
                    for ci in range(Cin):
                        t = tap(src_ref, ci, dy, dx)
                        base = (ky * 3 + kx) * Cin * Cout + ci * Cout
                        for co in range(Cout):
                            acc[co][dyi] = acc[co][dyi] + w_ref[base + co] * t
            for co in range(Cout):
                y = acc[co][0] + acc[co][1] + acc[co][2] + b_ref[co]
                store(co, jnp.maximum(y, 0.0))

        # ---- conv1 (C -> Cmid) + ReLU, written into the hidden buffer ----
        def store_hidden(co, y):
            he_ref[:, co, M:M + L] = y          # lane-aligned, unmasked

        conv3x3_relu(xe_ref, C, Cmid, w1_ref, b1_ref, store_hidden)

        # ---- conv2 (Cmid -> C) + ReLU + residual, lane-dense output store --
        def store_out(co, y):
            res = x_ref[:, co, :].astype(f32)   # re-read, not held live
            out_ref[:, co, :] = (y + res).astype(out_ref.dtype)

        conv3x3_relu(he_ref, Cmid, C, w2_ref, b2_ref, store_out)

    return kernel


def _grid_steps(batch):
    """1 grid step on single-TC chips (v5e/v6e), 2 on dual-TC v7x."""
    try:
        kind = (jax.devices()[0].device_kind or "").lower()
    except Exception:
        kind = ""
    cores = 2 if ("v7" in kind or "7x" in kind) else 1
    if cores > 1 and batch % cores == 0:
        return cores
    return 1


def bottleneck_forward(x_nchw, w1, b1, w2, b2):
    """Forward pass matching the PyTorch module.

    x_nchw: (N, C, H, W); w1: (3,3,C,C//2) HWIO; w2: (3,3,C//2,C) HWIO.
    """
    N, C, H, W = x_nchw.shape
    Cmid = C // 2
    L = H * W
    margin = max(128, W + 1)          # lane-aligned interior, room for shifts
    width = margin + L + margin

    G = _grid_steps(N)
    Nb = N // G

    x_flat = x_nchw.reshape(N, C, L)  # free reshape -> contiguous per-image DMA
    w1f = w1.astype(jnp.float32).reshape(-1)
    w2f = w2.astype(jnp.float32).reshape(-1)
    b1f = b1.astype(jnp.float32)
    b2f = b2.astype(jnp.float32)

    kernel = _make_bottleneck_kernel(H, W, C, Cmid, margin)
    smem = pl.BlockSpec(memory_space=pltpu.MemorySpace.SMEM)

    out_flat = pl.pallas_call(
        kernel,
        grid=(G,),
        in_specs=[
            pl.BlockSpec((Nb, C, L), lambda g: (g, 0, 0)),   # x (lane-dense)
            smem,                                            # w1 flat
            smem,                                            # b1
            smem,                                            # w2 flat
            smem,                                            # b2
        ],
        out_specs=pl.BlockSpec((Nb, C, L), lambda g: (g, 0, 0)),
        out_shape=jax.ShapeDtypeStruct((N, C, L), x_nchw.dtype),
        scratch_shapes=[
            pltpu.VMEM((Nb, C, width), jnp.float32),
            pltpu.VMEM((Nb, Cmid, width), jnp.float32),
        ],
        compiler_params=pltpu.CompilerParams(
            dimension_semantics=("parallel",)),
    )(x_flat, w1f, b1f, w2f, b2f)

    return out_flat.reshape(N, C, H, W)


def _ref_forward(x_nchw, w1, b1, w2, b2):
    """Pure-JAX reference (lax conv) for correctness check."""
    x = jnp.transpose(x_nchw, (0, 2, 3, 1))

    def conv_relu(inp, w, b):
        pad = jnp.pad(inp, ((0, 0), (1, 1), (1, 1), (0, 0)), mode="reflect")
        out = jax.lax.conv_general_dilated(
            pad, w, window_strides=(1, 1), padding="VALID",
            dimension_numbers=("NHWC", "HWIO", "NHWC"))
        return jnp.maximum(out + b, 0.0)

    y = conv_relu(conv_relu(x, w1, b1), w2, b2) + x
    return jnp.transpose(y, (0, 3, 1, 2))


if __name__ == "__main__":
    # Small shapes consistent with the module: N=2, C(num_layer)=4, H=W=16.
    N, C, H, W = 2, 4, 16, 16
    key = jax.random.PRNGKey(0)
    kx, kw1, kb1, kw2, kb2 = jax.random.split(key, 5)

    x = jax.random.normal(kx, (N, C, H, W), dtype=jnp.float32)

    # Deterministic parameter init (HWIO layout), synthetic "checkpoint".
    w1 = 0.1 * jax.random.normal(kw1, (3, 3, C, C // 2), dtype=jnp.float32)
    b1 = 0.1 * jax.random.normal(kb1, (C // 2,), dtype=jnp.float32)
    w2 = 0.1 * jax.random.normal(kw2, (3, 3, C // 2, C), dtype=jnp.float32)
    b2 = 0.1 * jax.random.normal(kb2, (C,), dtype=jnp.float32)

    out = bottleneck_forward(x, w1, b1, w2, b2)
    out = jax.block_until_ready(out)

    ref = jax.block_until_ready(_ref_forward(x, w1, b1, w2, b2))
    assert out.shape == (N, C, H, W)
    assert jnp.allclose(out, ref, atol=1e-5, rtol=1e-5), "mismatch vs reference"

    print("KERNEL_OK")
</pallas_src>

<mosaic_0001>
module attributes {stable_mosaic.version = 11 : i64} {
  func.func @kernel(%arg0: i32, %arg1: memref<2x4x256xf32, #tpu.memory_space<vmem>>, %arg2: memref<72xf32, #tpu.memory_space<smem>>, %arg3: memref<2xf32, #tpu.memory_space<smem>>, %arg4: memref<72xf32, #tpu.memory_space<smem>>, %arg5: memref<4xf32, #tpu.memory_space<smem>>, %arg6: memref<2x4x256xf32, #tpu.memory_space<vmem>>, %arg7: memref<2x4x512xf32, #tpu.memory_space<vmem>>, %arg8: memref<2x2x512xf32, #tpu.memory_space<vmem>>) attributes {dimension_semantics = [#tpu.dimension_semantics<parallel>], iteration_bounds = array<i64: 1>, scalar_prefetch = 0 : i64, scratch_operands = 2 : i64, tpu.core_type = #tpu.core_type<tc>, window_params = [{transform_indices = @transform_0, window_bounds = array<i64: 2, 4, 256>}, {transform_indices = @transform_1, window_bounds = array<i64: 72>}, {transform_indices = @transform_2, window_bounds = array<i64: 2>}, {transform_indices = @transform_3, window_bounds = array<i64: 72>}, {transform_indices = @transform_4, window_bounds = array<i64: 4>}, {transform_indices = @transform_5, window_bounds = array<i64: 2, 4, 256>}]} {
    %0 = tpu.iota {dimensions = array<i32: 1>} : vector<2x256xi32>
    %c16_i32 = arith.constant 16 : i32
    %c0_i32 = arith.constant 0 : i32
    %1 = arith.cmpi eq, %c16_i32, %c0_i32 : i32
    %c1_i32 = arith.constant 1 : i32
    %2 = arith.select %1, %c1_i32, %c16_i32 : i32
    %3 = vector.broadcast %2 : i32 to vector<2x256xi32>
    %4 = arith.remsi %0, %3 : vector<2x256xi32>
    %c0_i32_0 = arith.constant 0 : i32
    %5 = vector.broadcast %c0_i32_0 : i32 to vector<2x256xi32>
    %6 = arith.cmpi ne, %4, %5 : vector<2x256xi32>
    %c0_i32_1 = arith.constant 0 : i32
    %7 = vector.broadcast %c0_i32_1 : i32 to vector<2x256xi32>
    %8 = arith.cmpi slt, %4, %7 : vector<2x256xi32>
    %c0_i32_2 = arith.constant 0 : i32
    %9 = arith.cmpi slt, %2, %c0_i32_2 : i32
    %10 = vector.broadcast %9 : i1 to vector<2x256xi1>
    %11 = vector.broadcast %10 : vector<2x256xi1> to vector<2x256xi1>
    %12 = arith.xori %8, %11 : vector<2x256xi1>
    %13 = arith.andi %12, %6 : vector<2x256xi1>
    %14 = vector.broadcast %2 : i32 to vector<2x256xi32>
    %15 = arith.addi %4, %14 : vector<2x256xi32>
    %16 = arith.select %13, %15, %4 : vector<2x256xi1>, vector<2x256xi32>
    %c16_i32_3 = arith.constant 16 : i32
    %17 = vector.broadcast %c16_i32_3 : i32 to vector<2x256xi32>
    %18 = arith.cmpi slt, %0, %17 : vector<2x256xi32>
    %c240_i32 = arith.constant 240 : i32
    %19 = vector.broadcast %c240_i32 : i32 to vector<2x256xi32>
    %20 = arith.cmpi sge, %0, %19 : vector<2x256xi32>
    %c0_i32_4 = arith.constant 0 : i32
    %21 = vector.broadcast %c0_i32_4 : i32 to vector<2x256xi32>
    %22 = arith.cmpi eq, %16, %21 : vector<2x256xi32>
    %c15_i32 = arith.constant 15 : i32
    %23 = vector.broadcast %c15_i32 : i32 to vector<2x256xi32>
    %24 = arith.cmpi eq, %16, %23 : vector<2x256xi32>
    %c0 = arith.constant 0 : index
    %c0_5 = arith.constant 0 : index
    %c0_6 = arith.constant 0 : index
    %25 = vector.load %arg1[%c0, %c0_5, %c0_6] : memref<2x4x256xf32, #tpu.memory_space<vmem>>, vector<2x4x256xf32>
    %c0_7 = arith.constant 0 : index
    %c0_8 = arith.constant 0 : index
    %c128 = arith.constant 128 : index
    %26 = vector.load %arg7[%c0_7, %c0_8, %c128] : memref<2x4x512xf32, #tpu.memory_space<vmem>>, vector<2x4x256xf32>
    tpu.vector_store %arg7[%c0_7, %c0_8, %c128], %25 {strides = array<i32>} : memref<2x4x512xf32, #tpu.memory_space<vmem>>, vector<2x4x256xf32>,
    %cst = arith.constant 0.000000e+00 : f32
    %27 = vector.broadcast %cst : f32 to vector<2x256xf32>
    %cst_9 = arith.constant 0.000000e+00 : f32
    %28 = vector.broadcast %cst_9 : f32 to vector<2x256xf32>
    %cst_10 = arith.constant 0.000000e+00 : f32
    %29 = vector.broadcast %cst_10 : f32 to vector<2x256xf32>
    %cst_11 = arith.constant 0.000000e+00 : f32
    %30 = vector.broadcast %cst_11 : f32 to vector<2x256xf32>
    %cst_12 = arith.constant 0.000000e+00 : f32
    %31 = vector.broadcast %cst_12 : f32 to vector<2x256xf32>
    %cst_13 = arith.constant 0.000000e+00 : f32
    %32 = vector.broadcast %cst_13 : f32 to vector<2x256xf32>
    %c0_14 = arith.constant 0 : index
    %c0_15 = arith.constant 0 : index
    %c111 = arith.constant 111 : index
    %33 = vector.load %arg7[%c0_14, %c0_15, %c111] : memref<2x4x512xf32, #tpu.memory_space<vmem>>, vector<2x1x256xf32>
    %34 = vector.shape_cast %33 : vector<2x1x256xf32> to vector<2x256xf32>
    %c0_16 = arith.constant 0 : index
    %c0_17 = arith.constant 0 : index
    %c113 = arith.constant 113 : index
    %35 = vector.load %arg7[%c0_16, %c0_17, %c113] : memref<2x4x512xf32, #tpu.memory_space<vmem>>, vector<2x1x256xf32>
    %36 = vector.shape_cast %35 : vector<2x1x256xf32> to vector<2x256xf32>
    %37 = arith.select %22, %36, %34 : vector<2x256xi1>, vector<2x256xf32>
    %c0_18 = arith.constant 0 : index
    %c0_19 = arith.constant 0 : index
    %c143 = arith.constant 143 : index
    %38 = vector.load %arg7[%c0_18, %c0_19, %c143] : memref<2x4x512xf32, #tpu.memory_space<vmem>>, vector<2x1x256xf32>
    %39 = vector.shape_cast %38 : vector<2x1x256xf32> to vector<2x256xf32>
    %c0_20 = arith.constant 0 : index
    %c0_21 = arith.constant 0 : index
    %c145 = arith.constant 145 : index
    %40 = vector.load %arg7[%c0_20, %c0_21, %c145] : memref<2x4x512xf32, #tpu.memory_space<vmem>>, vector<2x1x256xf32>
    %41 = vector.shape_cast %40 : vector<2x1x256xf32> to vector<2x256xf32>
    %42 = arith.select %22, %41, %39 : vector<2x256xi1>, vector<2x256xf32>
    %43 = arith.select %18, %42, %37 : vector<2x256xi1>, vector<2x256xf32>
    %c0_22 = arith.constant 0 : index
    %44 = memref.load %arg2[%c0_22] : memref<72xf32, #tpu.memory_space<smem>>
    %45 = vector.broadcast %44 : f32 to vector<2x256xf32>
    %46 = arith.mulf %45, %43 : vector<2x256xf32>
    %47 = arith.addf %27, %46 : vector<2x256xf32>
    %c1 = arith.constant 1 : index
    %48 = memref.load %arg2[%c1] : memref<72xf32, #tpu.memory_space<smem>>
    %49 = vector.broadcast %48 : f32 to vector<2x256xf32>
    %50 = arith.mulf %49, %43 : vector<2x256xf32>
    %51 = arith.addf %30, %50 : vector<2x256xf32>
    %c0_23 = arith.constant 0 : index
    %c1_24 = arith.constant 1 : index
    %c111_25 = arith.constant 111 : index
    %52 = vector.load %arg7[%c0_23, %c1_24, %c111_25] : memref<2x4x512xf32, #tpu.memory_space<vmem>>, vector<2x1x256xf32>
    %53 = vector.shape_cast %52 : vector<2x1x256xf32> to vector<2x256xf32>
    %c0_26 = arith.constant 0 : index
    %c1_27 = arith.constant 1 : index
    %c113_28 = arith.constant 113 : index
    %54 = vector.load %arg7[%c0_26, %c1_27, %c113_28] : memref<2x4x512xf32, #tpu.memory_space<vmem>>, vector<2x1x256xf32>
    %55 = vector.shape_cast %54 : vector<2x1x256xf32> to vector<2x256xf32>
    %56 = arith.select %22, %55, %53 : vector<2x256xi1>, vector<2x256xf32>
    %c0_29 = arith.constant 0 : index
    %c1_30 = arith.constant 1 : index
    %c143_31 = arith.constant 143 : index
    %57 = vector.load %arg7[%c0_29, %c1_30, %c143_31] : memref<2x4x512xf32, #tpu.memory_space<vmem>>, vector<2x1x256xf32>
    %58 = vector.shape_cast %57 : vector<2x1x256xf32> to vector<2x256xf32>
    %c0_32 = arith.constant 0 : index
    %c1_33 = arith.constant 1 : index
    %c145_34 = arith.constant 145 : index
    %59 = vector.load %arg7[%c0_32, %c1_33, %c145_34] : memref<2x4x512xf32, #tpu.memory_space<vmem>>, vector<2x1x256xf32>
    %60 = vector.shape_cast %59 : vector<2x1x256xf32> to vector<2x256xf32>
    %61 = arith.select %22, %60, %58 : vector<2x256xi1>, vector<2x256xf32>
    %62 = arith.select %18, %61, %56 : vector<2x256xi1>, vector<2x256xf32>
    %c2 = arith.constant 2 : index
    %63 = memref.load %arg2[%c2] : memref<72xf32, #tpu.memory_space<smem>>
    %64 = vector.broadcast %63 : f32 to vector<2x256xf32>
    %65 = arith.mulf %64, %62 : vector<2x256xf32>
    %66 = arith.addf %47, %65 : vector<2x256xf32>
    %c3 = arith.constant 3 : index
    %67 = memref.load %arg2[%c3] : memref<72xf32, #tpu.memory_space<smem>>
    %68 = vector.broadcast %67 : f32 to vector<2x256xf32>
    %69 = arith.mulf %68, %62 : vector<2x256xf32>
    %70 = arith.addf %51, %69 : vector<2x256xf32>
    %c0_35 = arith.constant 0 : index
    %c2_36 = arith.constant 2 : index
    %c111_37 = arith.constant 111 : index
    %71 = vector.load %arg7[%c0_35, %c2_36, %c111_37] : memref<2x4x512xf32, #tpu.memory_space<vmem>>, vector<2x1x256xf32>
    %72 = vector.shape_cast %71 : vector<2x1x256xf32> to vector<2x256xf32>
    %c0_38 = arith.constant 0 : index
    %c2_39 = arith.constant 2 : index
    %c113_40 = arith.constant 113 : index
    %73 = vector.load %arg7[%c0_38, %c2_39, %c113_40] : memref<2x4x512xf32, #tpu.memory_space<vmem>>, vector<2x1x256xf32>
    %74 = vector.shape_cast %73 : vector<2x1x256xf32> to vector<2x256xf32>
    %75 = arith.select %22, %74, %72 : vector<2x256xi1>, vector<2x256xf32>
    %c0_41 = arith.constant 0 : index
    %c2_42 = arith.constant 2 : index
    %c143_43 = arith.constant 143 : index
    %76 = vector.load %arg7[%c0_41, %c2_42, %c143_43] : memref<2x4x512xf32, #tpu.memory_space<vmem>>, vector<2x1x256xf32>
    %77 = vector.shape_cast %76 : vector<2x1x256xf32> to vector<2x256xf32>
    %c0_44 = arith.constant 0 : index
    %c2_45 = arith.constant 2 : index
    %c145_46 = arith.constant 145 : index
    %78 = vector.load %arg7[%c0_44, %c2_45, %c145_46] : memref<2x4x512xf32, #tpu.memory_space<vmem>>, vector<2x1x256xf32>
    %79 = vector.shape_cast %78 : vector<2x1x256xf32> to vector<2x256xf32>
    %80 = arith.select %22, %79, %77 : vector<2x256xi1>, vector<2x256xf32>
    %81 = arith.select %18, %80, %75 : vector<2x256xi1>, vector<2x256xf32>
    %c4 = arith.constant 4 : index
    %82 = memref.load %arg2[%c4] : memref<72xf32, #tpu.memory_space<smem>>
    %83 = vector.broadcast %82 : f32 to vector<2x256xf32>
    %84 = arith.mulf %83, %81 : vector<2x256xf32>
    %85 = arith.addf %66, %84 : vector<2x256xf32>
    %c5 = arith.constant 5 : index
    %86 = memref.load %arg2[%c5] : memref<72xf32, #tpu.memory_space<smem>>
    %87 = vector.broadcast %86 : f32 to vector<2x256xf32>
    %88 = arith.mulf %87, %81 : vector<2x256xf32>
    %89 = arith.addf %70, %88 : vector<2x256xf32>
    %c0_47 = arith.constant 0 : index
    %c3_48 = arith.constant 3 : index
    %c111_49 = arith.constant 111 : index
    %90 = vector.load %arg7[%c0_47, %c3_48, %c111_49] : memref<2x4x512xf32, #tpu.memory_space<vmem>>, vector<2x1x256xf32>
    %91 = vector.shape_cast %90 : vector<2x1x256xf32> to vector<2x256xf32>
    %c0_50 = arith.constant 0 : index
    %c3_51 = arith.constant 3 : index
    %c113_52 = arith.constant 113 : index
    %92 = vector.load %arg7[%c0_50, %c3_51, %c113_52] : memref<2x4x512xf32, #tpu.memory_space<vmem>>, vector<2x1x256xf32>
    %93 = vector.shape_cast %92 : vector<2x1x256xf32> to vector<2x256xf32>
    %94 = arith.select %22, %93, %91 : vector<2x256xi1>, vector<2x256xf32>
    %c0_53 = arith.constant 0 : index
    %c3_54 = arith.constant 3 : index
    %c143_55 = arith.constant 143 : index
    %95 = vector.load %arg7[%c0_53, %c3_54, %c143_55] : memref<2x4x512xf32, #tpu.memory_space<vmem>>, vector<2x1x256xf32>
    %96 = vector.shape_cast %95 : vector<2x1x256xf32> to vector<2x256xf32>
    %c0_56 = arith.constant 0 : index
    %c3_57 = arith.constant 3 : index
    %c145_58 = arith.constant 145 : index
    %97 = vector.load %arg7[%c0_56, %c3_57, %c145_58] : memref<2x4x512xf32, #tpu.memory_space<vmem>>, vector<2x1x256xf32>
    %98 = vector.shape_cast %97 : vector<2x1x256xf32> to vector<2x256xf32>
    %99 = arith.select %22, %98, %96 : vector<2x256xi1>, vector<2x256xf32>
    %100 = arith.select %18, %99, %94 : vector<2x256xi1>, vector<2x256xf32>
    %c6 = arith.constant 6 : index
    %101 = memref.load %arg2[%c6] : memref<72xf32, #tpu.memory_space<smem>>
    %102 = vector.broadcast %101 : f32 to vector<2x256xf32>
    %103 = arith.mulf %102, %100 : vector<2x256xf32>
    %104 = arith.addf %85, %103 : vector<2x256xf32>
    %c7 = arith.constant 7 : index
    %105 = memref.load %arg2[%c7] : memref<72xf32, #tpu.memory_space<smem>>
    %106 = vector.broadcast %105 : f32 to vector<2x256xf32>
    %107 = arith.mulf %106, %100 : vector<2x256xf32>
    %108 = arith.addf %89, %107 : vector<2x256xf32>
    %c0_59 = arith.constant 0 : index
    %c0_60 = arith.constant 0 : index
    %c112 = arith.constant 112 : index
    %109 = vector.load %arg7[%c0_59, %c0_60, %c112] : memref<2x4x512xf32, #tpu.memory_space<vmem>>, vector<2x1x256xf32>
    %110 = vector.shape_cast %109 : vector<2x1x256xf32> to vector<2x256xf32>
    %c0_61 = arith.constant 0 : index
    %c0_62 = arith.constant 0 : index
    %c144 = arith.constant 144 : index
    %111 = vector.load %arg7[%c0_61, %c0_62, %c144] : memref<2x4x512xf32, #tpu.memory_space<vmem>>, vector<2x1x256xf32>
    %112 = vector.shape_cast %111 : vector<2x1x256xf32> to vector<2x256xf32>
    %113 = arith.select %18, %112, %110 : vector<2x256xi1>, vector<2x256xf32>
    %c8 = arith.constant 8 : index
    %114 = memref.load %arg2[%c8] : memref<72xf32, #tpu.memory_space<smem>>
    %115 = vector.broadcast %114 : f32 to vector<2x256xf32>
    %116 = arith.mulf %115, %113 : vector<2x256xf32>
    %117 = arith.addf %104, %116 : vector<2x256xf32>
    %c9 = arith.constant 9 : index
    %118 = memref.load %arg2[%c9] : memref<72xf32, #tpu.memory_space<smem>>
    %119 = vector.broadcast %118 : f32 to vector<2x256xf32>
    %120 = arith.mulf %119, %113 : vector<2x256xf32>
    %121 = arith.addf %108, %120 : vector<2x256xf32>
    %c0_63 = arith.constant 0 : index
    %c1_64 = arith.constant 1 : index
    %c112_65 = arith.constant 112 : index
    %122 = vector.load %arg7[%c0_63, %c1_64, %c112_65] : memref<2x4x512xf32, #tpu.memory_space<vmem>>, vector<2x1x256xf32>
    %123 = vector.shape_cast %122 : vector<2x1x256xf32> to vector<2x256xf32>
    %c0_66 = arith.constant 0 : index
    %c1_67 = arith.constant 1 : index
    %c144_68 = arith.constant 144 : index
    %124 = vector.load %arg7[%c0_66, %c1_67, %c144_68] : memref<2x4x512xf32, #tpu.memory_space<vmem>>, vector<2x1x256xf32>
    %125 = vector.shape_cast %124 : vector<2x1x256xf32> to vector<2x256xf32>
    %126 = arith.select %18, %125, %123 : vector<2x256xi1>, vector<2x256xf32>
    %c10 = arith.constant 10 : index
    %127 = memref.load %arg2[%c10] : memref<72xf32, #tpu.memory_space<smem>>
    %128 = vector.broadcast %127 : f32 to vector<2x256xf32>
    %129 = arith.mulf %128, %126 : vector<2x256xf32>
    %130 = arith.addf %117, %129 : vector<2x256xf32>
    %c11 = arith.constant 11 : index
    %131 = memref.load %arg2[%c11] : memref<72xf32, #tpu.memory_space<smem>>
    %132 = vector.broadcast %131 : f32 to vector<2x256xf32>
    %133 = arith.mulf %132, %126 : vector<2x256xf32>
    %134 = arith.addf %121, %133 : vector<2x256xf32>
    %c0_69 = arith.constant 0 : index
    %c2_70 = arith.constant 2 : index
    %c112_71 = arith.constant 112 : index
    %135 = vector.load %arg7[%c0_69, %c2_70, %c112_71] : memref<2x4x512xf32, #tpu.memory_space<vmem>>, vector<2x1x256xf32>
    %136 = vector.shape_cast %135 : vector<2x1x256xf32> to vector<2x256xf32>
    %c0_72 = arith.constant 0 : index
    %c2_73 = arith.constant 2 : index
    %c144_74 = arith.constant 144 : index
    %137 = vector.load %arg7[%c0_72, %c2_73, %c144_74] : memref<2x4x512xf32, #tpu.memory_space<vmem>>, vector<2x1x256xf32>
    %138 = vector.shape_cast %137 : vector<2x1x256xf32> to vector<2x256xf32>
    %139 = arith.select %18, %138, %136 : vector<2x256xi1>, vector<2x256xf32>
    %c12 = arith.constant 12 : index
    %140 = memref.load %arg2[%c12] : memref<72xf32, #tpu.memory_space<smem>>
    %141 = vector.broadcast %140 : f32 to vector<2x256xf32>
    %142 = arith.mulf %141, %139 : vector<2x256xf32>
    %143 = arith.addf %130, %142 : vector<2x256xf32>
    %c13 = arith.constant 13 : index
    %144 = memref.load %arg2[%c13] : memref<72xf32, #tpu.memory_space<smem>>
    %145 = vector.broadcast %144 : f32 to vector<2x256xf32>
    %146 = arith.mulf %145, %139 : vector<2x256xf32>
    %147 = arith.addf %134, %146 : vector<2x256xf32>
    %c0_75 = arith.constant 0 : index
    %c3_76 = arith.constant 3 : index
    %c112_77 = arith.constant 112 : index
    %148 = vector.load %arg7[%c0_75, %c3_76, %c112_77] : memref<2x4x512xf32, #tpu.memory_space<vmem>>, vector<2x1x256xf32>
    %149 = vector.shape_cast %148 : vector<2x1x256xf32> to vector<2x256xf32>
    %c0_78 = arith.constant 0 : index
    %c3_79 = arith.constant 3 : index
    %c144_80 = arith.constant 144 : index
    %150 = vector.load %arg7[%c0_78, %c3_79, %c144_80] : memref<2x4x512xf32, #tpu.memory_space<vmem>>, vector<2x1x256xf32>
    %151 = vector.shape_cast %150 : vector<2x1x256xf32> to vector<2x256xf32>
    %152 = arith.select %18, %151, %149 : vector<2x256xi1>, vector<2x256xf32>
    %c14 = arith.constant 14 : index
    %153 = memref.load %arg2[%c14] : memref<72xf32, #tpu.memory_space<smem>>
    %154 = vector.broadcast %153 : f32 to vector<2x256xf32>
    %155 = arith.mulf %154, %152 : vector<2x256xf32>
    %156 = arith.addf %143, %155 : vector<2x256xf32>
    %c15 = arith.constant 15 : index
    %157 = memref.load %arg2[%c15] : memref<72xf32, #tpu.memory_space<smem>>
    %158 = vector.broadcast %157 : f32 to vector<2x256xf32>
    %159 = arith.mulf %158, %152 : vector<2x256xf32>
    %160 = arith.addf %147, %159 : vector<2x256xf32>
    %c0_81 = arith.constant 0 : index
    %c0_82 = arith.constant 0 : index
    %c113_83 = arith.constant 113 : index
    %161 = vector.load %arg7[%c0_81, %c0_82, %c113_83] : memref<2x4x512xf32, #tpu.memory_space<vmem>>, vector<2x1x256xf32>
    %162 = vector.shape_cast %161 : vector<2x1x256xf32> to vector<2x256xf32>
    %c0_84 = arith.constant 0 : index
    %c0_85 = arith.constant 0 : index
    %c111_86 = arith.constant 111 : index
    %163 = vector.load %arg7[%c0_84, %c0_85, %c111_86] : memref<2x4x512xf32, #tpu.memory_space<vmem>>, vector<2x1x256xf32>
    %164 = vector.shape_cast %163 : vector<2x1x256xf32> to vector<2x256xf32>
    %165 = arith.select %24, %164, %162 : vector<2x256xi1>, vector<2x256xf32>
    %c0_87 = arith.constant 0 : index
    %c0_88 = arith.constant 0 : index
    %c145_89 = arith.constant 145 : index
    %166 = vector.load %arg7[%c0_87, %c0_88, %c145_89] : memref<2x4x512xf32, #tpu.memory_space<vmem>>, vector<2x1x256xf32>
    %167 = vector.shape_cast %166 : vector<2x1x256xf32> to vector<2x256xf32>
    %c0_90 = arith.constant 0 : index
    %c0_91 = arith.constant 0 : index
    %c143_92 = arith.constant 143 : index
    %168 = vector.load %arg7[%c0_90, %c0_91, %c143_92] : memref<2x4x512xf32, #tpu.memory_space<vmem>>, vector<2x1x256xf32>
    %169 = vector.shape_cast %168 : vector<2x1x256xf32> to vector<2x256xf32>
    %170 = arith.select %24, %169, %167 : vector<2x256xi1>, vector<2x256xf32>
    %171 = arith.select %18, %170, %165 : vector<2x256xi1>, vector<2x256xf32>
    %c16 = arith.constant 16 : index
    %172 = memref.load %arg2[%c16] : memref<72xf32, #tpu.memory_space<smem>>
    %173 = vector.broadcast %172 : f32 to vector<2x256xf32>
    %174 = arith.mulf %173, %171 : vector<2x256xf32>
    %175 = arith.addf %156, %174 : vector<2x256xf32>
    %c17 = arith.constant 17 : index
    %176 = memref.load %arg2[%c17] : memref<72xf32, #tpu.memory_space<smem>>
    %177 = vector.broadcast %176 : f32 to vector<2x256xf32>
    %178 = arith.mulf %177, %171 : vector<2x256xf32>
    %179 = arith.addf %160, %178 : vector<2x256xf32>
    %c0_93 = arith.constant 0 : index
    %c1_94 = arith.constant 1 : index
    %c113_95 = arith.constant 113 : index
    %180 = vector.load %arg7[%c0_93, %c1_94, %c113_95] : memref<2x4x512xf32, #tpu.memory_space<vmem>>, vector<2x1x256xf32>
    %181 = vector.shape_cast %180 : vector<2x1x256xf32> to vector<2x256xf32>
    %c0_96 = arith.constant 0 : index
    %c1_97 = arith.constant 1 : index
    %c111_98 = arith.constant 111 : index
    %182 = vector.load %arg7[%c0_96, %c1_97, %c111_98] : memref<2x4x512xf32, #tpu.memory_space<vmem>>, vector<2x1x256xf32>
    %183 = vector.shape_cast %182 : vector<2x1x256xf32> to vector<2x256xf32>
    %184 = arith.select %24, %183, %181 : vector<2x256xi1>, vector<2x256xf32>
    %c0_99 = arith.constant 0 : index
    %c1_100 = arith.constant 1 : index
    %c145_101 = arith.constant 145 : index
    %185 = vector.load %arg7[%c0_99, %c1_100, %c145_101] : memref<2x4x512xf32, #tpu.memory_space<vmem>>, vector<2x1x256xf32>
    %186 = vector.shape_cast %185 : vector<2x1x256xf32> to vector<2x256xf32>
    %c0_102 = arith.constant 0 : index
    %c1_103 = arith.constant 1 : index
    %c143_104 = arith.constant 143 : index
    %187 = vector.load %arg7[%c0_102, %c1_103, %c143_104] : memref<2x4x512xf32, #tpu.memory_space<vmem>>, vector<2x1x256xf32>
    %188 = vector.shape_cast %187 : vector<2x1x256xf32> to vector<2x256xf32>
    %189 = arith.select %24, %188, %186 : vector<2x256xi1>, vector<2x256xf32>
    %190 = arith.select %18, %189, %184 : vector<2x256xi1>, vector<2x256xf32>
    %c18 = arith.constant 18 : index
    %191 = memref.load %arg2[%c18] : memref<72xf32, #tpu.memory_space<smem>>
    %192 = vector.broadcast %191 : f32 to vector<2x256xf32>
    %193 = arith.mulf %192, %190 : vector<2x256xf32>
    %194 = arith.addf %175, %193 : vector<2x256xf32>
    %c19 = arith.constant 19 : index
    %195 = memref.load %arg2[%c19] : memref<72xf32, #tpu.memory_space<smem>>
    %196 = vector.broadcast %195 : f32 to vector<2x256xf32>
    %197 = arith.mulf %196, %190 : vector<2x256xf32>
    %198 = arith.addf %179, %197 : vector<2x256xf32>
    %c0_105 = arith.constant 0 : index
    %c2_106 = arith.constant 2 : index
    %c113_107 = arith.constant 113 : index
    %199 = vector.load %arg7[%c0_105, %c2_106, %c113_107] : memref<2x4x512xf32, #tpu.memory_space<vmem>>, vector<2x1x256xf32>
    %200 = vector.shape_cast %199 : vector<2x1x256xf32> to vector<2x256xf32>
    %c0_108 = arith.constant 0 : index
    %c2_109 = arith.constant 2 : index
    %c111_110 = arith.constant 111 : index
    %201 = vector.load %arg7[%c0_108, %c2_109, %c111_110] : memref<2x4x512xf32, #tpu.memory_space<vmem>>, vector<2x1x256xf32>
    %202 = vector.shape_cast %201 : vector<2x1x256xf32> to vector<2x256xf32>
    %203 = arith.select %24, %202, %200 : vector<2x256xi1>, vector<2x256xf32>
    %c0_111 = arith.constant 0 : index
    %c2_112 = arith.constant 2 : index
    %c145_113 = arith.constant 145 : index
    %204 = vector.load %arg7[%c0_111, %c2_112, %c145_113] : memref<2x4x512xf32, #tpu.memory_space<vmem>>, vector<2x1x256xf32>
    %205 = vector.shape_cast %204 : vector<2x1x256xf32> to vector<2x256xf32>
    %c0_114 = arith.constant 0 : index
    %c2_115 = arith.constant 2 : index
    %c143_116 = arith.constant 143 : index
    %206 = vector.load %arg7[%c0_114, %c2_115, %c143_116] : memref<2x4x512xf32, #tpu.memory_space<vmem>>, vector<2x1x256xf32>
    %207 = vector.shape_cast %206 : vector<2x1x256xf32> to vector<2x256xf32>
    %208 = arith.select %24, %207, %205 : vector<2x256xi1>, vector<2x256xf32>
    %209 = arith.select %18, %208, %203 : vector<2x256xi1>, vector<2x256xf32>
    %c20 = arith.constant 20 : index
    %210 = memref.load %arg2[%c20] : memref<72xf32, #tpu.memory_space<smem>>
    %211 = vector.broadcast %210 : f32 to vector<2x256xf32>
    %212 = arith.mulf %211, %209 : vector<2x256xf32>
    %213 = arith.addf %194, %212 : vector<2x256xf32>
    %c21 = arith.constant 21 : index
    %214 = memref.load %arg2[%c21] : memref<72xf32, #tpu.memory_space<smem>>
    %215 = vector.broadcast %214 : f32 to vector<2x256xf32>
    %216 = arith.mulf %215, %209 : vector<2x256xf32>
    %217 = arith.addf %198, %216 : vector<2x256xf32>
    %c0_117 = arith.constant 0 : index
    %c3_118 = arith.constant 3 : index
    %c113_119 = arith.constant 113 : index
    %218 = vector.load %arg7[%c0_117, %c3_118, %c113_119] : memref<2x4x512xf32, #tpu.memory_space<vmem>>, vector<2x1x256xf32>
    %219 = vector.shape_cast %218 : vector<2x1x256xf32> to vector<2x256xf32>
    %c0_120 = arith.constant 0 : index
    %c3_121 = arith.constant 3 : index
    %c111_122 = arith.constant 111 : index
    %220 = vector.load %arg7[%c0_120, %c3_121, %c111_122] : memref<2x4x512xf32, #tpu.memory_space<vmem>>, vector<2x1x256xf32>
    %221 = vector.shape_cast %220 : vector<2x1x256xf32> to vector<2x256xf32>
    %222 = arith.select %24, %221, %219 : vector<2x256xi1>, vector<2x256xf32>
    %c0_123 = arith.constant 0 : index
    %c3_124 = arith.constant 3 : index
    %c145_125 = arith.constant 145 : index
    %223 = vector.load %arg7[%c0_123, %c3_124, %c145_125] : memref<2x4x512xf32, #tpu.memory_space<vmem>>, vector<2x1x256xf32>
    %224 = vector.shape_cast %223 : vector<2x1x256xf32> to vector<2x256xf32>
    %c0_126 = arith.constant 0 : index
    %c3_127 = arith.constant 3 : index
    %c143_128 = arith.constant 143 : index
    %225 = vector.load %arg7[%c0_126, %c3_127, %c143_128] : memref<2x4x512xf32, #tpu.memory_space<vmem>>, vector<2x1x256xf32>
    %226 = vector.shape_cast %225 : vector<2x1x256xf32> to vector<2x256xf32>
    %227 = arith.select %24, %226, %224 : vector<2x256xi1>, vector<2x256xf32>
    %228 = arith.select %18, %227, %222 : vector<2x256xi1>, vector<2x256xf32>
    %c22 = arith.constant 22 : index
    %229 = memref.load %arg2[%c22] : memref<72xf32, #tpu.memory_space<smem>>
    %230 = vector.broadcast %229 : f32 to vector<2x256xf32>
    %231 = arith.mulf %230, %228 : vector<2x256xf32>
    %232 = arith.addf %213, %231 : vector<2x256xf32>
    %c23 = arith.constant 23 : index
    %233 = memref.load %arg2[%c23] : memref<72xf32, #tpu.memory_space<smem>>
    %234 = vector.broadcast %233 : f32 to vector<2x256xf32>
    %235 = arith.mulf %234, %228 : vector<2x256xf32>
    %236 = arith.addf %217, %235 : vector<2x256xf32>
    %c0_129 = arith.constant 0 : index
    %c0_130 = arith.constant 0 : index
    %c127 = arith.constant 127 : index
    %237 = vector.load %arg7[%c0_129, %c0_130, %c127] : memref<2x4x512xf32, #tpu.memory_space<vmem>>, vector<2x1x256xf32>
    %238 = vector.shape_cast %237 : vector<2x1x256xf32> to vector<2x256xf32>
    %c0_131 = arith.constant 0 : index
    %c0_132 = arith.constant 0 : index
    %c129 = arith.constant 129 : index
    %239 = vector.load %arg7[%c0_131, %c0_132, %c129] : memref<2x4x512xf32, #tpu.memory_space<vmem>>, vector<2x1x256xf32>
    %240 = vector.shape_cast %239 : vector<2x1x256xf32> to vector<2x256xf32>
    %241 = arith.select %22, %240, %238 : vector<2x256xi1>, vector<2x256xf32>
    %c24 = arith.constant 24 : index
    %242 = memref.load %arg2[%c24] : memref<72xf32, #tpu.memory_space<smem>>
    %243 = vector.broadcast %242 : f32 to vector<2x256xf32>
    %244 = arith.mulf %243, %241 : vector<2x256xf32>
    %245 = arith.addf %28, %244 : vector<2x256xf32>
    %c25 = arith.constant 25 : index
    %246 = memref.load %arg2[%c25] : memref<72xf32, #tpu.memory_space<smem>>
    %247 = vector.broadcast %246 : f32 to vector<2x256xf32>
    %248 = arith.mulf %247, %241 : vector<2x256xf32>
    %249 = arith.addf %31, %248 : vector<2x256xf32>
    %c0_133 = arith.constant 0 : index
    %c1_134 = arith.constant 1 : index
    %c127_135 = arith.constant 127 : index
    %250 = vector.load %arg7[%c0_133, %c1_134, %c127_135] : memref<2x4x512xf32, #tpu.memory_space<vmem>>, vector<2x1x256xf32>
    %251 = vector.shape_cast %250 : vector<2x1x256xf32> to vector<2x256xf32>
    %c0_136 = arith.constant 0 : index
    %c1_137 = arith.constant 1 : index
    %c129_138 = arith.constant 129 : index
    %252 = vector.load %arg7[%c0_136, %c1_137, %c129_138] : memref<2x4x512xf32, #tpu.memory_space<vmem>>, vector<2x1x256xf32>
    %253 = vector.shape_cast %252 : vector<2x1x256xf32> to vector<2x256xf32>
    %254 = arith.select %22, %253, %251 : vector<2x256xi1>, vector<2x256xf32>
    %c26 = arith.constant 26 : index
    %255 = memref.load %arg2[%c26] : memref<72xf32, #tpu.memory_space<smem>>
    %256 = vector.broadcast %255 : f32 to vector<2x256xf32>
    %257 = arith.mulf %256, %254 : vector<2x256xf32>
    %258 = arith.addf %245, %257 : vector<2x256xf32>
    %c27 = arith.constant 27 : index
    %259 = memref.load %arg2[%c27] : memref<72xf32, #tpu.memory_space<smem>>
    %260 = vector.broadcast %259 : f32 to vector<2x256xf32>
    %261 = arith.mulf %260, %254 : vector<2x256xf32>
    %262 = arith.addf %249, %261 : vector<2x256xf32>
    %c0_139 = arith.constant 0 : index
    %c2_140 = arith.constant 2 : index
    %c127_141 = arith.constant 127 : index
    %263 = vector.load %arg7[%c0_139, %c2_140, %c127_141] : memref<2x4x512xf32, #tpu.memory_space<vmem>>, vector<2x1x256xf32>
    %264 = vector.shape_cast %263 : vector<2x1x256xf32> to vector<2x256xf32>
    %c0_142 = arith.constant 0 : index
    %c2_143 = arith.constant 2 : index
    %c129_144 = arith.constant 129 : index
    %265 = vector.load %arg7[%c0_142, %c2_143, %c129_144] : memref<2x4x512xf32, #tpu.memory_space<vmem>>, vector<2x1x256xf32>
    %266 = vector.shape_cast %265 : vector<2x1x256xf32> to vector<2x256xf32>
    %267 = arith.select %22, %266, %264 : vector<2x256xi1>, vector<2x256xf32>
    %c28 = arith.constant 28 : index
    %268 = memref.load %arg2[%c28] : memref<72xf32, #tpu.memory_space<smem>>
    %269 = vector.broadcast %268 : f32 to vector<2x256xf32>
    %270 = arith.mulf %269, %267 : vector<2x256xf32>
    %271 = arith.addf %258, %270 : vector<2x256xf32>
    %c29 = arith.constant 29 : index
    %272 = memref.load %arg2[%c29] : memref<72xf32, #tpu.memory_space<smem>>
    %273 = vector.broadcast %272 : f32 to vector<2x256xf32>
    %274 = arith.mulf %273, %267 : vector<2x256xf32>
    %275 = arith.addf %262, %274 : vector<2x256xf32>
    %c0_145 = arith.constant 0 : index
    %c3_146 = arith.constant 3 : index
    %c127_147 = arith.constant 127 : index
    %276 = vector.load %arg7[%c0_145, %c3_146, %c127_147] : memref<2x4x512xf32, #tpu.memory_space<vmem>>, vector<2x1x256xf32>
    %277 = vector.shape_cast %276 : vector<2x1x256xf32> to vector<2x256xf32>
    %c0_148 = arith.constant 0 : index
    %c3_149 = arith.constant 3 : index
    %c129_150 = arith.constant 129 : index
    %278 = vector.load %arg7[%c0_148, %c3_149, %c129_150] : memref<2x4x512xf32, #tpu.memory_space<vmem>>, vector<2x1x256xf32>
    %279 = vector.shape_cast %278 : vector<2x1x256xf32> to vector<2x256xf32>
    %280 = arith.select %22, %279, %277 : vector<2x256xi1>, vector<2x256xf32>
    %c30 = arith.constant 30 : index
    %281 = memref.load %arg2[%c30] : memref<72xf32, #tpu.memory_space<smem>>
    %282 = vector.broadcast %281 : f32 to vector<2x256xf32>
    %283 = arith.mulf %282, %280 : vector<2x256xf32>
    %284 = arith.addf %271, %283 : vector<2x256xf32>
    %c31 = arith.constant 31 : index
    %285 = memref.load %arg2[%c31] : memref<72xf32, #tpu.memory_space<smem>>
    %286 = vector.broadcast %285 : f32 to vector<2x256xf32>
    %287 = arith.mulf %286, %280 : vector<2x256xf32>
    %288 = arith.addf %275, %287 : vector<2x256xf32>
    %c0_151 = arith.constant 0 : index
    %c0_152 = arith.constant 0 : index
    %c128_153 = arith.constant 128 : index
    %289 = vector.load %arg7[%c0_151, %c0_152, %c128_153] : memref<2x4x512xf32, #tpu.memory_space<vmem>>, vector<2x1x256xf32>
    %290 = vector.shape_cast %289 : vector<2x1x256xf32> to vector<2x256xf32>
    %c32 = arith.constant 32 : index
    %291 = memref.load %arg2[%c32] : memref<72xf32, #tpu.memory_space<smem>>
    %292 = vector.broadcast %291 : f32 to vector<2x256xf32>
    %293 = arith.mulf %292, %290 : vector<2x256xf32>
    %294 = arith.addf %284, %293 : vector<2x256xf32>
    %c33 = arith.constant 33 : index
    %295 = memref.load %arg2[%c33] : memref<72xf32, #tpu.memory_space<smem>>
    %296 = vector.broadcast %295 : f32 to vector<2x256xf32>
    %297 = arith.mulf %296, %290 : vector<2x256xf32>
    %298 = arith.addf %288, %297 : vector<2x256xf32>
    %c0_154 = arith.constant 0 : index
    %c1_155 = arith.constant 1 : index
    %c128_156 = arith.constant 128 : index
    %299 = vector.load %arg7[%c0_154, %c1_155, %c128_156] : memref<2x4x512xf32, #tpu.memory_space<vmem>>, vector<2x1x256xf32>
    %300 = vector.shape_cast %299 : vector<2x1x256xf32> to vector<2x256xf32>
    %c34 = arith.constant 34 : index
    %301 = memref.load %arg2[%c34] : memref<72xf32, #tpu.memory_space<smem>>
    %302 = vector.broadcast %301 : f32 to vector<2x256xf32>
    %303 = arith.mulf %302, %300 : vector<2x256xf32>
    %304 = arith.addf %294, %303 : vector<2x256xf32>
    %c35 = arith.constant 35 : index
    %305 = memref.load %arg2[%c35] : memref<72xf32, #tpu.memory_space<smem>>
    %306 = vector.broadcast %305 : f32 to vector<2x256xf32>
    %307 = arith.mulf %306, %300 : vector<2x256xf32>
    %308 = arith.addf %298, %307 : vector<2x256xf32>
    %c0_157 = arith.constant 0 : index
    %c2_158 = arith.constant 2 : index
    %c128_159 = arith.constant 128 : index
    %309 = vector.load %arg7[%c0_157, %c2_158, %c128_159] : memref<2x4x512xf32, #tpu.memory_space<vmem>>, vector<2x1x256xf32>
    %310 = vector.shape_cast %309 : vector<2x1x256xf32> to vector<2x256xf32>
    %c36 = arith.constant 36 : index
    %311 = memref.load %arg2[%c36] : memref<72xf32, #tpu.memory_space<smem>>
    %312 = vector.broadcast %311 : f32 to vector<2x256xf32>
    %313 = arith.mulf %312, %310 : vector<2x256xf32>
    %314 = arith.addf %304, %313 : vector<2x256xf32>
    %c37 = arith.constant 37 : index
    %315 = memref.load %arg2[%c37] : memref<72xf32, #tpu.memory_space<smem>>
    %316 = vector.broadcast %315 : f32 to vector<2x256xf32>
    %317 = arith.mulf %316, %310 : vector<2x256xf32>
    %318 = arith.addf %308, %317 : vector<2x256xf32>
    %c0_160 = arith.constant 0 : index
    %c3_161 = arith.constant 3 : index
    %c128_162 = arith.constant 128 : index
    %319 = vector.load %arg7[%c0_160, %c3_161, %c128_162] : memref<2x4x512xf32, #tpu.memory_space<vmem>>, vector<2x1x256xf32>
    %320 = vector.shape_cast %319 : vector<2x1x256xf32> to vector<2x256xf32>
    %c38 = arith.constant 38 : index
    %321 = memref.load %arg2[%c38] : memref<72xf32, #tpu.memory_space<smem>>
    %322 = vector.broadcast %321 : f32 to vector<2x256xf32>
    %323 = arith.mulf %322, %320 : vector<2x256xf32>
    %324 = arith.addf %314, %323 : vector<2x256xf32>
    %c39 = arith.constant 39 : index
    %325 = memref.load %arg2[%c39] : memref<72xf32, #tpu.memory_space<smem>>
    %326 = vector.broadcast %325 : f32 to vector<2x256xf32>
    %327 = arith.mulf %326, %320 : vector<2x256xf32>
    %328 = arith.addf %318, %327 : vector<2x256xf32>
    %c0_163 = arith.constant 0 : index
    %c0_164 = arith.constant 0 : index
    %c129_165 = arith.constant 129 : index
    %329 = vector.load %arg7[%c0_163, %c0_164, %c129_165] : memref<2x4x512xf32, #tpu.memory_space<vmem>>, vector<2x1x256xf32>
    %330 = vector.shape_cast %329 : vector<2x1x256xf32> to vector<2x256xf32>
    %c0_166 = arith.constant 0 : index
    %c0_167 = arith.constant 0 : index
    %c127_168 = arith.constant 127 : index
    %331 = vector.load %arg7[%c0_166, %c0_167, %c127_168] : memref<2x4x512xf32, #tpu.memory_space<vmem>>, vector<2x1x256xf32>
    %332 = vector.shape_cast %331 : vector<2x1x256xf32> to vector<2x256xf32>
    %333 = arith.select %24, %332, %330 : vector<2x256xi1>, vector<2x256xf32>
    %c40 = arith.constant 40 : index
    %334 = memref.load %arg2[%c40] : memref<72xf32, #tpu.memory_space<smem>>
    %335 = vector.broadcast %334 : f32 to vector<2x256xf32>
    %336 = arith.mulf %335, %333 : vector<2x256xf32>
    %337 = arith.addf %324, %336 : vector<2x256xf32>
    %c41 = arith.constant 41 : index
    %338 = memref.load %arg2[%c41] : memref<72xf32, #tpu.memory_space<smem>>
    %339 = vector.broadcast %338 : f32 to vector<2x256xf32>
    %340 = arith.mulf %339, %333 : vector<2x256xf32>
    %341 = arith.addf %328, %340 : vector<2x256xf32>
    %c0_169 = arith.constant 0 : index
    %c1_170 = arith.constant 1 : index
    %c129_171 = arith.constant 129 : index
    %342 = vector.load %arg7[%c0_169, %c1_170, %c129_171] : memref<2x4x512xf32, #tpu.memory_space<vmem>>, vector<2x1x256xf32>
    %343 = vector.shape_cast %342 : vector<2x1x256xf32> to vector<2x256xf32>
    %c0_172 = arith.constant 0 : index
    %c1_173 = arith.constant 1 : index
    %c127_174 = arith.constant 127 : index
    %344 = vector.load %arg7[%c0_172, %c1_173, %c127_174] : memref<2x4x512xf32, #tpu.memory_space<vmem>>, vector<2x1x256xf32>
    %345 = vector.shape_cast %344 : vector<2x1x256xf32> to vector<2x256xf32>
    %346 = arith.select %24, %345, %343 : vector<2x256xi1>, vector<2x256xf32>
    %c42 = arith.constant 42 : index
    %347 = memref.load %arg2[%c42] : memref<72xf32, #tpu.memory_space<smem>>
    %348 = vector.broadcast %347 : f32 to vector<2x256xf32>
    %349 = arith.mulf %348, %346 : vector<2x256xf32>
    %350 = arith.addf %337, %349 : vector<2x256xf32>
    %c43 = arith.constant 43 : index
    %351 = memref.load %arg2[%c43] : memref<72xf32, #tpu.memory_space<smem>>
    %352 = vector.broadcast %351 : f32 to vector<2x256xf32>
    %353 = arith.mulf %352, %346 : vector<2x256xf32>
    %354 = arith.addf %341, %353 : vector<2x256xf32>
    %c0_175 = arith.constant 0 : index
    %c2_176 = arith.constant 2 : index
    %c129_177 = arith.constant 129 : index
    %355 = vector.load %arg7[%c0_175, %c2_176, %c129_177] : memref<2x4x512xf32, #tpu.memory_space<vmem>>, vector<2x1x256xf32>
    %356 = vector.shape_cast %355 : vector<2x1x256xf32> to vector<2x256xf32>
    %c0_178 = arith.constant 0 : index
    %c2_179 = arith.constant 2 : index
    %c127_180 = arith.constant 127 : index
    %357 = vector.load %arg7[%c0_178, %c2_179, %c127_180] : memref<2x4x512xf32, #tpu.memory_space<vmem>>, vector<2x1x256xf32>
    %358 = vector.shape_cast %357 : vector<2x1x256xf32> to vector<2x256xf32>
    %359 = arith.select %24, %358, %356 : vector<2x256xi1>, vector<2x256xf32>
    %c44 = arith.constant 44 : index
    %360 = memref.load %arg2[%c44] : memref<72xf32, #tpu.memory_space<smem>>
    %361 = vector.broadcast %360 : f32 to vector<2x256xf32>
    %362 = arith.mulf %361, %359 : vector<2x256xf32>
    %363 = arith.addf %350, %362 : vector<2x256xf32>
    %c45 = arith.constant 45 : index
    %364 = memref.load %arg2[%c45] : memref<72xf32, #tpu.memory_space<smem>>
    %365 = vector.broadcast %364 : f32 to vector<2x256xf32>
    %366 = arith.mulf %365, %359 : vector<2x256xf32>
    %367 = arith.addf %354, %366 : vector<2x256xf32>
    %c0_181 = arith.constant 0 : index
    %c3_182 = arith.constant 3 : index
    %c129_183 = arith.constant 129 : index
    %368 = vector.load %arg7[%c0_181, %c3_182, %c129_183] : memref<2x4x512xf32, #tpu.memory_space<vmem>>, vector<2x1x256xf32>
    %369 = vector.shape_cast %368 : vector<2x1x256xf32> to vector<2x256xf32>
    %c0_184 = arith.constant 0 : index
    %c3_185 = arith.constant 3 : index
    %c127_186 = arith.constant 127 : index
    %370 = vector.load %arg7[%c0_184, %c3_185, %c127_186] : memref<2x4x512xf32, #tpu.memory_space<vmem>>, vector<2x1x256xf32>
    %371 = vector.shape_cast %370 : vector<2x1x256xf32> to vector<2x256xf32>
    %372 = arith.select %24, %371, %369 : vector<2x256xi1>, vector<2x256xf32>
    %c46 = arith.constant 46 : index
    %373 = memref.load %arg2[%c46] : memref<72xf32, #tpu.memory_space<smem>>
    %374 = vector.broadcast %373 : f32 to vector<2x256xf32>
    %375 = arith.mulf %374, %372 : vector<2x256xf32>
    %376 = arith.addf %363, %375 : vector<2x256xf32>
    %c47 = arith.constant 47 : index
    %377 = memref.load %arg2[%c47] : memref<72xf32, #tpu.memory_space<smem>>
    %378 = vector.broadcast %377 : f32 to vector<2x256xf32>
    %379 = arith.mulf %378, %372 : vector<2x256xf32>
    %380 = arith.addf %367, %379 : vector<2x256xf32>
    %c0_187 = arith.constant 0 : index
    %c0_188 = arith.constant 0 : index
    %c143_189 = arith.constant 143 : index
    %381 = vector.load %arg7[%c0_187, %c0_188, %c143_189] : memref<2x4x512xf32, #tpu.memory_space<vmem>>, vector<2x1x256xf32>
    %382 = vector.shape_cast %381 : vector<2x1x256xf32> to vector<2x256xf32>
    %c0_190 = arith.constant 0 : index
    %c0_191 = arith.constant 0 : index
    %c145_192 = arith.constant 145 : index
    %383 = vector.load %arg7[%c0_190, %c0_191, %c145_192] : memref<2x4x512xf32, #tpu.memory_space<vmem>>, vector<2x1x256xf32>
    %384 = vector.shape_cast %383 : vector<2x1x256xf32> to vector<2x256xf32>
    %385 = arith.select %22, %384, %382 : vector<2x256xi1>, vector<2x256xf32>
    %c0_193 = arith.constant 0 : index
    %c0_194 = arith.constant 0 : index
    %c111_195 = arith.constant 111 : index
    %386 = vector.load %arg7[%c0_193, %c0_194, %c111_195] : memref<2x4x512xf32, #tpu.memory_space<vmem>>, vector<2x1x256xf32>
    %387 = vector.shape_cast %386 : vector<2x1x256xf32> to vector<2x256xf32>
    %c0_196 = arith.constant 0 : index
    %c0_197 = arith.constant 0 : index
    %c113_198 = arith.constant 113 : index
    %388 = vector.load %arg7[%c0_196, %c0_197, %c113_198] : memref<2x4x512xf32, #tpu.memory_space<vmem>>, vector<2x1x256xf32>
    %389 = vector.shape_cast %388 : vector<2x1x256xf32> to vector<2x256xf32>
    %390 = arith.select %22, %389, %387 : vector<2x256xi1>, vector<2x256xf32>
    %391 = arith.select %20, %390, %385 : vector<2x256xi1>, vector<2x256xf32>
    %c48 = arith.constant 48 : index
    %392 = memref.load %arg2[%c48] : memref<72xf32, #tpu.memory_space<smem>>
    %393 = vector.broadcast %392 : f32 to vector<2x256xf32>
    %394 = arith.mulf %393, %391 : vector<2x256xf32>
    %395 = arith.addf %29, %394 : vector<2x256xf32>
    %c49 = arith.constant 49 : index
    %396 = memref.load %arg2[%c49] : memref<72xf32, #tpu.memory_space<smem>>
    %397 = vector.broadcast %396 : f32 to vector<2x256xf32>
    %398 = arith.mulf %397, %391 : vector<2x256xf32>
    %399 = arith.addf %32, %398 : vector<2x256xf32>
    %c0_199 = arith.constant 0 : index
    %c1_200 = arith.constant 1 : index
    %c143_201 = arith.constant 143 : index
    %400 = vector.load %arg7[%c0_199, %c1_200, %c143_201] : memref<2x4x512xf32, #tpu.memory_space<vmem>>, vector<2x1x256xf32>
    %401 = vector.shape_cast %400 : vector<2x1x256xf32> to vector<2x256xf32>
    %c0_202 = arith.constant 0 : index
    %c1_203 = arith.constant 1 : index
    %c145_204 = arith.constant 145 : index
    %402 = vector.load %arg7[%c0_202, %c1_203, %c145_204] : memref<2x4x512xf32, #tpu.memory_space<vmem>>, vector<2x1x256xf32>
    %403 = vector.shape_cast %402 : vector<2x1x256xf32> to vector<2x256xf32>
    %404 = arith.select %22, %403, %401 : vector<2x256xi1>, vector<2x256xf32>
    %c0_205 = arith.constant 0 : index
    %c1_206 = arith.constant 1 : index
    %c111_207 = arith.constant 111 : index
    %405 = vector.load %arg7[%c0_205, %c1_206, %c111_207] : memref<2x4x512xf32, #tpu.memory_space<vmem>>, vector<2x1x256xf32>
    %406 = vector.shape_cast %405 : vector<2x1x256xf32> to vector<2x256xf32>
    %c0_208 = arith.constant 0 : index
    %c1_209 = arith.constant 1 : index
    %c113_210 = arith.constant 113 : index
    %407 = vector.load %arg7[%c0_208, %c1_209, %c113_210] : memref<2x4x512xf32, #tpu.memory_space<vmem>>, vector<2x1x256xf32>
    %408 = vector.shape_cast %407 : vector<2x1x256xf32> to vector<2x256xf32>
    %409 = arith.select %22, %408, %406 : vector<2x256xi1>, vector<2x256xf32>
    %410 = arith.select %20, %409, %404 : vector<2x256xi1>, vector<2x256xf32>
    %c50 = arith.constant 50 : index
    %411 = memref.load %arg2[%c50] : memref<72xf32, #tpu.memory_space<smem>>
    %412 = vector.broadcast %411 : f32 to vector<2x256xf32>
    %413 = arith.mulf %412, %410 : vector<2x256xf32>
    %414 = arith.addf %395, %413 : vector<2x256xf32>
    %c51 = arith.constant 51 : index
    %415 = memref.load %arg2[%c51] : memref<72xf32, #tpu.memory_space<smem>>
    %416 = vector.broadcast %415 : f32 to vector<2x256xf32>
    %417 = arith.mulf %416, %410 : vector<2x256xf32>
    %418 = arith.addf %399, %417 : vector<2x256xf32>
    %c0_211 = arith.constant 0 : index
    %c2_212 = arith.constant 2 : index
    %c143_213 = arith.constant 143 : index
    %419 = vector.load %arg7[%c0_211, %c2_212, %c143_213] : memref<2x4x512xf32, #tpu.memory_space<vmem>>, vector<2x1x256xf32>
    %420 = vector.shape_cast %419 : vector<2x1x256xf32> to vector<2x256xf32>
    %c0_214 = arith.constant 0 : index
    %c2_215 = arith.constant 2 : index
    %c145_216 = arith.constant 145 : index
    %421 = vector.load %arg7[%c0_214, %c2_215, %c145_216] : memref<2x4x512xf32, #tpu.memory_space<vmem>>, vector<2x1x256xf32>
    %422 = vector.shape_cast %421 : vector<2x1x256xf32> to vector<2x256xf32>
    %423 = arith.select %22, %422, %420 : vector<2x256xi1>, vector<2x256xf32>
    %c0_217 = arith.constant 0 : index
    %c2_218 = arith.constant 2 : index
    %c111_219 = arith.constant 111 : index
    %424 = vector.load %arg7[%c0_217, %c2_218, %c111_219] : memref<2x4x512xf32, #tpu.memory_space<vmem>>, vector<2x1x256xf32>
    %425 = vector.shape_cast %424 : vector<2x1x256xf32> to vector<2x256xf32>
    %c0_220 = arith.constant 0 : index
    %c2_221 = arith.constant 2 : index
    %c113_222 = arith.constant 113 : index
    %426 = vector.load %arg7[%c0_220, %c2_221, %c113_222] : memref<2x4x512xf32, #tpu.memory_space<vmem>>, vector<2x1x256xf32>
    %427 = vector.shape_cast %426 : vector<2x1x256xf32> to vector<2x256xf32>
    %428 = arith.select %22, %427, %425 : vector<2x256xi1>, vector<2x256xf32>
    %429 = arith.select %20, %428, %423 : vector<2x256xi1>, vector<2x256xf32>
    %c52 = arith.constant 52 : index
    %430 = memref.load %arg2[%c52] : memref<72xf32, #tpu.memory_space<smem>>
    %431 = vector.broadcast %430 : f32 to vector<2x256xf32>
    %432 = arith.mulf %431, %429 : vector<2x256xf32>
    %433 = arith.addf %414, %432 : vector<2x256xf32>
    %c53 = arith.constant 53 : index
    %434 = memref.load %arg2[%c53] : memref<72xf32, #tpu.memory_space<smem>>
    %435 = vector.broadcast %434 : f32 to vector<2x256xf32>
    %436 = arith.mulf %435, %429 : vector<2x256xf32>
    %437 = arith.addf %418, %436 : vector<2x256xf32>
    %c0_223 = arith.constant 0 : index
    %c3_224 = arith.constant 3 : index
    %c143_225 = arith.constant 143 : index
    %438 = vector.load %arg7[%c0_223, %c3_224, %c143_225] : memref<2x4x512xf32, #tpu.memory_space<vmem>>, vector<2x1x256xf32>
    %439 = vector.shape_cast %438 : vector<2x1x256xf32> to vector<2x256xf32>
    %c0_226 = arith.constant 0 : index
    %c3_227 = arith.constant 3 : index
    %c145_228 = arith.constant 145 : index
    %440 = vector.load %arg7[%c0_226, %c3_227, %c145_228] : memref<2x4x512xf32, #tpu.memory_space<vmem>>, vector<2x1x256xf32>
    %441 = vector.shape_cast %440 : vector<2x1x256xf32> to vector<2x256xf32>
    %442 = arith.select %22, %441, %439 : vector<2x256xi1>, vector<2x256xf32>
    %c0_229 = arith.constant 0 : index
    %c3_230 = arith.constant 3 : index
    %c111_231 = arith.constant 111 : index
    %443 = vector.load %arg7[%c0_229, %c3_230, %c111_231] : memref<2x4x512xf32, #tpu.memory_space<vmem>>, vector<2x1x256xf32>
    %444 = vector.shape_cast %443 : vector<2x1x256xf32> to vector<2x256xf32>
    %c0_232 = arith.constant 0 : index
    %c3_233 = arith.constant 3 : index
    %c113_234 = arith.constant 113 : index
    %445 = vector.load %arg7[%c0_232, %c3_233, %c113_234] : memref<2x4x512xf32, #tpu.memory_space<vmem>>, vector<2x1x256xf32>
    %446 = vector.shape_cast %445 : vector<2x1x256xf32> to vector<2x256xf32>
    %447 = arith.select %22, %446, %444 : vector<2x256xi1>, vector<2x256xf32>
    %448 = arith.select %20, %447, %442 : vector<2x256xi1>, vector<2x256xf32>
    %c54 = arith.constant 54 : index
    %449 = memref.load %arg2[%c54] : memref<72xf32, #tpu.memory_space<smem>>
    %450 = vector.broadcast %449 : f32 to vector<2x256xf32>
    %451 = arith.mulf %450, %448 : vector<2x256xf32>
    %452 = arith.addf %433, %451 : vector<2x256xf32>
    %c55 = arith.constant 55 : index
    %453 = memref.load %arg2[%c55] : memref<72xf32, #tpu.memory_space<smem>>
    %454 = vector.broadcast %453 : f32 to vector<2x256xf32>
    %455 = arith.mulf %454, %448 : vector<2x256xf32>
    %456 = arith.addf %437, %455 : vector<2x256xf32>
    %c0_235 = arith.constant 0 : index
    %c0_236 = arith.constant 0 : index
    %c144_237 = arith.constant 144 : index
    %457 = vector.load %arg7[%c0_235, %c0_236, %c144_237] : memref<2x4x512xf32, #tpu.memory_space<vmem>>, vector<2x1x256xf32>
    %458 = vector.shape_cast %457 : vector<2x1x256xf32> to vector<2x256xf32>
    %c0_238 = arith.constant 0 : index
    %c0_239 = arith.constant 0 : index
    %c112_240 = arith.constant 112 : index
    %459 = vector.load %arg7[%c0_238, %c0_239, %c112_240] : memref<2x4x512xf32, #tpu.memory_space<vmem>>, vector<2x1x256xf32>
    %460 = vector.shape_cast %459 : vector<2x1x256xf32> to vector<2x256xf32>
    %461 = arith.select %20, %460, %458 : vector<2x256xi1>, vector<2x256xf32>
    %c56 = arith.constant 56 : index
    %462 = memref.load %arg2[%c56] : memref<72xf32, #tpu.memory_space<smem>>
    %463 = vector.broadcast %462 : f32 to vector<2x256xf32>
    %464 = arith.mulf %463, %461 : vector<2x256xf32>
    %465 = arith.addf %452, %464 : vector<2x256xf32>
    %c57 = arith.constant 57 : index
    %466 = memref.load %arg2[%c57] : memref<72xf32, #tpu.memory_space<smem>>
    %467 = vector.broadcast %466 : f32 to vector<2x256xf32>
    %468 = arith.mulf %467, %461 : vector<2x256xf32>
    %469 = arith.addf %456, %468 : vector<2x256xf32>
    %c0_241 = arith.constant 0 : index
    %c1_242 = arith.constant 1 : index
    %c144_243 = arith.constant 144 : index
    %470 = vector.load %arg7[%c0_241, %c1_242, %c144_243] : memref<2x4x512xf32, #tpu.memory_space<vmem>>, vector<2x1x256xf32>
    %471 = vector.shape_cast %470 : vector<2x1x256xf32> to vector<2x256xf32>
    %c0_244 = arith.constant 0 : index
    %c1_245 = arith.constant 1 : index
    %c112_246 = arith.constant 112 : index
    %472 = vector.load %arg7[%c0_244, %c1_245, %c112_246] : memref<2x4x512xf32, #tpu.memory_space<vmem>>, vector<2x1x256xf32>
    %473 = vector.shape_cast %472 : vector<2x1x256xf32> to vector<2x256xf32>
    %474 = arith.select %20, %473, %471 : vector<2x256xi1>, vector<2x256xf32>
    %c58 = arith.constant 58 : index
    %475 = memref.load %arg2[%c58] : memref<72xf32, #tpu.memory_space<smem>>
    %476 = vector.broadcast %475 : f32 to vector<2x256xf32>
    %477 = arith.mulf %476, %474 : vector<2x256xf32>
    %478 = arith.addf %465, %477 : vector<2x256xf32>
    %c59 = arith.constant 59 : index
    %479 = memref.load %arg2[%c59] : memref<72xf32, #tpu.memory_space<smem>>
    %480 = vector.broadcast %479 : f32 to vector<2x256xf32>
    %481 = arith.mulf %480, %474 : vector<2x256xf32>
    %482 = arith.addf %469, %481 : vector<2x256xf32>
    %c0_247 = arith.constant 0 : index
    %c2_248 = arith.constant 2 : index
    %c144_249 = arith.constant 144 : index
    %483 = vector.load %arg7[%c0_247, %c2_248, %c144_249] : memref<2x4x512xf32, #tpu.memory_space<vmem>>, vector<2x1x256xf32>
    %484 = vector.shape_cast %483 : vector<2x1x256xf32> to vector<2x256xf32>
    %c0_250 = arith.constant 0 : index
    %c2_251 = arith.constant 2 : index
    %c112_252 = arith.constant 112 : index
    %485 = vector.load %arg7[%c0_250, %c2_251, %c112_252] : memref<2x4x512xf32, #tpu.memory_space<vmem>>, vector<2x1x256xf32>
    %486 = vector.shape_cast %485 : vector<2x1x256xf32> to vector<2x256xf32>
    %487 = arith.select %20, %486, %484 : vector<2x256xi1>, vector<2x256xf32>
    %c60 = arith.constant 60 : index
    %488 = memref.load %arg2[%c60] : memref<72xf32, #tpu.memory_space<smem>>
    %489 = vector.broadcast %488 : f32 to vector<2x256xf32>
    %490 = arith.mulf %489, %487 : vector<2x256xf32>
    %491 = arith.addf %478, %490 : vector<2x256xf32>
    %c61 = arith.constant 61 : index
    %492 = memref.load %arg2[%c61] : memref<72xf32, #tpu.memory_space<smem>>
    %493 = vector.broadcast %492 : f32 to vector<2x256xf32>
    %494 = arith.mulf %493, %487 : vector<2x256xf32>
    %495 = arith.addf %482, %494 : vector<2x256xf32>
    %c0_253 = arith.constant 0 : index
    %c3_254 = arith.constant 3 : index
    %c144_255 = arith.constant 144 : index
    %496 = vector.load %arg7[%c0_253, %c3_254, %c144_255] : memref<2x4x512xf32, #tpu.memory_space<vmem>>, vector<2x1x256xf32>
    %497 = vector.shape_cast %496 : vector<2x1x256xf32> to vector<2x256xf32>
    %c0_256 = arith.constant 0 : index
    %c3_257 = arith.constant 3 : index
    %c112_258 = arith.constant 112 : index
    %498 = vector.load %arg7[%c0_256, %c3_257, %c112_258] : memref<2x4x512xf32, #tpu.memory_space<vmem>>, vector<2x1x256xf32>
    %499 = vector.shape_cast %498 : vector<2x1x256xf32> to vector<2x256xf32>
    %500 = arith.select %20, %499, %497 : vector<2x256xi1>, vector<2x256xf32>
    %c62 = arith.constant 62 : index
    %501 = memref.load %arg2[%c62] : memref<72xf32, #tpu.memory_space<smem>>
    %502 = vector.broadcast %501 : f32 to vector<2x256xf32>
    %503 = arith.mulf %502, %500 : vector<2x256xf32>
    %504 = arith.addf %491, %503 : vector<2x256xf32>
    %c63 = arith.constant 63 : index
    %505 = memref.load %arg2[%c63] : memref<72xf32, #tpu.memory_space<smem>>
    %506 = vector.broadcast %505 : f32 to vector<2x256xf32>
    %507 = arith.mulf %506, %500 : vector<2x256xf32>
    %508 = arith.addf %495, %507 : vector<2x256xf32>
    %c0_259 = arith.constant 0 : index
    %c0_260 = arith.constant 0 : index
    %c145_261 = arith.constant 145 : index
    %509 = vector.load %arg7[%c0_259, %c0_260, %c145_261] : memref<2x4x512xf32, #tpu.memory_space<vmem>>, vector<2x1x256xf32>
    %510 = vector.shape_cast %509 : vector<2x1x256xf32> to vector<2x256xf32>
    %c0_262 = arith.constant 0 : index
    %c0_263 = arith.constant 0 : index
    %c143_264 = arith.constant 143 : index
    %511 = vector.load %arg7[%c0_262, %c0_263, %c143_264] : memref<2x4x512xf32, #tpu.memory_space<vmem>>, vector<2x1x256xf32>
    %512 = vector.shape_cast %511 : vector<2x1x256xf32> to vector<2x256xf32>
    %513 = arith.select %24, %512, %510 : vector<2x256xi1>, vector<2x256xf32>
    %c0_265 = arith.constant 0 : index
    %c0_266 = arith.constant 0 : index
    %c113_267 = arith.constant 113 : index
    %514 = vector.load %arg7[%c0_265, %c0_266, %c113_267] : memref<2x4x512xf32, #tpu.memory_space<vmem>>, vector<2x1x256xf32>
    %515 = vector.shape_cast %514 : vector<2x1x256xf32> to vector<2x256xf32>
    %c0_268 = arith.constant 0 : index
    %c0_269 = arith.constant 0 : index
    %c111_270 = arith.constant 111 : index
    %516 = vector.load %arg7[%c0_268, %c0_269, %c111_270] : memref<2x4x512xf32, #tpu.memory_space<vmem>>, vector<2x1x256xf32>
    %517 = vector.shape_cast %516 : vector<2x1x256xf32> to vector<2x256xf32>
    %518 = arith.select %24, %517, %515 : vector<2x256xi1>, vector<2x256xf32>
    %519 = arith.select %20, %518, %513 : vector<2x256xi1>, vector<2x256xf32>
    %c64 = arith.constant 64 : index
    %520 = memref.load %arg2[%c64] : memref<72xf32, #tpu.memory_space<smem>>
    %521 = vector.broadcast %520 : f32 to vector<2x256xf32>
    %522 = arith.mulf %521, %519 : vector<2x256xf32>
    %523 = arith.addf %504, %522 : vector<2x256xf32>
    %c65 = arith.constant 65 : index
    %524 = memref.load %arg2[%c65] : memref<72xf32, #tpu.memory_space<smem>>
    %525 = vector.broadcast %524 : f32 to vector<2x256xf32>
    %526 = arith.mulf %525, %519 : vector<2x256xf32>
    %527 = arith.addf %508, %526 : vector<2x256xf32>
    %c0_271 = arith.constant 0 : index
    %c1_272 = arith.constant 1 : index
    %c145_273 = arith.constant 145 : index
    %528 = vector.load %arg7[%c0_271, %c1_272, %c145_273] : memref<2x4x512xf32, #tpu.memory_space<vmem>>, vector<2x1x256xf32>
    %529 = vector.shape_cast %528 : vector<2x1x256xf32> to vector<2x256xf32>
    %c0_274 = arith.constant 0 : index
    %c1_275 = arith.constant 1 : index
    %c143_276 = arith.constant 143 : index
    %530 = vector.load %arg7[%c0_274, %c1_275, %c143_276] : memref<2x4x512xf32, #tpu.memory_space<vmem>>, vector<2x1x256xf32>
    %531 = vector.shape_cast %530 : vector<2x1x256xf32> to vector<2x256xf32>
    %532 = arith.select %24, %531, %529 : vector<2x256xi1>, vector<2x256xf32>
    %c0_277 = arith.constant 0 : index
    %c1_278 = arith.constant 1 : index
    %c113_279 = arith.constant 113 : index
    %533 = vector.load %arg7[%c0_277, %c1_278, %c113_279] : memref<2x4x512xf32, #tpu.memory_space<vmem>>, vector<2x1x256xf32>
    %534 = vector.shape_cast %533 : vector<2x1x256xf32> to vector<2x256xf32>
    %c0_280 = arith.constant 0 : index
    %c1_281 = arith.constant 1 : index
    %c111_282 = arith.constant 111 : index
    %535 = vector.load %arg7[%c0_280, %c1_281, %c111_282] : memref<2x4x512xf32, #tpu.memory_space<vmem>>, vector<2x1x256xf32>
    %536 = vector.shape_cast %535 : vector<2x1x256xf32> to vector<2x256xf32>
    %537 = arith.select %24, %536, %534 : vector<2x256xi1>, vector<2x256xf32>
    %538 = arith.select %20, %537, %532 : vector<2x256xi1>, vector<2x256xf32>
    %c66 = arith.constant 66 : index
    %539 = memref.load %arg2[%c66] : memref<72xf32, #tpu.memory_space<smem>>
    %540 = vector.broadcast %539 : f32 to vector<2x256xf32>
    %541 = arith.mulf %540, %538 : vector<2x256xf32>
    %542 = arith.addf %523, %541 : vector<2x256xf32>
    %c67 = arith.constant 67 : index
    %543 = memref.load %arg2[%c67] : memref<72xf32, #tpu.memory_space<smem>>
    %544 = vector.broadcast %543 : f32 to vector<2x256xf32>
    %545 = arith.mulf %544, %538 : vector<2x256xf32>
    %546 = arith.addf %527, %545 : vector<2x256xf32>
    %c0_283 = arith.constant 0 : index
    %c2_284 = arith.constant 2 : index
    %c145_285 = arith.constant 145 : index
    %547 = vector.load %arg7[%c0_283, %c2_284, %c145_285] : memref<2x4x512xf32, #tpu.memory_space<vmem>>, vector<2x1x256xf32>
    %548 = vector.shape_cast %547 : vector<2x1x256xf32> to vector<2x256xf32>
    %c0_286 = arith.constant 0 : index
    %c2_287 = arith.constant 2 : index
    %c143_288 = arith.constant 143 : index
    %549 = vector.load %arg7[%c0_286, %c2_287, %c143_288] : memref<2x4x512xf32, #tpu.memory_space<vmem>>, vector<2x1x256xf32>
    %550 = vector.shape_cast %549 : vector<2x1x256xf32> to vector<2x256xf32>
    %551 = arith.select %24, %550, %548 : vector<2x256xi1>, vector<2x256xf32>
    %c0_289 = arith.constant 0 : index
    %c2_290 = arith.constant 2 : index
    %c113_291 = arith.constant 113 : index
    %552 = vector.load %arg7[%c0_289, %c2_290, %c113_291] : memref<2x4x512xf32, #tpu.memory_space<vmem>>, vector<2x1x256xf32>
    %553 = vector.shape_cast %552 : vector<2x1x256xf32> to vector<2x256xf32>
    %c0_292 = arith.constant 0 : index
    %c2_293 = arith.constant 2 : index
    %c111_294 = arith.constant 111 : index
    %554 = vector.load %arg7[%c0_292, %c2_293, %c111_294] : memref<2x4x512xf32, #tpu.memory_space<vmem>>, vector<2x1x256xf32>
    %555 = vector.shape_cast %554 : vector<2x1x256xf32> to vector<2x256xf32>
    %556 = arith.select %24, %555, %553 : vector<2x256xi1>, vector<2x256xf32>
    %557 = arith.select %20, %556, %551 : vector<2x256xi1>, vector<2x256xf32>
    %c68 = arith.constant 68 : index
    %558 = memref.load %arg2[%c68] : memref<72xf32, #tpu.memory_space<smem>>
    %559 = vector.broadcast %558 : f32 to vector<2x256xf32>
    %560 = arith.mulf %559, %557 : vector<2x256xf32>
    %561 = arith.addf %542, %560 : vector<2x256xf32>
    %c69 = arith.constant 69 : index
    %562 = memref.load %arg2[%c69] : memref<72xf32, #tpu.memory_space<smem>>
    %563 = vector.broadcast %562 : f32 to vector<2x256xf32>
    %564 = arith.mulf %563, %557 : vector<2x256xf32>
    %565 = arith.addf %546, %564 : vector<2x256xf32>
    %c0_295 = arith.constant 0 : index
    %c3_296 = arith.constant 3 : index
    %c145_297 = arith.constant 145 : index
    %566 = vector.load %arg7[%c0_295, %c3_296, %c145_297] : memref<2x4x512xf32, #tpu.memory_space<vmem>>, vector<2x1x256xf32>
    %567 = vector.shape_cast %566 : vector<2x1x256xf32> to vector<2x256xf32>
    %c0_298 = arith.constant 0 : index
    %c3_299 = arith.constant 3 : index
    %c143_300 = arith.constant 143 : index
    %568 = vector.load %arg7[%c0_298, %c3_299, %c143_300] : memref<2x4x512xf32, #tpu.memory_space<vmem>>, vector<2x1x256xf32>
    %569 = vector.shape_cast %568 : vector<2x1x256xf32> to vector<2x256xf32>
    %570 = arith.select %24, %569, %567 : vector<2x256xi1>, vector<2x256xf32>
    %c0_301 = arith.constant 0 : index
    %c3_302 = arith.constant 3 : index
    %c113_303 = arith.constant 113 : index
    %571 = vector.load %arg7[%c0_301, %c3_302, %c113_303] : memref<2x4x512xf32, #tpu.memory_space<vmem>>, vector<2x1x256xf32>
    %572 = vector.shape_cast %571 : vector<2x1x256xf32> to vector<2x256xf32>
    %c0_304 = arith.constant 0 : index
    %c3_305 = arith.constant 3 : index
    %c111_306 = arith.constant 111 : index
    %573 = vector.load %arg7[%c0_304, %c3_305, %c111_306] : memref<2x4x512xf32, #tpu.memory_space<vmem>>, vector<2x1x256xf32>
    %574 = vector.shape_cast %573 : vector<2x1x256xf32> to vector<2x256xf32>
    %575 = arith.select %24, %574, %572 : vector<2x256xi1>, vector<2x256xf32>
    %576 = arith.select %20, %575, %570 : vector<2x256xi1>, vector<2x256xf32>
    %c70 = arith.constant 70 : index
    %577 = memref.load %arg2[%c70] : memref<72xf32, #tpu.memory_space<smem>>
    %578 = vector.broadcast %577 : f32 to vector<2x256xf32>
    %579 = arith.mulf %578, %576 : vector<2x256xf32>
    %580 = arith.addf %561, %579 : vector<2x256xf32>
    %c71 = arith.constant 71 : index
    %581 = memref.load %arg2[%c71] : memref<72xf32, #tpu.memory_space<smem>>
    %582 = vector.broadcast %581 : f32 to vector<2x256xf32>
    %583 = arith.mulf %582, %576 : vector<2x256xf32>
    %584 = arith.addf %565, %583 : vector<2x256xf32>
    %585 = arith.addf %232, %376 : vector<2x256xf32>
    %586 = arith.addf %585, %580 : vector<2x256xf32>
    %c0_307 = arith.constant 0 : index
    %587 = memref.load %arg3[%c0_307] : memref<2xf32, #tpu.memory_space<smem>>
    %588 = vector.broadcast %587 : f32 to vector<2x256xf32>
    %589 = arith.addf %586, %588 : vector<2x256xf32>
    %cst_308 = arith.constant 0.000000e+00 : f32
    %590 = vector.broadcast %cst_308 : f32 to vector<2x256xf32>
    %591 = arith.maximumf %589, %590 : vector<2x256xf32>
    %c0_309 = arith.constant 0 : index
    %c0_310 = arith.constant 0 : index
    %c128_311 = arith.constant 128 : index
    %592 = vector.load %arg8[%c0_309, %c0_310, %c128_311] : memref<2x2x512xf32, #tpu.memory_space<vmem>>, vector<2x1x256xf32>
    %593 = vector.shape_cast %592 : vector<2x1x256xf32> to vector<2x256xf32>
    %594 = vector.shape_cast %591 : vector<2x256xf32> to vector<2x1x256xf32>
    tpu.vector_store %arg8[%c0_309, %c0_310, %c128_311], %594 {strides = array<i32>} : memref<2x2x512xf32, #tpu.memory_space<vmem>>, vector<2x1x256xf32>,
    %595 = arith.addf %236, %380 : vector<2x256xf32>
    %596 = arith.addf %595, %584 : vector<2x256xf32>
    %c1_312 = arith.constant 1 : index
    %597 = memref.load %arg3[%c1_312] : memref<2xf32, #tpu.memory_space<smem>>
    %598 = vector.broadcast %597 : f32 to vector<2x256xf32>
    %599 = arith.addf %596, %598 : vector<2x256xf32>
    %cst_313 = arith.constant 0.000000e+00 : f32
    %600 = vector.broadcast %cst_313 : f32 to vector<2x256xf32>
    %601 = arith.maximumf %599, %600 : vector<2x256xf32>
    %c0_314 = arith.constant 0 : index
    %c1_315 = arith.constant 1 : index
    %c128_316 = arith.constant 128 : index
    %602 = vector.load %arg8[%c0_314, %c1_315, %c128_316] : memref<2x2x512xf32, #tpu.memory_space<vmem>>, vector<2x1x256xf32>
    %603 = vector.shape_cast %602 : vector<2x1x256xf32> to vector<2x256xf32>
    %604 = vector.shape_cast %601 : vector<2x256xf32> to vector<2x1x256xf32>
    tpu.vector_store %arg8[%c0_314, %c1_315, %c128_316], %604 {strides = array<i32>} : memref<2x2x512xf32, #tpu.memory_space<vmem>>, vector<2x1x256xf32>,
    %cst_317 = arith.constant 0.000000e+00 : f32
    %605 = vector.broadcast %cst_317 : f32 to vector<2x256xf32>
    %cst_318 = arith.constant 0.000000e+00 : f32
    %606 = vector.broadcast %cst_318 : f32 to vector<2x256xf32>
    %cst_319 = arith.constant 0.000000e+00 : f32
    %607 = vector.broadcast %cst_319 : f32 to vector<2x256xf32>
    %cst_320 = arith.constant 0.000000e+00 : f32
    %608 = vector.broadcast %cst_320 : f32 to vector<2x256xf32>
    %cst_321 = arith.constant 0.000000e+00 : f32
    %609 = vector.broadcast %cst_321 : f32 to vector<2x256xf32>
    %cst_322 = arith.constant 0.000000e+00 : f32
    %610 = vector.broadcast %cst_322 : f32 to vector<2x256xf32>
    %cst_323 = arith.constant 0.000000e+00 : f32
    %611 = vector.broadcast %cst_323 : f32 to vector<2x256xf32>
    %cst_324 = arith.constant 0.000000e+00 : f32
    %612 = vector.broadcast %cst_324 : f32 to vector<2x256xf32>
    %cst_325 = arith.constant 0.000000e+00 : f32
    %613 = vector.broadcast %cst_325 : f32 to vector<2x256xf32>
    %cst_326 = arith.constant 0.000000e+00 : f32
    %614 = vector.broadcast %cst_326 : f32 to vector<2x256xf32>
    %cst_327 = arith.constant 0.000000e+00 : f32
    %615 = vector.broadcast %cst_327 : f32 to vector<2x256xf32>
    %cst_328 = arith.constant 0.000000e+00 : f32
    %616 = vector.broadcast %cst_328 : f32 to vector<2x256xf32>
    %c0_329 = arith.constant 0 : index
    %c0_330 = arith.constant 0 : index
    %c111_331 = arith.constant 111 : index
    %617 = vector.load %arg8[%c0_329, %c0_330, %c111_331] : memref<2x2x512xf32, #tpu.memory_space<vmem>>, vector<2x1x256xf32>
    %618 = vector.shape_cast %617 : vector<2x1x256xf32> to vector<2x256xf32>
    %c0_332 = arith.constant 0 : index
    %c0_333 = arith.constant 0 : index
    %c113_334 = arith.constant 113 : index
    %619 = vector.load %arg8[%c0_332, %c0_333, %c113_334] : memref<2x2x512xf32, #tpu.memory_space<vmem>>, vector<2x1x256xf32>
    %620 = vector.shape_cast %619 : vector<2x1x256xf32> to vector<2x256xf32>
    %621 = arith.select %22, %620, %618 : vector<2x256xi1>, vector<2x256xf32>
    %c0_335 = arith.constant 0 : index
    %c0_336 = arith.constant 0 : index
    %c143_337 = arith.constant 143 : index
    %622 = vector.load %arg8[%c0_335, %c0_336, %c143_337] : memref<2x2x512xf32, #tpu.memory_space<vmem>>, vector<2x1x256xf32>
    %623 = vector.shape_cast %622 : vector<2x1x256xf32> to vector<2x256xf32>
    %c0_338 = arith.constant 0 : index
    %c0_339 = arith.constant 0 : index
    %c145_340 = arith.constant 145 : index
    %624 = vector.load %arg8[%c0_338, %c0_339, %c145_340] : memref<2x2x512xf32, #tpu.memory_space<vmem>>, vector<2x1x256xf32>
    %625 = vector.shape_cast %624 : vector<2x1x256xf32> to vector<2x256xf32>
    %626 = arith.select %22, %625, %623 : vector<2x256xi1>, vector<2x256xf32>
    %627 = arith.select %18, %626, %621 : vector<2x256xi1>, vector<2x256xf32>
    %c0_341 = arith.constant 0 : index
    %628 = memref.load %arg4[%c0_341] : memref<72xf32, #tpu.memory_space<smem>>
    %629 = vector.broadcast %628 : f32 to vector<2x256xf32>
    %630 = arith.mulf %629, %627 : vector<2x256xf32>
    %631 = arith.addf %605, %630 : vector<2x256xf32>
    %c1_342 = arith.constant 1 : index
    %632 = memref.load %arg4[%c1_342] : memref<72xf32, #tpu.memory_space<smem>>
    %633 = vector.broadcast %632 : f32 to vector<2x256xf32>
    %634 = arith.mulf %633, %627 : vector<2x256xf32>
    %635 = arith.addf %608, %634 : vector<2x256xf32>
    %c2_343 = arith.constant 2 : index
    %636 = memref.load %arg4[%c2_343] : memref<72xf32, #tpu.memory_space<smem>>
    %637 = vector.broadcast %636 : f32 to vector<2x256xf32>
    %638 = arith.mulf %637, %627 : vector<2x256xf32>
    %639 = arith.addf %611, %638 : vector<2x256xf32>
    %c3_344 = arith.constant 3 : index
    %640 = memref.load %arg4[%c3_344] : memref<72xf32, #tpu.memory_space<smem>>
    %641 = vector.broadcast %640 : f32 to vector<2x256xf32>
    %642 = arith.mulf %641, %627 : vector<2x256xf32>
    %643 = arith.addf %614, %642 : vector<2x256xf32>
    %c0_345 = arith.constant 0 : index
    %c1_346 = arith.constant 1 : index
    %c111_347 = arith.constant 111 : index
    %644 = vector.load %arg8[%c0_345, %c1_346, %c111_347] : memref<2x2x512xf32, #tpu.memory_space<vmem>>, vector<2x1x256xf32>
    %645 = vector.shape_cast %644 : vector<2x1x256xf32> to vector<2x256xf32>
    %c0_348 = arith.constant 0 : index
    %c1_349 = arith.constant 1 : index
    %c113_350 = arith.constant 113 : index
    %646 = vector.load %arg8[%c0_348, %c1_349, %c113_350] : memref<2x2x512xf32, #tpu.memory_space<vmem>>, vector<2x1x256xf32>
    %647 = vector.shape_cast %646 : vector<2x1x256xf32> to vector<2x256xf32>
    %648 = arith.select %22, %647, %645 : vector<2x256xi1>, vector<2x256xf32>
    %c0_351 = arith.constant 0 : index
    %c1_352 = arith.constant 1 : index
    %c143_353 = arith.constant 143 : index
    %649 = vector.load %arg8[%c0_351, %c1_352, %c143_353] : memref<2x2x512xf32, #tpu.memory_space<vmem>>, vector<2x1x256xf32>
    %650 = vector.shape_cast %649 : vector<2x1x256xf32> to vector<2x256xf32>
    %c0_354 = arith.constant 0 : index
    %c1_355 = arith.constant 1 : index
    %c145_356 = arith.constant 145 : index
    %651 = vector.load %arg8[%c0_354, %c1_355, %c145_356] : memref<2x2x512xf32, #tpu.memory_space<vmem>>, vector<2x1x256xf32>
    %652 = vector.shape_cast %651 : vector<2x1x256xf32> to vector<2x256xf32>
    %653 = arith.select %22, %652, %650 : vector<2x256xi1>, vector<2x256xf32>
    %654 = arith.select %18, %653, %648 : vector<2x256xi1>, vector<2x256xf32>
    %c4_357 = arith.constant 4 : index
    %655 = memref.load %arg4[%c4_357] : memref<72xf32, #tpu.memory_space<smem>>
    %656 = vector.broadcast %655 : f32 to vector<2x256xf32>
    %657 = arith.mulf %656, %654 : vector<2x256xf32>
    %658 = arith.addf %631, %657 : vector<2x256xf32>
    %c5_358 = arith.constant 5 : index
    %659 = memref.load %arg4[%c5_358] : memref<72xf32, #tpu.memory_space<smem>>
    %660 = vector.broadcast %659 : f32 to vector<2x256xf32>
    %661 = arith.mulf %660, %654 : vector<2x256xf32>
    %662 = arith.addf %635, %661 : vector<2x256xf32>
    %c6_359 = arith.constant 6 : index
    %663 = memref.load %arg4[%c6_359] : memref<72xf32, #tpu.memory_space<smem>>
    %664 = vector.broadcast %663 : f32 to vector<2x256xf32>
    %665 = arith.mulf %664, %654 : vector<2x256xf32>
    %666 = arith.addf %639, %665 : vector<2x256xf32>
    %c7_360 = arith.constant 7 : index
    %667 = memref.load %arg4[%c7_360] : memref<72xf32, #tpu.memory_space<smem>>
    %668 = vector.broadcast %667 : f32 to vector<2x256xf32>
    %669 = arith.mulf %668, %654 : vector<2x256xf32>
    %670 = arith.addf %643, %669 : vector<2x256xf32>
    %c0_361 = arith.constant 0 : index
    %c0_362 = arith.constant 0 : index
    %c112_363 = arith.constant 112 : index
    %671 = vector.load %arg8[%c0_361, %c0_362, %c112_363] : memref<2x2x512xf32, #tpu.memory_space<vmem>>, vector<2x1x256xf32>
    %672 = vector.shape_cast %671 : vector<2x1x256xf32> to vector<2x256xf32>
    %c0_364 = arith.constant 0 : index
    %c0_365 = arith.constant 0 : index
    %c144_366 = arith.constant 144 : index
    %673 = vector.load %arg8[%c0_364, %c0_365, %c144_366] : memref<2x2x512xf32, #tpu.memory_space<vmem>>, vector<2x1x256xf32>
    %674 = vector.shape_cast %673 : vector<2x1x256xf32> to vector<2x256xf32>
    %675 = arith.select %18, %674, %672 : vector<2x256xi1>, vector<2x256xf32>
    %c8_367 = arith.constant 8 : index
    %676 = memref.load %arg4[%c8_367] : memref<72xf32, #tpu.memory_space<smem>>
    %677 = vector.broadcast %676 : f32 to vector<2x256xf32>
    %678 = arith.mulf %677, %675 : vector<2x256xf32>
    %679 = arith.addf %658, %678 : vector<2x256xf32>
    %c9_368 = arith.constant 9 : index
    %680 = memref.load %arg4[%c9_368] : memref<72xf32, #tpu.memory_space<smem>>
    %681 = vector.broadcast %680 : f32 to vector<2x256xf32>
    %682 = arith.mulf %681, %675 : vector<2x256xf32>
    %683 = arith.addf %662, %682 : vector<2x256xf32>
    %c10_369 = arith.constant 10 : index
    %684 = memref.load %arg4[%c10_369] : memref<72xf32, #tpu.memory_space<smem>>
    %685 = vector.broadcast %684 : f32 to vector<2x256xf32>
    %686 = arith.mulf %685, %675 : vector<2x256xf32>
    %687 = arith.addf %666, %686 : vector<2x256xf32>
    %c11_370 = arith.constant 11 : index
    %688 = memref.load %arg4[%c11_370] : memref<72xf32, #tpu.memory_space<smem>>
    %689 = vector.broadcast %688 : f32 to vector<2x256xf32>
    %690 = arith.mulf %689, %675 : vector<2x256xf32>
    %691 = arith.addf %670, %690 : vector<2x256xf32>
    %c0_371 = arith.constant 0 : index
    %c1_372 = arith.constant 1 : index
    %c112_373 = arith.constant 112 : index
    %692 = vector.load %arg8[%c0_371, %c1_372, %c112_373] : memref<2x2x512xf32, #tpu.memory_space<vmem>>, vector<2x1x256xf32>
    %693 = vector.shape_cast %692 : vector<2x1x256xf32> to vector<2x256xf32>
    %c0_374 = arith.constant 0 : index
    %c1_375 = arith.constant 1 : index
    %c144_376 = arith.constant 144 : index
    %694 = vector.load %arg8[%c0_374, %c1_375, %c144_376] : memref<2x2x512xf32, #tpu.memory_space<vmem>>, vector<2x1x256xf32>
    %695 = vector.shape_cast %694 : vector<2x1x256xf32> to vector<2x256xf32>
    %696 = arith.select %18, %695, %693 : vector<2x256xi1>, vector<2x256xf32>
    %c12_377 = arith.constant 12 : index
    %697 = memref.load %arg4[%c12_377] : memref<72xf32, #tpu.memory_space<smem>>
    %698 = vector.broadcast %697 : f32 to vector<2x256xf32>
    %699 = arith.mulf %698, %696 : vector<2x256xf32>
    %700 = arith.addf %679, %699 : vector<2x256xf32>
    %c13_378 = arith.constant 13 : index
    %701 = memref.load %arg4[%c13_378] : memref<72xf32, #tpu.memory_space<smem>>
    %702 = vector.broadcast %701 : f32 to vector<2x256xf32>
    %703 = arith.mulf %702, %696 : vector<2x256xf32>
    %704 = arith.addf %683, %703 : vector<2x256xf32>
    %c14_379 = arith.constant 14 : index
    %705 = memref.load %arg4[%c14_379] : memref<72xf32, #tpu.memory_space<smem>>
    %706 = vector.broadcast %705 : f32 to vector<2x256xf32>
    %707 = arith.mulf %706, %696 : vector<2x256xf32>
    %708 = arith.addf %687, %707 : vector<2x256xf32>
    %c15_380 = arith.constant 15 : index
    %709 = memref.load %arg4[%c15_380] : memref<72xf32, #tpu.memory_space<smem>>
    %710 = vector.broadcast %709 : f32 to vector<2x256xf32>
    %711 = arith.mulf %710, %696 : vector<2x256xf32>
    %712 = arith.addf %691, %711 : vector<2x256xf32>
    %c0_381 = arith.constant 0 : index
    %c0_382 = arith.constant 0 : index
    %c113_383 = arith.constant 113 : index
    %713 = vector.load %arg8[%c0_381, %c0_382, %c113_383] : memref<2x2x512xf32, #tpu.memory_space<vmem>>, vector<2x1x256xf32>
    %714 = vector.shape_cast %713 : vector<2x1x256xf32> to vector<2x256xf32>
    %c0_384 = arith.constant 0 : index
    %c0_385 = arith.constant 0 : index
    %c111_386 = arith.constant 111 : index
    %715 = vector.load %arg8[%c0_384, %c0_385, %c111_386] : memref<2x2x512xf32, #tpu.memory_space<vmem>>, vector<2x1x256xf32>
    %716 = vector.shape_cast %715 : vector<2x1x256xf32> to vector<2x256xf32>
    %717 = arith.select %24, %716, %714 : vector<2x256xi1>, vector<2x256xf32>
    %c0_387 = arith.constant 0 : index
    %c0_388 = arith.constant 0 : index
    %c145_389 = arith.constant 145 : index
    %718 = vector.load %arg8[%c0_387, %c0_388, %c145_389] : memref<2x2x512xf32, #tpu.memory_space<vmem>>, vector<2x1x256xf32>
    %719 = vector.shape_cast %718 : vector<2x1x256xf32> to vector<2x256xf32>
    %c0_390 = arith.constant 0 : index
    %c0_391 = arith.constant 0 : index
    %c143_392 = arith.constant 143 : index
    %720 = vector.load %arg8[%c0_390, %c0_391, %c143_392] : memref<2x2x512xf32, #tpu.memory_space<vmem>>, vector<2x1x256xf32>
    %721 = vector.shape_cast %720 : vector<2x1x256xf32> to vector<2x256xf32>
    %722 = arith.select %24, %721, %719 : vector<2x256xi1>, vector<2x256xf32>
    %723 = arith.select %18, %722, %717 : vector<2x256xi1>, vector<2x256xf32>
    %c16_393 = arith.constant 16 : index
    %724 = memref.load %arg4[%c16_393] : memref<72xf32, #tpu.memory_space<smem>>
    %725 = vector.broadcast %724 : f32 to vector<2x256xf32>
    %726 = arith.mulf %725, %723 : vector<2x256xf32>
    %727 = arith.addf %700, %726 : vector<2x256xf32>
    %c17_394 = arith.constant 17 : index
    %728 = memref.load %arg4[%c17_394] : memref<72xf32, #tpu.memory_space<smem>>
    %729 = vector.broadcast %728 : f32 to vector<2x256xf32>
    %730 = arith.mulf %729, %723 : vector<2x256xf32>
    %731 = arith.addf %704, %730 : vector<2x256xf32>
    %c18_395 = arith.constant 18 : index
    %732 = memref.load %arg4[%c18_395] : memref<72xf32, #tpu.memory_space<smem>>
    %733 = vector.broadcast %732 : f32 to vector<2x256xf32>
    %734 = arith.mulf %733, %723 : vector<2x256xf32>
    %735 = arith.addf %708, %734 : vector<2x256xf32>
    %c19_396 = arith.constant 19 : index
    %736 = memref.load %arg4[%c19_396] : memref<72xf32, #tpu.memory_space<smem>>
    %737 = vector.broadcast %736 : f32 to vector<2x256xf32>
    %738 = arith.mulf %737, %723 : vector<2x256xf32>
    %739 = arith.addf %712, %738 : vector<2x256xf32>
    %c0_397 = arith.constant 0 : index
    %c1_398 = arith.constant 1 : index
    %c113_399 = arith.constant 113 : index
    %740 = vector.load %arg8[%c0_397, %c1_398, %c113_399] : memref<2x2x512xf32, #tpu.memory_space<vmem>>, vector<2x1x256xf32>
    %741 = vector.shape_cast %740 : vector<2x1x256xf32> to vector<2x256xf32>
    %c0_400 = arith.constant 0 : index
    %c1_401 = arith.constant 1 : index
    %c111_402 = arith.constant 111 : index
    %742 = vector.load %arg8[%c0_400, %c1_401, %c111_402] : memref<2x2x512xf32, #tpu.memory_space<vmem>>, vector<2x1x256xf32>
    %743 = vector.shape_cast %742 : vector<2x1x256xf32> to vector<2x256xf32>
    %744 = arith.select %24, %743, %741 : vector<2x256xi1>, vector<2x256xf32>
    %c0_403 = arith.constant 0 : index
    %c1_404 = arith.constant 1 : index
    %c145_405 = arith.constant 145 : index
    %745 = vector.load %arg8[%c0_403, %c1_404, %c145_405] : memref<2x2x512xf32, #tpu.memory_space<vmem>>, vector<2x1x256xf32>
    %746 = vector.shape_cast %745 : vector<2x1x256xf32> to vector<2x256xf32>
    %c0_406 = arith.constant 0 : index
    %c1_407 = arith.constant 1 : index
    %c143_408 = arith.constant 143 : index
    %747 = vector.load %arg8[%c0_406, %c1_407, %c143_408] : memref<2x2x512xf32, #tpu.memory_space<vmem>>, vector<2x1x256xf32>
    %748 = vector.shape_cast %747 : vector<2x1x256xf32> to vector<2x256xf32>
    %749 = arith.select %24, %748, %746 : vector<2x256xi1>, vector<2x256xf32>
    %750 = arith.select %18, %749, %744 : vector<2x256xi1>, vector<2x256xf32>
    %c20_409 = arith.constant 20 : index
    %751 = memref.load %arg4[%c20_409] : memref<72xf32, #tpu.memory_space<smem>>
    %752 = vector.broadcast %751 : f32 to vector<2x256xf32>
    %753 = arith.mulf %752, %750 : vector<2x256xf32>
    %754 = arith.addf %727, %753 : vector<2x256xf32>
    %c21_410 = arith.constant 21 : index
    %755 = memref.load %arg4[%c21_410] : memref<72xf32, #tpu.memory_space<smem>>
    %756 = vector.broadcast %755 : f32 to vector<2x256xf32>
    %757 = arith.mulf %756, %750 : vector<2x256xf32>
    %758 = arith.addf %731, %757 : vector<2x256xf32>
    %c22_411 = arith.constant 22 : index
    %759 = memref.load %arg4[%c22_411] : memref<72xf32, #tpu.memory_space<smem>>
    %760 = vector.broadcast %759 : f32 to vector<2x256xf32>
    %761 = arith.mulf %760, %750 : vector<2x256xf32>
    %762 = arith.addf %735, %761 : vector<2x256xf32>
    %c23_412 = arith.constant 23 : index
    %763 = memref.load %arg4[%c23_412] : memref<72xf32, #tpu.memory_space<smem>>
    %764 = vector.broadcast %763 : f32 to vector<2x256xf32>
    %765 = arith.mulf %764, %750 : vector<2x256xf32>
    %766 = arith.addf %739, %765 : vector<2x256xf32>
    %c0_413 = arith.constant 0 : index
    %c0_414 = arith.constant 0 : index
    %c127_415 = arith.constant 127 : index
    %767 = vector.load %arg8[%c0_413, %c0_414, %c127_415] : memref<2x2x512xf32, #tpu.memory_space<vmem>>, vector<2x1x256xf32>
    %768 = vector.shape_cast %767 : vector<2x1x256xf32> to vector<2x256xf32>
    %c0_416 = arith.constant 0 : index
    %c0_417 = arith.constant 0 : index
    %c129_418 = arith.constant 129 : index
    %769 = vector.load %arg8[%c0_416, %c0_417, %c129_418] : memref<2x2x512xf32, #tpu.memory_space<vmem>>, vector<2x1x256xf32>
    %770 = vector.shape_cast %769 : vector<2x1x256xf32> to vector<2x256xf32>
    %771 = arith.select %22, %770, %768 : vector<2x256xi1>, vector<2x256xf32>
    %c24_419 = arith.constant 24 : index
    %772 = memref.load %arg4[%c24_419] : memref<72xf32, #tpu.memory_space<smem>>
    %773 = vector.broadcast %772 : f32 to vector<2x256xf32>
    %774 = arith.mulf %773, %771 : vector<2x256xf32>
    %775 = arith.addf %606, %774 : vector<2x256xf32>
    %c25_420 = arith.constant 25 : index
    %776 = memref.load %arg4[%c25_420] : memref<72xf32, #tpu.memory_space<smem>>
    %777 = vector.broadcast %776 : f32 to vector<2x256xf32>
    %778 = arith.mulf %777, %771 : vector<2x256xf32>
    %779 = arith.addf %609, %778 : vector<2x256xf32>
    %c26_421 = arith.constant 26 : index
    %780 = memref.load %arg4[%c26_421] : memref<72xf32, #tpu.memory_space<smem>>
    %781 = vector.broadcast %780 : f32 to vector<2x256xf32>
    %782 = arith.mulf %781, %771 : vector<2x256xf32>
    %783 = arith.addf %612, %782 : vector<2x256xf32>
    %c27_422 = arith.constant 27 : index
    %784 = memref.load %arg4[%c27_422] : memref<72xf32, #tpu.memory_space<smem>>
    %785 = vector.broadcast %784 : f32 to vector<2x256xf32>
    %786 = arith.mulf %785, %771 : vector<2x256xf32>
    %787 = arith.addf %615, %786 : vector<2x256xf32>
    %c0_423 = arith.constant 0 : index
    %c1_424 = arith.constant 1 : index
    %c127_425 = arith.constant 127 : index
    %788 = vector.load %arg8[%c0_423, %c1_424, %c127_425] : memref<2x2x512xf32, #tpu.memory_space<vmem>>, vector<2x1x256xf32>
    %789 = vector.shape_cast %788 : vector<2x1x256xf32> to vector<2x256xf32>
    %c0_426 = arith.constant 0 : index
    %c1_427 = arith.constant 1 : index
    %c129_428 = arith.constant 129 : index
    %790 = vector.load %arg8[%c0_426, %c1_427, %c129_428] : memref<2x2x512xf32, #tpu.memory_space<vmem>>, vector<2x1x256xf32>
    %791 = vector.shape_cast %790 : vector<2x1x256xf32> to vector<2x256xf32>
    %792 = arith.select %22, %791, %789 : vector<2x256xi1>, vector<2x256xf32>
    %c28_429 = arith.constant 28 : index
    %793 = memref.load %arg4[%c28_429] : memref<72xf32, #tpu.memory_space<smem>>
    %794 = vector.broadcast %793 : f32 to vector<2x256xf32>
    %795 = arith.mulf %794, %792 : vector<2x256xf32>
    %796 = arith.addf %775, %795 : vector<2x256xf32>
    %c29_430 = arith.constant 29 : index
    %797 = memref.load %arg4[%c29_430] : memref<72xf32, #tpu.memory_space<smem>>
    %798 = vector.broadcast %797 : f32 to vector<2x256xf32>
    %799 = arith.mulf %798, %792 : vector<2x256xf32>
    %800 = arith.addf %779, %799 : vector<2x256xf32>
    %c30_431 = arith.constant 30 : index
    %801 = memref.load %arg4[%c30_431] : memref<72xf32, #tpu.memory_space<smem>>
    %802 = vector.broadcast %801 : f32 to vector<2x256xf32>
    %803 = arith.mulf %802, %792 : vector<2x256xf32>
    %804 = arith.addf %783, %803 : vector<2x256xf32>
    %c31_432 = arith.constant 31 : index
    %805 = memref.load %arg4[%c31_432] : memref<72xf32, #tpu.memory_space<smem>>
    %806 = vector.broadcast %805 : f32 to vector<2x256xf32>
    %807 = arith.mulf %806, %792 : vector<2x256xf32>
    %808 = arith.addf %787, %807 : vector<2x256xf32>
    %c0_433 = arith.constant 0 : index
    %c0_434 = arith.constant 0 : index
    %c128_435 = arith.constant 128 : index
    %809 = vector.load %arg8[%c0_433, %c0_434, %c128_435] : memref<2x2x512xf32, #tpu.memory_space<vmem>>, vector<2x1x256xf32>
    %810 = vector.shape_cast %809 : vector<2x1x256xf32> to vector<2x256xf32>
    %c32_436 = arith.constant 32 : index
    %811 = memref.load %arg4[%c32_436] : memref<72xf32, #tpu.memory_space<smem>>
    %812 = vector.broadcast %811 : f32 to vector<2x256xf32>
    %813 = arith.mulf %812, %810 : vector<2x256xf32>
    %814 = arith.addf %796, %813 : vector<2x256xf32>
    %c33_437 = arith.constant 33 : index
    %815 = memref.load %arg4[%c33_437] : memref<72xf32, #tpu.memory_space<smem>>
    %816 = vector.broadcast %815 : f32 to vector<2x256xf32>
    %817 = arith.mulf %816, %810 : vector<2x256xf32>
    %818 = arith.addf %800, %817 : vector<2x256xf32>
    %c34_438 = arith.constant 34 : index
    %819 = memref.load %arg4[%c34_438] : memref<72xf32, #tpu.memory_space<smem>>
    %820 = vector.broadcast %819 : f32 to vector<2x256xf32>
    %821 = arith.mulf %820, %810 : vector<2x256xf32>
    %822 = arith.addf %804, %821 : vector<2x256xf32>
    %c35_439 = arith.constant 35 : index
    %823 = memref.load %arg4[%c35_439] : memref<72xf32, #tpu.memory_space<smem>>
    %824 = vector.broadcast %823 : f32 to vector<2x256xf32>
    %825 = arith.mulf %824, %810 : vector<2x256xf32>
    %826 = arith.addf %808, %825 : vector<2x256xf32>
    %c0_440 = arith.constant 0 : index
    %c1_441 = arith.constant 1 : index
    %c128_442 = arith.constant 128 : index
    %827 = vector.load %arg8[%c0_440, %c1_441, %c128_442] : memref<2x2x512xf32, #tpu.memory_space<vmem>>, vector<2x1x256xf32>
    %828 = vector.shape_cast %827 : vector<2x1x256xf32> to vector<2x256xf32>
    %c36_443 = arith.constant 36 : index
    %829 = memref.load %arg4[%c36_443] : memref<72xf32, #tpu.memory_space<smem>>
    %830 = vector.broadcast %829 : f32 to vector<2x256xf32>
    %831 = arith.mulf %830, %828 : vector<2x256xf32>
    %832 = arith.addf %814, %831 : vector<2x256xf32>
    %c37_444 = arith.constant 37 : index
    %833 = memref.load %arg4[%c37_444] : memref<72xf32, #tpu.memory_space<smem>>
    %834 = vector.broadcast %833 : f32 to vector<2x256xf32>
    %835 = arith.mulf %834, %828 : vector<2x256xf32>
    %836 = arith.addf %818, %835 : vector<2x256xf32>
    %c38_445 = arith.constant 38 : index
    %837 = memref.load %arg4[%c38_445] : memref<72xf32, #tpu.memory_space<smem>>
    %838 = vector.broadcast %837 : f32 to vector<2x256xf32>
    %839 = arith.mulf %838, %828 : vector<2x256xf32>
    %840 = arith.addf %822, %839 : vector<2x256xf32>
    %c39_446 = arith.constant 39 : index
    %841 = memref.load %arg4[%c39_446] : memref<72xf32, #tpu.memory_space<smem>>
    %842 = vector.broadcast %841 : f32 to vector<2x256xf32>
    %843 = arith.mulf %842, %828 : vector<2x256xf32>
    %844 = arith.addf %826, %843 : vector<2x256xf32>
    %c0_447 = arith.constant 0 : index
    %c0_448 = arith.constant 0 : index
    %c129_449 = arith.constant 129 : index
    %845 = vector.load %arg8[%c0_447, %c0_448, %c129_449] : memref<2x2x512xf32, #tpu.memory_space<vmem>>, vector<2x1x256xf32>
    %846 = vector.shape_cast %845 : vector<2x1x256xf32> to vector<2x256xf32>
    %c0_450 = arith.constant 0 : index
    %c0_451 = arith.constant 0 : index
    %c127_452 = arith.constant 127 : index
    %847 = vector.load %arg8[%c0_450, %c0_451, %c127_452] : memref<2x2x512xf32, #tpu.memory_space<vmem>>, vector<2x1x256xf32>
    %848 = vector.shape_cast %847 : vector<2x1x256xf32> to vector<2x256xf32>
    %849 = arith.select %24, %848, %846 : vector<2x256xi1>, vector<2x256xf32>
    %c40_453 = arith.constant 40 : index
    %850 = memref.load %arg4[%c40_453] : memref<72xf32, #tpu.memory_space<smem>>
    %851 = vector.broadcast %850 : f32 to vector<2x256xf32>
    %852 = arith.mulf %851, %849 : vector<2x256xf32>
    %853 = arith.addf %832, %852 : vector<2x256xf32>
    %c41_454 = arith.constant 41 : index
    %854 = memref.load %arg4[%c41_454] : memref<72xf32, #tpu.memory_space<smem>>
    %855 = vector.broadcast %854 : f32 to vector<2x256xf32>
    %856 = arith.mulf %855, %849 : vector<2x256xf32>
    %857 = arith.addf %836, %856 : vector<2x256xf32>
    %c42_455 = arith.constant 42 : index
    %858 = memref.load %arg4[%c42_455] : memref<72xf32, #tpu.memory_space<smem>>
    %859 = vector.broadcast %858 : f32 to vector<2x256xf32>
    %860 = arith.mulf %859, %849 : vector<2x256xf32>
    %861 = arith.addf %840, %860 : vector<2x256xf32>
    %c43_456 = arith.constant 43 : index
    %862 = memref.load %arg4[%c43_456] : memref<72xf32, #tpu.memory_space<smem>>
    %863 = vector.broadcast %862 : f32 to vector<2x256xf32>
    %864 = arith.mulf %863, %849 : vector<2x256xf32>
    %865 = arith.addf %844, %864 : vector<2x256xf32>
    %c0_457 = arith.constant 0 : index
    %c1_458 = arith.constant 1 : index
    %c129_459 = arith.constant 129 : index
    %866 = vector.load %arg8[%c0_457, %c1_458, %c129_459] : memref<2x2x512xf32, #tpu.memory_space<vmem>>, vector<2x1x256xf32>
    %867 = vector.shape_cast %866 : vector<2x1x256xf32> to vector<2x256xf32>
    %c0_460 = arith.constant 0 : index
    %c1_461 = arith.constant 1 : index
    %c127_462 = arith.constant 127 : index
    %868 = vector.load %arg8[%c0_460, %c1_461, %c127_462] : memref<2x2x512xf32, #tpu.memory_space<vmem>>, vector<2x1x256xf32>
    %869 = vector.shape_cast %868 : vector<2x1x256xf32> to vector<2x256xf32>
    %870 = arith.select %24, %869, %867 : vector<2x256xi1>, vector<2x256xf32>
    %c44_463 = arith.constant 44 : index
    %871 = memref.load %arg4[%c44_463] : memref<72xf32, #tpu.memory_space<smem>>
    %872 = vector.broadcast %871 : f32 to vector<2x256xf32>
    %873 = arith.mulf %872, %870 : vector<2x256xf32>
    %874 = arith.addf %853, %873 : vector<2x256xf32>
    %c45_464 = arith.constant 45 : index
    %875 = memref.load %arg4[%c45_464] : memref<72xf32, #tpu.memory_space<smem>>
    %876 = vector.broadcast %875 : f32 to vector<2x256xf32>
    %877 = arith.mulf %876, %870 : vector<2x256xf32>
    %878 = arith.addf %857, %877 : vector<2x256xf32>
    %c46_465 = arith.constant 46 : index
    %879 = memref.load %arg4[%c46_465] : memref<72xf32, #tpu.memory_space<smem>>
    %880 = vector.broadcast %879 : f32 to vector<2x256xf32>
    %881 = arith.mulf %880, %870 : vector<2x256xf32>
    %882 = arith.addf %861, %881 : vector<2x256xf32>
    %c47_466 = arith.constant 47 : index
    %883 = memref.load %arg4[%c47_466] : memref<72xf32, #tpu.memory_space<smem>>
    %884 = vector.broadcast %883 : f32 to vector<2x256xf32>
    %885 = arith.mulf %884, %870 : vector<2x256xf32>
    %886 = arith.addf %865, %885 : vector<2x256xf32>
    %c0_467 = arith.constant 0 : index
    %c0_468 = arith.constant 0 : index
    %c143_469 = arith.constant 143 : index
    %887 = vector.load %arg8[%c0_467, %c0_468, %c143_469] : memref<2x2x512xf32, #tpu.memory_space<vmem>>, vector<2x1x256xf32>
    %888 = vector.shape_cast %887 : vector<2x1x256xf32> to vector<2x256xf32>
    %c0_470 = arith.constant 0 : index
    %c0_471 = arith.constant 0 : index
    %c145_472 = arith.constant 145 : index
    %889 = vector.load %arg8[%c0_470, %c0_471, %c145_472] : memref<2x2x512xf32, #tpu.memory_space<vmem>>, vector<2x1x256xf32>
    %890 = vector.shape_cast %889 : vector<2x1x256xf32> to vector<2x256xf32>
    %891 = arith.select %22, %890, %888 : vector<2x256xi1>, vector<2x256xf32>
    %c0_473 = arith.constant 0 : index
    %c0_474 = arith.constant 0 : index
    %c111_475 = arith.constant 111 : index
    %892 = vector.load %arg8[%c0_473, %c0_474, %c111_475] : memref<2x2x512xf32, #tpu.memory_space<vmem>>, vector<2x1x256xf32>
    %893 = vector.shape_cast %892 : vector<2x1x256xf32> to vector<2x256xf32>
    %c0_476 = arith.constant 0 : index
    %c0_477 = arith.constant 0 : index
    %c113_478 = arith.constant 113 : index
    %894 = vector.load %arg8[%c0_476, %c0_477, %c113_478] : memref<2x2x512xf32, #tpu.memory_space<vmem>>, vector<2x1x256xf32>
    %895 = vector.shape_cast %894 : vector<2x1x256xf32> to vector<2x256xf32>
    %896 = arith.select %22, %895, %893 : vector<2x256xi1>, vector<2x256xf32>
    %897 = arith.select %20, %896, %891 : vector<2x256xi1>, vector<2x256xf32>
    %c48_479 = arith.constant 48 : index
    %898 = memref.load %arg4[%c48_479] : memref<72xf32, #tpu.memory_space<smem>>
    %899 = vector.broadcast %898 : f32 to vector<2x256xf32>
    %900 = arith.mulf %899, %897 : vector<2x256xf32>
    %901 = arith.addf %607, %900 : vector<2x256xf32>
    %c49_480 = arith.constant 49 : index
    %902 = memref.load %arg4[%c49_480] : memref<72xf32, #tpu.memory_space<smem>>
    %903 = vector.broadcast %902 : f32 to vector<2x256xf32>
    %904 = arith.mulf %903, %897 : vector<2x256xf32>
    %905 = arith.addf %610, %904 : vector<2x256xf32>
    %c50_481 = arith.constant 50 : index
    %906 = memref.load %arg4[%c50_481] : memref<72xf32, #tpu.memory_space<smem>>
    %907 = vector.broadcast %906 : f32 to vector<2x256xf32>
    %908 = arith.mulf %907, %897 : vector<2x256xf32>
    %909 = arith.addf %613, %908 : vector<2x256xf32>
    %c51_482 = arith.constant 51 : index
    %910 = memref.load %arg4[%c51_482] : memref<72xf32, #tpu.memory_space<smem>>
    %911 = vector.broadcast %910 : f32 to vector<2x256xf32>
    %912 = arith.mulf %911, %897 : vector<2x256xf32>
    %913 = arith.addf %616, %912 : vector<2x256xf32>
    %c0_483 = arith.constant 0 : index
    %c1_484 = arith.constant 1 : index
    %c143_485 = arith.constant 143 : index
    %914 = vector.load %arg8[%c0_483, %c1_484, %c143_485] : memref<2x2x512xf32, #tpu.memory_space<vmem>>, vector<2x1x256xf32>
    %915 = vector.shape_cast %914 : vector<2x1x256xf32> to vector<2x256xf32>
    %c0_486 = arith.constant 0 : index
    %c1_487 = arith.constant 1 : index
    %c145_488 = arith.constant 145 : index
    %916 = vector.load %arg8[%c0_486, %c1_487, %c145_488] : memref<2x2x512xf32, #tpu.memory_space<vmem>>, vector<2x1x256xf32>
    %917 = vector.shape_cast %916 : vector<2x1x256xf32> to vector<2x256xf32>
    %918 = arith.select %22, %917, %915 : vector<2x256xi1>, vector<2x256xf32>
    %c0_489 = arith.constant 0 : index
    %c1_490 = arith.constant 1 : index
    %c111_491 = arith.constant 111 : index
    %919 = vector.load %arg8[%c0_489, %c1_490, %c111_491] : memref<2x2x512xf32, #tpu.memory_space<vmem>>, vector<2x1x256xf32>
    %920 = vector.shape_cast %919 : vector<2x1x256xf32> to vector<2x256xf32>
    %c0_492 = arith.constant 0 : index
    %c1_493 = arith.constant 1 : index
    %c113_494 = arith.constant 113 : index
    %921 = vector.load %arg8[%c0_492, %c1_493, %c113_494] : memref<2x2x512xf32, #tpu.memory_space<vmem>>, vector<2x1x256xf32>
    %922 = vector.shape_cast %921 : vector<2x1x256xf32> to vector<2x256xf32>
    %923 = arith.select %22, %922, %920 : vector<2x256xi1>, vector<2x256xf32>
    %924 = arith.select %20, %923, %918 : vector<2x256xi1>, vector<2x256xf32>
    %c52_495 = arith.constant 52 : index
    %925 = memref.load %arg4[%c52_495] : memref<72xf32, #tpu.memory_space<smem>>
    %926 = vector.broadcast %925 : f32 to vector<2x256xf32>
    %927 = arith.mulf %926, %924 : vector<2x256xf32>
    %928 = arith.addf %901, %927 : vector<2x256xf32>
    %c53_496 = arith.constant 53 : index
    %929 = memref.load %arg4[%c53_496] : memref<72xf32, #tpu.memory_space<smem>>
    %930 = vector.broadcast %929 : f32 to vector<2x256xf32>
    %931 = arith.mulf %930, %924 : vector<2x256xf32>
    %932 = arith.addf %905, %931 : vector<2x256xf32>
    %c54_497 = arith.constant 54 : index
    %933 = memref.load %arg4[%c54_497] : memref<72xf32, #tpu.memory_space<smem>>
    %934 = vector.broadcast %933 : f32 to vector<2x256xf32>
    %935 = arith.mulf %934, %924 : vector<2x256xf32>
    %936 = arith.addf %909, %935 : vector<2x256xf32>
    %c55_498 = arith.constant 55 : index
    %937 = memref.load %arg4[%c55_498] : memref<72xf32, #tpu.memory_space<smem>>
    %938 = vector.broadcast %937 : f32 to vector<2x256xf32>
    %939 = arith.mulf %938, %924 : vector<2x256xf32>
    %940 = arith.addf %913, %939 : vector<2x256xf32>
    %c0_499 = arith.constant 0 : index
    %c0_500 = arith.constant 0 : index
    %c144_501 = arith.constant 144 : index
    %941 = vector.load %arg8[%c0_499, %c0_500, %c144_501] : memref<2x2x512xf32, #tpu.memory_space<vmem>>, vector<2x1x256xf32>
    %942 = vector.shape_cast %941 : vector<2x1x256xf32> to vector<2x256xf32>
    %c0_502 = arith.constant 0 : index
    %c0_503 = arith.constant 0 : index
    %c112_504 = arith.constant 112 : index
    %943 = vector.load %arg8[%c0_502, %c0_503, %c112_504] : memref<2x2x512xf32, #tpu.memory_space<vmem>>, vector<2x1x256xf32>
    %944 = vector.shape_cast %943 : vector<2x1x256xf32> to vector<2x256xf32>
    %945 = arith.select %20, %944, %942 : vector<2x256xi1>, vector<2x256xf32>
    %c56_505 = arith.constant 56 : index
    %946 = memref.load %arg4[%c56_505] : memref<72xf32, #tpu.memory_space<smem>>
    %947 = vector.broadcast %946 : f32 to vector<2x256xf32>
    %948 = arith.mulf %947, %945 : vector<2x256xf32>
    %949 = arith.addf %928, %948 : vector<2x256xf32>
    %c57_506 = arith.constant 57 : index
    %950 = memref.load %arg4[%c57_506] : memref<72xf32, #tpu.memory_space<smem>>
    %951 = vector.broadcast %950 : f32 to vector<2x256xf32>
    %952 = arith.mulf %951, %945 : vector<2x256xf32>
    %953 = arith.addf %932, %952 : vector<2x256xf32>
    %c58_507 = arith.constant 58 : index
    %954 = memref.load %arg4[%c58_507] : memref<72xf32, #tpu.memory_space<smem>>
    %955 = vector.broadcast %954 : f32 to vector<2x256xf32>
    %956 = arith.mulf %955, %945 : vector<2x256xf32>
    %957 = arith.addf %936, %956 : vector<2x256xf32>
    %c59_508 = arith.constant 59 : index
    %958 = memref.load %arg4[%c59_508] : memref<72xf32, #tpu.memory_space<smem>>
    %959 = vector.broadcast %958 : f32 to vector<2x256xf32>
    %960 = arith.mulf %959, %945 : vector<2x256xf32>
    %961 = arith.addf %940, %960 : vector<2x256xf32>
    %c0_509 = arith.constant 0 : index
    %c1_510 = arith.constant 1 : index
    %c144_511 = arith.constant 144 : index
    %962 = vector.load %arg8[%c0_509, %c1_510, %c144_511] : memref<2x2x512xf32, #tpu.memory_space<vmem>>, vector<2x1x256xf32>
    %963 = vector.shape_cast %962 : vector<2x1x256xf32> to vector<2x256xf32>
    %c0_512 = arith.constant 0 : index
    %c1_513 = arith.constant 1 : index
    %c112_514 = arith.constant 112 : index
    %964 = vector.load %arg8[%c0_512, %c1_513, %c112_514] : memref<2x2x512xf32, #tpu.memory_space<vmem>>, vector<2x1x256xf32>
    %965 = vector.shape_cast %964 : vector<2x1x256xf32> to vector<2x256xf32>
    %966 = arith.select %20, %965, %963 : vector<2x256xi1>, vector<2x256xf32>
    %c60_515 = arith.constant 60 : index
    %967 = memref.load %arg4[%c60_515] : memref<72xf32, #tpu.memory_space<smem>>
    %968 = vector.broadcast %967 : f32 to vector<2x256xf32>
    %969 = arith.mulf %968, %966 : vector<2x256xf32>
    %970 = arith.addf %949, %969 : vector<2x256xf32>
    %c61_516 = arith.constant 61 : index
    %971 = memref.load %arg4[%c61_516] : memref<72xf32, #tpu.memory_space<smem>>
    %972 = vector.broadcast %971 : f32 to vector<2x256xf32>
    %973 = arith.mulf %972, %966 : vector<2x256xf32>
    %974 = arith.addf %953, %973 : vector<2x256xf32>
    %c62_517 = arith.constant 62 : index
    %975 = memref.load %arg4[%c62_517] : memref<72xf32, #tpu.memory_space<smem>>
    %976 = vector.broadcast %975 : f32 to vector<2x256xf32>
    %977 = arith.mulf %976, %966 : vector<2x256xf32>
    %978 = arith.addf %957, %977 : vector<2x256xf32>
    %c63_518 = arith.constant 63 : index
    %979 = memref.load %arg4[%c63_518] : memref<72xf32, #tpu.memory_space<smem>>
    %980 = vector.broadcast %979 : f32 to vector<2x256xf32>
    %981 = arith.mulf %980, %966 : vector<2x256xf32>
    %982 = arith.addf %961, %981 : vector<2x256xf32>
    %c0_519 = arith.constant 0 : index
    %c0_520 = arith.constant 0 : index
    %c145_521 = arith.constant 145 : index
    %983 = vector.load %arg8[%c0_519, %c0_520, %c145_521] : memref<2x2x512xf32, #tpu.memory_space<vmem>>, vector<2x1x256xf32>
    %984 = vector.shape_cast %983 : vector<2x1x256xf32> to vector<2x256xf32>
    %c0_522 = arith.constant 0 : index
    %c0_523 = arith.constant 0 : index
    %c143_524 = arith.constant 143 : index
    %985 = vector.load %arg8[%c0_522, %c0_523, %c143_524] : memref<2x2x512xf32, #tpu.memory_space<vmem>>, vector<2x1x256xf32>
    %986 = vector.shape_cast %985 : vector<2x1x256xf32> to vector<2x256xf32>
    %987 = arith.select %24, %986, %984 : vector<2x256xi1>, vector<2x256xf32>
    %c0_525 = arith.constant 0 : index
    %c0_526 = arith.constant 0 : index
    %c113_527 = arith.constant 113 : index
    %988 = vector.load %arg8[%c0_525, %c0_526, %c113_527] : memref<2x2x512xf32, #tpu.memory_space<vmem>>, vector<2x1x256xf32>
    %989 = vector.shape_cast %988 : vector<2x1x256xf32> to vector<2x256xf32>
    %c0_528 = arith.constant 0 : index
    %c0_529 = arith.constant 0 : index
    %c111_530 = arith.constant 111 : index
    %990 = vector.load %arg8[%c0_528, %c0_529, %c111_530] : memref<2x2x512xf32, #tpu.memory_space<vmem>>, vector<2x1x256xf32>
    %991 = vector.shape_cast %990 : vector<2x1x256xf32> to vector<2x256xf32>
    %992 = arith.select %24, %991, %989 : vector<2x256xi1>, vector<2x256xf32>
    %993 = arith.select %20, %992, %987 : vector<2x256xi1>, vector<2x256xf32>
    %c64_531 = arith.constant 64 : index
    %994 = memref.load %arg4[%c64_531] : memref<72xf32, #tpu.memory_space<smem>>
    %995 = vector.broadcast %994 : f32 to vector<2x256xf32>
    %996 = arith.mulf %995, %993 : vector<2x256xf32>
    %997 = arith.addf %970, %996 : vector<2x256xf32>
    %c65_532 = arith.constant 65 : index
    %998 = memref.load %arg4[%c65_532] : memref<72xf32, #tpu.memory_space<smem>>
    %999 = vector.broadcast %998 : f32 to vector<2x256xf32>
    %1000 = arith.mulf %999, %993 : vector<2x256xf32>
    %1001 = arith.addf %974, %1000 : vector<2x256xf32>
    %c66_533 = arith.constant 66 : index
    %1002 = memref.load %arg4[%c66_533] : memref<72xf32, #tpu.memory_space<smem>>
    %1003 = vector.broadcast %1002 : f32 to vector<2x256xf32>
    %1004 = arith.mulf %1003, %993 : vector<2x256xf32>
    %1005 = arith.addf %978, %1004 : vector<2x256xf32>
    %c67_534 = arith.constant 67 : index
    %1006 = memref.load %arg4[%c67_534] : memref<72xf32, #tpu.memory_space<smem>>
    %1007 = vector.broadcast %1006 : f32 to vector<2x256xf32>
    %1008 = arith.mulf %1007, %993 : vector<2x256xf32>
    %1009 = arith.addf %982, %1008 : vector<2x256xf32>
    %c0_535 = arith.constant 0 : index
    %c1_536 = arith.constant 1 : index
    %c145_537 = arith.constant 145 : index
    %1010 = vector.load %arg8[%c0_535, %c1_536, %c145_537] : memref<2x2x512xf32, #tpu.memory_space<vmem>>, vector<2x1x256xf32>
    %1011 = vector.shape_cast %1010 : vector<2x1x256xf32> to vector<2x256xf32>
    %c0_538 = arith.constant 0 : index
    %c1_539 = arith.constant 1 : index
    %c143_540 = arith.constant 143 : index
    %1012 = vector.load %arg8[%c0_538, %c1_539, %c143_540] : memref<2x2x512xf32, #tpu.memory_space<vmem>>, vector<2x1x256xf32>
    %1013 = vector.shape_cast %1012 : vector<2x1x256xf32> to vector<2x256xf32>
    %1014 = arith.select %24, %1013, %1011 : vector<2x256xi1>, vector<2x256xf32>
    %c0_541 = arith.constant 0 : index
    %c1_542 = arith.constant 1 : index
    %c113_543 = arith.constant 113 : index
    %1015 = vector.load %arg8[%c0_541, %c1_542, %c113_543] : memref<2x2x512xf32, #tpu.memory_space<vmem>>, vector<2x1x256xf32>
    %1016 = vector.shape_cast %1015 : vector<2x1x256xf32> to vector<2x256xf32>
    %c0_544 = arith.constant 0 : index
    %c1_545 = arith.constant 1 : index
    %c111_546 = arith.constant 111 : index
    %1017 = vector.load %arg8[%c0_544, %c1_545, %c111_546] : memref<2x2x512xf32, #tpu.memory_space<vmem>>, vector<2x1x256xf32>
    %1018 = vector.shape_cast %1017 : vector<2x1x256xf32> to vector<2x256xf32>
    %1019 = arith.select %24, %1018, %1016 : vector<2x256xi1>, vector<2x256xf32>
    %1020 = arith.select %20, %1019, %1014 : vector<2x256xi1>, vector<2x256xf32>
    %c68_547 = arith.constant 68 : index
    %1021 = memref.load %arg4[%c68_547] : memref<72xf32, #tpu.memory_space<smem>>
    %1022 = vector.broadcast %1021 : f32 to vector<2x256xf32>
    %1023 = arith.mulf %1022, %1020 : vector<2x256xf32>
    %1024 = arith.addf %997, %1023 : vector<2x256xf32>
    %c69_548 = arith.constant 69 : index
    %1025 = memref.load %arg4[%c69_548] : memref<72xf32, #tpu.memory_space<smem>>
    %1026 = vector.broadcast %1025 : f32 to vector<2x256xf32>
    %1027 = arith.mulf %1026, %1020 : vector<2x256xf32>
    %1028 = arith.addf %1001, %1027 : vector<2x256xf32>
    %c70_549 = arith.constant 70 : index
    %1029 = memref.load %arg4[%c70_549] : memref<72xf32, #tpu.memory_space<smem>>
    %1030 = vector.broadcast %1029 : f32 to vector<2x256xf32>
    %1031 = arith.mulf %1030, %1020 : vector<2x256xf32>
    %1032 = arith.addf %1005, %1031 : vector<2x256xf32>
    %c71_550 = arith.constant 71 : index
    %1033 = memref.load %arg4[%c71_550] : memref<72xf32, #tpu.memory_space<smem>>
    %1034 = vector.broadcast %1033 : f32 to vector<2x256xf32>
    %1035 = arith.mulf %1034, %1020 : vector<2x256xf32>
    %1036 = arith.addf %1009, %1035 : vector<2x256xf32>
    %1037 = arith.addf %754, %874 : vector<2x256xf32>
    %1038 = arith.addf %1037, %1024 : vector<2x256xf32>
    %c0_551 = arith.constant 0 : index
    %1039 = memref.load %arg5[%c0_551] : memref<4xf32, #tpu.memory_space<smem>>
    %1040 = vector.broadcast %1039 : f32 to vector<2x256xf32>
    %1041 = arith.addf %1038, %1040 : vector<2x256xf32>
    %cst_552 = arith.constant 0.000000e+00 : f32
    %1042 = vector.broadcast %cst_552 : f32 to vector<2x256xf32>
    %1043 = arith.maximumf %1041, %1042 : vector<2x256xf32>
    %c0_553 = arith.constant 0 : index
    %c0_554 = arith.constant 0 : index
    %c0_555 = arith.constant 0 : index
    %1044 = vector.load %arg1[%c0_553, %c0_554, %c0_555] : memref<2x4x256xf32, #tpu.memory_space<vmem>>, vector<2x1x256xf32>
    %1045 = vector.shape_cast %1044 : vector<2x1x256xf32> to vector<2x256xf32>
    %1046 = arith.addf %1043, %1045 : vector<2x256xf32>
    %c0_556 = arith.constant 0 : index
    %c0_557 = arith.constant 0 : index
    %c0_558 = arith.constant 0 : index
    %1047 = vector.load %arg6[%c0_556, %c0_557, %c0_558] : memref<2x4x256xf32, #tpu.memory_space<vmem>>, vector<2x1x256xf32>
    %1048 = vector.shape_cast %1047 : vector<2x1x256xf32> to vector<2x256xf32>
    %1049 = vector.shape_cast %1046 : vector<2x256xf32> to vector<2x1x256xf32>
    tpu.vector_store %arg6[%c0_556, %c0_557, %c0_558], %1049 {strides = array<i32>} : memref<2x4x256xf32, #tpu.memory_space<vmem>>, vector<2x1x256xf32>,
    %1050 = arith.addf %758, %878 : vector<2x256xf32>
    %1051 = arith.addf %1050, %1028 : vector<2x256xf32>
    %c1_559 = arith.constant 1 : index
    %1052 = memref.load %arg5[%c1_559] : memref<4xf32, #tpu.memory_space<smem>>
    %1053 = vector.broadcast %1052 : f32 to vector<2x256xf32>
    %1054 = arith.addf %1051, %1053 : vector<2x256xf32>
    %cst_560 = arith.constant 0.000000e+00 : f32
    %1055 = vector.broadcast %cst_560 : f32 to vector<2x256xf32>
    %1056 = arith.maximumf %1054, %1055 : vector<2x256xf32>
    %c0_561 = arith.constant 0 : index
    %c1_562 = arith.constant 1 : index
    %c0_563 = arith.constant 0 : index
    %1057 = vector.load %arg1[%c0_561, %c1_562, %c0_563] : memref<2x4x256xf32, #tpu.memory_space<vmem>>, vector<2x1x256xf32>
    %1058 = vector.shape_cast %1057 : vector<2x1x256xf32> to vector<2x256xf32>
    %1059 = arith.addf %1056, %1058 : vector<2x256xf32>
    %c0_564 = arith.constant 0 : index
    %c1_565 = arith.constant 1 : index
    %c0_566 = arith.constant 0 : index
    %1060 = vector.load %arg6[%c0_564, %c1_565, %c0_566] : memref<2x4x256xf32, #tpu.memory_space<vmem>>, vector<2x1x256xf32>
    %1061 = vector.shape_cast %1060 : vector<2x1x256xf32> to vector<2x256xf32>
    %1062 = vector.shape_cast %1059 : vector<2x256xf32> to vector<2x1x256xf32>
    tpu.vector_store %arg6[%c0_564, %c1_565, %c0_566], %1062 {strides = array<i32>} : memref<2x4x256xf32, #tpu.memory_space<vmem>>, vector<2x1x256xf32>,
    %1063 = arith.addf %762, %882 : vector<2x256xf32>
    %1064 = arith.addf %1063, %1032 : vector<2x256xf32>
    %c2_567 = arith.constant 2 : index
    %1065 = memref.load %arg5[%c2_567] : memref<4xf32, #tpu.memory_space<smem>>
    %1066 = vector.broadcast %1065 : f32 to vector<2x256xf32>
    %1067 = arith.addf %1064, %1066 : vector<2x256xf32>
    %cst_568 = arith.constant 0.000000e+00 : f32
    %1068 = vector.broadcast %cst_568 : f32 to vector<2x256xf32>
    %1069 = arith.maximumf %1067, %1068 : vector<2x256xf32>
    %c0_569 = arith.constant 0 : index
    %c2_570 = arith.constant 2 : index
    %c0_571 = arith.constant 0 : index
    %1070 = vector.load %arg1[%c0_569, %c2_570, %c0_571] : memref<2x4x256xf32, #tpu.memory_space<vmem>>, vector<2x1x256xf32>
    %1071 = vector.shape_cast %1070 : vector<2x1x256xf32> to vector<2x256xf32>
    %1072 = arith.addf %1069, %1071 : vector<2x256xf32>
    %c0_572 = arith.constant 0 : index
    %c2_573 = arith.constant 2 : index
    %c0_574 = arith.constant 0 : index
    %1073 = vector.load %arg6[%c0_572, %c2_573, %c0_574] : memref<2x4x256xf32, #tpu.memory_space<vmem>>, vector<2x1x256xf32>
    %1074 = vector.shape_cast %1073 : vector<2x1x256xf32> to vector<2x256xf32>
    %1075 = vector.shape_cast %1072 : vector<2x256xf32> to vector<2x1x256xf32>
    tpu.vector_store %arg6[%c0_572, %c2_573, %c0_574], %1075 {strides = array<i32>} : memref<2x4x256xf32, #tpu.memory_space<vmem>>, vector<2x1x256xf32>,
    %1076 = arith.addf %766, %886 : vector<2x256xf32>
    %1077 = arith.addf %1076, %1036 : vector<2x256xf32>
    %c3_575 = arith.constant 3 : index
    %1078 = memref.load %arg5[%c3_575] : memref<4xf32, #tpu.memory_space<smem>>
    %1079 = vector.broadcast %1078 : f32 to vector<2x256xf32>
    %1080 = arith.addf %1077, %1079 : vector<2x256xf32>
    %cst_576 = arith.constant 0.000000e+00 : f32
    %1081 = vector.broadcast %cst_576 : f32 to vector<2x256xf32>
    %1082 = arith.maximumf %1080, %1081 : vector<2x256xf32>
    %c0_577 = arith.constant 0 : index
    %c3_578 = arith.constant 3 : index
    %c0_579 = arith.constant 0 : index
    %1083 = vector.load %arg1[%c0_577, %c3_578, %c0_579] : memref<2x4x256xf32, #tpu.memory_space<vmem>>, vector<2x1x256xf32>
    %1084 = vector.shape_cast %1083 : vector<2x1x256xf32> to vector<2x256xf32>
    %1085 = arith.addf %1082, %1084 : vector<2x256xf32>
    %c0_580 = arith.constant 0 : index
    %c3_581 = arith.constant 3 : index
    %c0_582 = arith.constant 0 : index
    %1086 = vector.load %arg6[%c0_580, %c3_581, %c0_582] : memref<2x4x256xf32, #tpu.memory_space<vmem>>, vector<2x1x256xf32>
    %1087 = vector.shape_cast %1086 : vector<2x1x256xf32> to vector<2x256xf32>
    %1088 = vector.shape_cast %1085 : vector<2x256xf32> to vector<2x1x256xf32>
    tpu.vector_store %arg6[%c0_580, %c3_581, %c0_582], %1088 {strides = array<i32>} : memref<2x4x256xf32, #tpu.memory_space<vmem>>, vector<2x1x256xf32>,
    return
  }
  func.func @transform_0(%arg0: i32) -> (i32, i32, i32) {
    %c0_i32 = arith.constant 0 : i32
    %c0_i32_0 = arith.constant 0 : i32
    %c0_i32_1 = arith.constant 0 : i32
    return %arg0, %c0_i32, %c0_i32_0 : i32, i32, i32
  }
  func.func @transform_1(%arg0: i32) -> i32 {
    %c0_i32 = arith.constant 0 : i32
    %c0_i32_0 = arith.constant 0 : i32
    return %c0_i32 : i32
  }
  func.func @transform_2(%arg0: i32) -> i32 {
    %c0_i32 = arith.constant 0 : i32
    %c0_i32_0 = arith.constant 0 : i32
    return %c0_i32 : i32
  }
  func.func @transform_3(%arg0: i32) -> i32 {
    %c0_i32 = arith.constant 0 : i32
    %c0_i32_0 = arith.constant 0 : i32
    return %c0_i32 : i32
  }
  func.func @transform_4(%arg0: i32) -> i32 {
    %c0_i32 = arith.constant 0 : i32
    %c0_i32_0 = arith.constant 0 : i32
    return %c0_i32 : i32
  }
  func.func @transform_5(%arg0: i32) -> (i32, i32, i32) {
    %c0_i32 = arith.constant 0 : i32
    %c0_i32_0 = arith.constant 0 : i32
    %c0_i32_1 = arith.constant 0 : i32
    return %arg0, %c0_i32, %c0_i32_0 : i32, i32, i32
  }
}

</mosaic_0001>

<llo_original>
// kernel: tpu_custom_call.1
$region0: #{tpu_custom_call.1}
  #allocation0 [shape = 'u32[]', space=smem, size = 0x4, offset = 0x4, fixed_abs, tag = 'smem constant byte address 0x4 - core index']
  #allocation1 [shape = 'u32[72,128]{1,0:T(1,128)}', space=vmem, size = 0x9000, scoped, tag = 'internal scratch']
  #allocation2 [shape = 'f32[2,4,512]{2,1,0:T(4,128)}', space=vmem, size = 0x4000, scoped, tag = 'scratch operand']
  #allocation3 [shape = 'f32[2,2,512]{2,1,0:T(2,128)}', space=vmem, size = 0x2000, scoped, tag = 'scratch operand']
  %s0 = inlined_call_operand.hbm [shape: f32[2,4,256], index: 0, kind: input, shape index: {}]
  %s1 = inlined_call_operand.hbm [shape: f32[72], index: 1, kind: input, shape index: {}]
  %s2 = inlined_call_operand.vmem [shape: f32[2], index: 2, kind: input, shape index: {}]
  %s3 = inlined_call_operand.vmem [shape: f32[72], index: 3, kind: input, shape index: {}]
  %s4 = inlined_call_operand.vmem [shape: f32[4], index: 4, kind: input, shape index: {}]
  %s5 = inlined_call_operand.hbm [shape: f32[2,4,256], index: 5, kind: output, shape index: {}]
  %s6 = sld [smem:[#allocation0]]
  $region50: #{tpu_custom_call.1} parent=0
    _
  %s8 = ssub.s32 1, %s6
  %s9 = scalar_select 0, %s8, %s6
  $region1: #{tpu_custom_call.1} parent=0
    #allocation4 [shape = 'u8[8192]{0}', space=vmem, size = 0x2000, scoped, tag = 'input window, operand 0, single buffered']
    #allocation5 [shape = 's32[1]{0}', space=sflag, size = 0x4, scoped, tag = 'scoped memory for tpu_custom_call.1']
    #allocation6 [shape = 's32[1]{0}', space=sflag, size = 0x4, scoped, tag = 'scoped memory for tpu_custom_call.1']
    #allocation7 [shape = 's32[1]{0}', space=sflag, size = 0x4, scoped, tag = 'scoped memory for tpu_custom_call.1']
    #allocation8 [shape = 's32[1]{0}', space=sflag, size = 0x4, scoped, tag = 'scoped memory for tpu_custom_call.1']
    #allocation9 [shape = 'u8[512]{0}', space=smem, size = 0x200, scoped, tag = 'input window, operand 1, single buffered']
    #allocation10 [shape = 'u8[512]{0}', space=smem, size = 0x200, scoped, tag = 'input window, operand 2, single buffered']
    #allocation11 [shape = 'u8[512]{0}', space=smem, size = 0x200, scoped, tag = 'input window, operand 3, single buffered']
    #allocation12 [shape = 's32[1]{0}', space=sflag, size = 0x4, scoped, tag = 'scoped memory for tpu_custom_call.1']
    #allocation13 [shape = 'u8[512]{0}', space=smem, size = 0x200, scoped, tag = 'input window, operand 4, single buffered']
    #allocation14 [shape = 'u8[8192]{0}', space=vmem, size = 0x2000, scoped, tag = 'output window, operand 0, single buffered']
    %10 = vsyncpa [#allocation5], 0
    %11 = vsyncpa [#allocation7], 0
    %12 = vsyncpa [#allocation8], 0
    %13 = vsyncpa [#allocation12], 0
    %14 = vsyncpa [#allocation6], 0
    // Predicated region
    $region2: #{tpu_custom_call.1} parent=1 // pred_check
      _
    $region3: #{tpu_custom_call.1} parent=1 // pred_check_branch
      %16 = sbr.rel (0) target = $region5
    $region4: #{tpu_custom_call.1} parent=1 // pred_region
      %18 = vsyncadd [#allocation5], 0
      %s19 = sshll.u32 %s0, 4
      %s20 = int_to_ptr.hbm [resolvable:$true] %s19
      %s21 = sshll.u32 [#allocation4], 4
      %s22 = int_to_ptr.vmem [resolvable:$true] %s21
      %27 = dma.hbm_to_vmem [thread:$0]  %s20, 256, %s22, [#allocation5], 128, 128, 8
    $region5: #{tpu_custom_call.1} parent=1 // pred_fallthru
      _
    // Predicated region
    $region6: #{tpu_custom_call.1} parent=1 // pred_check
      _
    $region7: #{tpu_custom_call.1} parent=1 // pred_check_branch
      %29 = sbr.rel (0) target = $region9
    $region8: #{tpu_custom_call.1} parent=1 // pred_region
      %31 = vsyncadd [#allocation7], 0
      %s33 = sshll.u32 %s1, 4
      %s34 = int_to_ptr.hbm [resolvable:$true] %s33
      %36 = dma.hbm_to_smem %s34, 16, [#allocation9], [#allocation7]
    $region9: #{tpu_custom_call.1} parent=1 // pred_fallthru
      _
    // Predicated region
    $region10: #{tpu_custom_call.1} parent=1 // pred_check
      _
    $region11: #{tpu_custom_call.1} parent=1 // pred_check_branch
      %38 = sbr.rel (0) target = $region13
    $region12: #{tpu_custom_call.1} parent=1 // pred_region
      %40 = vsyncadd [#allocation8], 0
      %s42 = sshll.u32 %s2, 4
      %s43 = int_to_ptr.vmem [resolvable:$true] %s42
      %45 = dma.vmem_to_smem %s43, 16, [#allocation10], [#allocation8]
    $region13: #{tpu_custom_call.1} parent=1 // pred_fallthru
      _
    // Predicated region
    $region14: #{tpu_custom_call.1} parent=1 // pred_check
      _
    $region15: #{tpu_custom_call.1} parent=1 // pred_check_branch
      %47 = sbr.rel (0) target = $region17
    $region16: #{tpu_custom_call.1} parent=1 // pred_region
      %49 = vsyncadd [#allocation12], 0
      %s51 = sshll.u32 %s3, 4
      %s52 = int_to_ptr.vmem [resolvable:$true] %s51
      %54 = dma.vmem_to_smem %s52, 16, [#allocation11], [#allocation12]
    $region17: #{tpu_custom_call.1} parent=1 // pred_fallthru
      _
    // Predicated region
    $region18: #{tpu_custom_call.1} parent=1 // pred_check
      _
    $region19: #{tpu_custom_call.1} parent=1 // pred_check_branch
      %56 = sbr.rel (0) target = $region21
    $region20: #{tpu_custom_call.1} parent=1 // pred_region
      %58 = vsyncadd [#allocation12], 0
      %s60 = sshll.u32 %s4, 4
      %s61 = int_to_ptr.vmem [resolvable:$true] %s60
      %63 = dma.vmem_to_smem %s61, 16, [#allocation13], [#allocation12]
    $region21: #{tpu_custom_call.1} parent=1 // pred_fallthru
      _
    // Predicated region
    $region22: #{tpu_custom_call.1} parent=1 // pred_check
      _
    $region23: #{tpu_custom_call.1} parent=1 // pred_check_branch
      %65 = sbr.rel (0) target = $region25
    $region24: #{tpu_custom_call.1} parent=1 // pred_region
      %67 = dma.done [#allocation5], 256
    $region25: #{tpu_custom_call.1} parent=1 // pred_fallthru
      _
    // Predicated region
    $region26: #{tpu_custom_call.1} parent=1 // pred_check
      _
    $region27: #{tpu_custom_call.1} parent=1 // pred_check_branch
      %69 = sbr.rel (0) target = $region29
    $region28: #{tpu_custom_call.1} parent=1 // pred_region
      %71 = dma.done [#allocation7], 16
    $region29: #{tpu_custom_call.1} parent=1 // pred_fallthru
      _
    // Predicated region
    $region30: #{tpu_custom_call.1} parent=1 // pred_check
      _
    $region31: #{tpu_custom_call.1} parent=1 // pred_check_branch
      %73 = sbr.rel (0) target = $region33
    $region32: #{tpu_custom_call.1} parent=1 // pred_region
      %75 = dma.done [#allocation8], 16
    $region33: #{tpu_custom_call.1} parent=1 // pred_fallthru
      _
    // Predicated region
    $region34: #{tpu_custom_call.1} parent=1 // pred_check
      _
    $region35: #{tpu_custom_call.1} parent=1 // pred_check_branch
      %77 = sbr.rel (0) target = $region37
    $region36: #{tpu_custom_call.1} parent=1 // pred_region
      %79 = dma.done [#allocation12], 16
    $region37: #{tpu_custom_call.1} parent=1 // pred_fallthru
      _
    // Predicated region
    $region38: #{tpu_custom_call.1} parent=1 // pred_check
      _
    $region39: #{tpu_custom_call.1} parent=1 // pred_check_branch
      %81 = sbr.rel (0) target = $region41
    $region40: #{tpu_custom_call.1} parent=1 // pred_region
      %83 = dma.done [#allocation12], 16
    $region41: #{tpu_custom_call.1} parent=1 // pred_fallthru
      _
    %84 = sfence
    %v85 = vlaneseq
    %v86 = vand.u32 %v85, 127
    %v87 = vadd.s32 %v86, 128
    %vm88 = vcmp.lt.s32.totalorder %v86, 0
    %v89 = vsub.s32 0, %v86
    %v90 = vsel %vm88, %v89, %v86
    %v91 = vshrl.u32 %v90, 4
    %v92 = vand.u32 %v90, 15
    %v93 = vsub.s32 0, %v92
    %v94 = vsel %vm88, %v93, %v92
    %vm95 = vcmp.lt.s32.totalorder %v87, 0
    %v96 = vsub.s32 0, %v87
    %v97 = vsel %vm95, %v96, %v87
    %v98 = vshrl.u32 %v97, 4
    %v99 = vand.u32 %v97, 15
    %v100 = vsub.s32 0, %v99
    %v101 = vsel %vm95, %v100, %v99
    %vm102 = vcmp.ne.s32.totalorder %v94, 0
    %vm103 = vcmp.ne.s32.totalorder %v101, 0
    %vm104 = vcmp.lt.s32.totalorder %v94, 0
    %vm105 = vcmp.lt.s32.totalorder %v101, 0
    %vm106 = vmand %vm104, %vm102
    %vm107 = vmand %vm105, %vm103
    %v108 = vadd.s32 %v94, 16
    %v109 = vadd.s32 %v101, 16
    %v110 = vsel %vm106, %v108, %v94
    %v111 = vsel %vm107, %v109, %v101
    %vm112 = vcmp.lt.s32.totalorder %v86, 16
    %vm113 = vcmp.lt.s32.totalorder %v87, 16
    %vm114 = vcmp.ge.s32.totalorder %v86, 240
    %vm115 = vcmp.ge.s32.totalorder %v87, 240
    %vm116 = vcmp.eq.s32.totalorder %v110, 0
    %vm117 = vcmp.eq.s32.totalorder %v111, 0
    %vm118 = vcmp.eq.s32.totalorder %v110, 15
    %vm119 = vcmp.eq.s32.totalorder %v111, 15
    %v120 = vld [vmem:[#allocation4] sm:$0xff]
    %v121 = vld [vmem:[#allocation4 + $0x8] sm:$0xff]
    %122 = vst [vmem:[#allocation2 + $0x4] sm:$0xff] %v120
    %123 = vst [vmem:[#allocation2 + $0x14] sm:$0xff] %v121
    %v124 = vld [vmem:[#allocation2] ss:$4 sm:$0x7]
    %s125 = scalar_lea.vmem [#allocation2], 16
    %v126 = vld [vmem:[%s125] ss:$4 sm:$0x7]
    %129 = vst [vmem:[#allocation1] ss:$9 sm:$0xff] %v124
    %s130 = scalar_lea.vmem [#allocation1], 1
    %131 = vst [vmem:[%s130] ss:$9 sm:$0xff] %v126
    %v132 = vld [vmem:[#allocation1] sm:$0xff]
    %v133 = vld [vmem:[#allocation1 + $0x9] sm:$0xff]
    %v134 = vld [vmem:[#allocation1 + $0x12] sm:$0xff]
    %135 = vrot.lane.b32.xlu0 %v132, 15
    %v136 = vpop.permute.xlu0 %135
    %137 = vrot.lane.b32.xlu0 %v133, 15
    %v138 = vpop.permute.xlu0 %137
    %139 = vrot.lane.b32.xlu0 %v134, 15
    %v140 = vpop.permute.xlu0 %139
    %vm141 = vcmask 121856
    %v142 = vsel %vm141, %v136, %v138
    %v143 = vsel %vm141, %v138, %v140
    %146 = vst [vmem:[#allocation1] ss:$9 sm:$0xff] %v124
    %s147 = scalar_lea.vmem [#allocation1], 1
    %148 = vst [vmem:[%s147] ss:$9 sm:$0xff] %v126
    %v149 = vld [vmem:[#allocation1] sm:$0xff]
    %v150 = vld [vmem:[#allocation1 + $0x9] sm:$0xff]
    %v151 = vld [vmem:[#allocation1 + $0x12] sm:$0xff]
    %152 = vrot.lane.b32.xlu0 %v149, 17
    %v153 = vpop.permute.xlu0 %152
    %154 = vrot.lane.b32.xlu0 %v150, 17
    %v155 = vpop.permute.xlu0 %154
    %156 = vrot.lane.b32.xlu0 %v151, 17
    %v157 = vpop.permute.xlu0 %156
    %vm158 = vcmask 138240
    %v159 = vsel %vm158, %v153, %v155
    %v160 = vsel %vm158, %v155, %v157
    %v163 = vsel %vm116, %v142, %v159
    %v164 = vsel %vm117, %v143, %v160
    %s165 = scalar_lea.vmem [#allocation2], 4
    %v166 = vld [vmem:[%s165] ss:$4 sm:$0x7]
    %s167 = scalar_lea.vmem [#allocation2], 20
    %v168 = vld [vmem:[%s167] ss:$4 sm:$0x7]
    %171 = vst [vmem:[#allocation1] ss:$9 sm:$0xff] %v166
    %s172 = scalar_lea.vmem [#allocation1], 1
    %173 = vst [vmem:[%s172] ss:$9 sm:$0xff] %v168
    %v174 = vld [vmem:[#allocation1] sm:$0xff]
    %v175 = vld [vmem:[#allocation1 + $0x9] sm:$0xff]
    %v176 = vld [vmem:[#allocation1 + $0x12] sm:$0xff]
    %177 = vrot.lane.b32.xlu0 %v174, 111
    %v178 = vpop.permute.xlu0 %177
    %179 = vrot.lane.b32.xlu0 %v175, 111
    %v180 = vpop.permute.xlu0 %179
    %181 = vrot.lane.b32.xlu0 %v176, 111
    %v182 = vpop.permute.xlu0 %181
    %vm183 = vcmask 908288
    %v184 = vsel %vm183, %v178, %v180
    %v185 = vsel %vm183, %v180, %v182
    %188 = vst [vmem:[#allocation1] ss:$9 sm:$0xff] %v166
    %s189 = scalar_lea.vmem [#allocation1], 1
    %190 = vst [vmem:[%s189] ss:$9 sm:$0xff] %v168
    %v191 = vld [vmem:[#allocation1] sm:$0xff]
    %v192 = vld [vmem:[#allocation1 + $0x9] sm:$0xff]
    %v193 = vld [vmem:[#allocation1 + $0x12] sm:$0xff]
    %194 = vrot.lane.b32.xlu0 %v191, 113
    %v195 = vpop.permute.xlu0 %194
    %196 = vrot.lane.b32.xlu0 %v192, 113
    %v197 = vpop.permute.xlu0 %196
    %198 = vrot.lane.b32.xlu0 %v193, 113
    %v199 = vpop.permute.xlu0 %198
    %vm200 = vcmask 924672
    %v201 = vsel %vm200, %v195, %v197
    %v202 = vsel %vm200, %v197, %v199
    %v205 = vsel %vm116, %v184, %v201
    %v206 = vsel %vm117, %v185, %v202
    %v207 = vsel %vm112, %v205, %v163
    %v208 = vsel %vm113, %v206, %v164
    %s209 = sld [smem:[#allocation9]]
    %v210 = vstv %s209
    %v211 = vmul.f32 %v210, %v207
    %v212 = vmul.f32 %v210, %v208
    %v213 = vadd.f32 %v211, 0.0
    %v214 = vadd.f32 %v212, 0.0
    %s215 = sld [smem:[#allocation9 + $0x1]]
    %v216 = vstv %s215
    %v217 = vmul.f32 %v216, %v207
    %v218 = vmul.f32 %v216, %v208
    %v219 = vadd.f32 %v217, 0.0
    %v220 = vadd.f32 %v218, 0.0
    %s221 = scalar_lea.vmem [#allocation2], 1
    %v222 = vld [vmem:[%s221] ss:$4 sm:$0x7]
    %s223 = scalar_lea.vmem [#allocation2], 17
    %v224 = vld [vmem:[%s223] ss:$4 sm:$0x7]
    %227 = vst [vmem:[#allocation1] ss:$9 sm:$0xff] %v222
    %s228 = scalar_lea.vmem [#allocation1], 1
    %229 = vst [vmem:[%s228] ss:$9 sm:$0xff] %v224
    %v230 = vld [vmem:[#allocation1] sm:$0xff]
    %v231 = vld [vmem:[#allocation1 + $0x9] sm:$0xff]
    %v232 = vld [vmem:[#allocation1 + $0x12] sm:$0xff]
    %233 = vrot.lane.b32.xlu0 %v230, 15
    %v234 = vpop.permute.xlu0 %233
    %235 = vrot.lane.b32.xlu0 %v231, 15
    %v236 = vpop.permute.xlu0 %235
    %237 = vrot.lane.b32.xlu0 %v232, 15
    %v238 = vpop.permute.xlu0 %237
    %v239 = vsel %vm141, %v234, %v236
    %v240 = vsel %vm141, %v236, %v238
    %243 = vst [vmem:[#allocation1] ss:$9 sm:$0xff] %v222
    %s244 = scalar_lea.vmem [#allocation1], 1
    %245 = vst [vmem:[%s244] ss:$9 sm:$0xff] %v224
    %v246 = vld [vmem:[#allocation1] sm:$0xff]
    %v247 = vld [vmem:[#allocation1 + $0x9] sm:$0xff]
    %v248 = vld [vmem:[#allocation1 + $0x12] sm:$0xff]
    %249 = vrot.lane.b32.xlu0 %v246, 17
    %v250 = vpop.permute.xlu0 %249
    %251 = vrot.lane.b32.xlu0 %v247, 17
    %v252 = vpop.permute.xlu0 %251
    %253 = vrot.lane.b32.xlu0 %v248, 17
    %v254 = vpop.permute.xlu0 %253
    %v255 = vsel %vm158, %v250, %v252
    %v256 = vsel %vm158, %v252, %v254
    %v259 = vsel %vm116, %v239, %v255
    %v260 = vsel %vm117, %v240, %v256
    %s261 = scalar_lea.vmem [#allocation2], 5
    %v262 = vld [vmem:[%s261] ss:$4 sm:$0x7]
    %s263 = scalar_lea.vmem [#allocation2], 21
    %v264 = vld [vmem:[%s263] ss:$4 sm:$0x7]
    %267 = vst [vmem:[#allocation1] ss:$9 sm:$0xff] %v262
    %s268 = scalar_lea.vmem [#allocation1], 1
    %269 = vst [vmem:[%s268] ss:$9 sm:$0xff] %v264
    %v270 = vld [vmem:[#allocation1] sm:$0xff]
    %v271 = vld [vmem:[#allocation1 + $0x9] sm:$0xff]
    %v272 = vld [vmem:[#allocation1 + $0x12] sm:$0xff]
    %273 = vrot.lane.b32.xlu0 %v270, 111
    %v274 = vpop.permute.xlu0 %273
    %275 = vrot.lane.b32.xlu0 %v271, 111
    %v276 = vpop.permute.xlu0 %275
    %277 = vrot.lane.b32.xlu0 %v272, 111
    %v278 = vpop.permute.xlu0 %277
    %v279 = vsel %vm183, %v274, %v276
    %v280 = vsel %vm183, %v276, %v278
    %283 = vst [vmem:[#allocation1] ss:$9 sm:$0xff] %v262
    %s284 = scalar_lea.vmem [#allocation1], 1
    %285 = vst [vmem:[%s284] ss:$9 sm:$0xff] %v264
    %v286 = vld [vmem:[#allocation1] sm:$0xff]
    %v287 = vld [vmem:[#allocation1 + $0x9] sm:$0xff]
    %v288 = vld [vmem:[#allocation1 + $0x12] sm:$0xff]
    %289 = vrot.lane.b32.xlu0 %v286, 113
    %v290 = vpop.permute.xlu0 %289
    %291 = vrot.lane.b32.xlu0 %v287, 113
    %v292 = vpop.permute.xlu0 %291
    %293 = vrot.lane.b32.xlu0 %v288, 113
    %v294 = vpop.permute.xlu0 %293
    %v295 = vsel %vm200, %v290, %v292
    %v296 = vsel %vm200, %v292, %v294
    %v299 = vsel %vm116, %v279, %v295
    %v300 = vsel %vm117, %v280, %v296
    %v301 = vsel %vm112, %v299, %v259
    %v302 = vsel %vm113, %v300, %v260
    %s303 = sld [smem:[#allocation9 + $0x2]]
    %v304 = vstv %s303
    %v305 = vmul.f32 %v304, %v301
    %v306 = vmul.f32 %v304, %v302
    %v307 = vadd.f32 %v213, %v305
    %v308 = vadd.f32 %v214, %v306
    %s309 = sld [smem:[#allocation9 + $0x3]]
    %v310 = vstv %s309
    %v311 = vmul.f32 %v310, %v301
    %v312 = vmul.f32 %v310, %v302
    %v313 = vadd.f32 %v219, %v311
    %v314 = vadd.f32 %v220, %v312
    %s315 = scalar_lea.vmem [#allocation2], 2
    %v316 = vld [vmem:[%s315] ss:$4 sm:$0x7]
    %s317 = scalar_lea.vmem [#allocation2], 18
    %v318 = vld [vmem:[%s317] ss:$4 sm:$0x7]
    %321 = vst [vmem:[#allocation1] ss:$9 sm:$0xff] %v316
    %s322 = scalar_lea.vmem [#allocation1], 1
    %323 = vst [vmem:[%s322] ss:$9 sm:$0xff] %v318
    %v324 = vld [vmem:[#allocation1] sm:$0xff]
    %v325 = vld [vmem:[#allocation1 + $0x9] sm:$0xff]
    %v326 = vld [vmem:[#allocation1 + $0x12] sm:$0xff]
    %327 = vrot.lane.b32.xlu0 %v324, 15
    %v328 = vpop.permute.xlu0 %327
    %329 = vrot.lane.b32.xlu0 %v325, 15
    %v330 = vpop.permute.xlu0 %329
    %331 = vrot.lane.b32.xlu0 %v326, 15
    %v332 = vpop.permute.xlu0 %331
    %v333 = vsel %vm141, %v328, %v330
    %v334 = vsel %vm141, %v330, %v332
    %337 = vst [vmem:[#allocation1] ss:$9 sm:$0xff] %v316
    %s338 = scalar_lea.vmem [#allocation1], 1
    %339 = vst [vmem:[%s338] ss:$9 sm:$0xff] %v318
    %v340 = vld [vmem:[#allocation1] sm:$0xff]
    %v341 = vld [vmem:[#allocation1 + $0x9] sm:$0xff]
    %v342 = vld [vmem:[#allocation1 + $0x12] sm:$0xff]
    %343 = vrot.lane.b32.xlu0 %v340, 17
    %v344 = vpop.permute.xlu0 %343
    %345 = vrot.lane.b32.xlu0 %v341, 17
    %v346 = vpop.permute.xlu0 %345
    %347 = vrot.lane.b32.xlu0 %v342, 17
    %v348 = vpop.permute.xlu0 %347
    %v349 = vsel %vm158, %v344, %v346
    %v350 = vsel %vm158, %v346, %v348
    %v353 = vsel %vm116, %v333, %v349
    %v354 = vsel %vm117, %v334, %v350
    %s355 = scalar_lea.vmem [#allocation2], 6
    %v356 = vld [vmem:[%s355] ss:$4 sm:$0x7]
    %s357 = scalar_lea.vmem [#allocation2], 22
    %v358 = vld [vmem:[%s357] ss:$4 sm:$0x7]
    %361 = vst [vmem:[#allocation1] ss:$9 sm:$0xff] %v356
    %s362 = scalar_lea.vmem [#allocation1], 1
    %363 = vst [vmem:[%s362] ss:$9 sm:$0xff] %v358
    %v364 = vld [vmem:[#allocation1] sm:$0xff]
    %v365 = vld [vmem:[#allocation1 + $0x9] sm:$0xff]
    %v366 = vld [vmem:[#allocation1 + $0x12] sm:$0xff]
    %367 = vrot.lane.b32.xlu0 %v364, 111
    %v368 = vpop.permute.xlu0 %367
    %369 = vrot.lane.b32.xlu0 %v365, 111
    %v370 = vpop.permute.xlu0 %369
    %371 = vrot.lane.b32.xlu0 %v366, 111
    %v372 = vpop.permute.xlu0 %371
    %v373 = vsel %vm183, %v368, %v370
    %v374 = vsel %vm183, %v370, %v372
    %377 = vst [vmem:[#allocation1] ss:$9 sm:$0xff] %v356
    %s378 = scalar_lea.vmem [#allocation1], 1
    %379 = vst [vmem:[%s378] ss:$9 sm:$0xff] %v358
    %v380 = vld [vmem:[#allocation1] sm:$0xff]
    %v381 = vld [vmem:[#allocation1 + $0x9] sm:$0xff]
    %v382 = vld [vmem:[#allocation1 + $0x12] sm:$0xff]
    %383 = vrot.lane.b32.xlu0 %v380, 113
    %v384 = vpop.permute.xlu0 %383
    %385 = vrot.lane.b32.xlu0 %v381, 113
    %v386 = vpop.permute.xlu0 %385
    %387 = vrot.lane.b32.xlu0 %v382, 113
    %v388 = vpop.permute.xlu0 %387
    %v389 = vsel %vm200, %v384, %v386
    %v390 = vsel %vm200, %v386, %v388
    %v393 = vsel %vm116, %v373, %v389
    %v394 = vsel %vm117, %v374, %v390
    %v395 = vsel %vm112, %v393, %v353
    %v396 = vsel %vm113, %v394, %v354
    %s397 = sld [smem:[#allocation9 + $0x4]]
    %v398 = vstv %s397
    %v399 = vmul.f32 %v398, %v395
    %v400 = vmul.f32 %v398, %v396
    %v401 = vadd.f32 %v307, %v399
    %v402 = vadd.f32 %v308, %v400
    %s403 = sld [smem:[#allocation9 + $0x5]]
    %v404 = vstv %s403
    %v405 = vmul.f32 %v404, %v395
    %v406 = vmul.f32 %v404, %v396
    %v407 = vadd.f32 %v313, %v405
    %v408 = vadd.f32 %v314, %v406
    %s409 = scalar_lea.vmem [#allocation2], 3
    %v410 = vld [vmem:[%s409] ss:$4 sm:$0x7]
    %s411 = scalar_lea.vmem [#allocation2], 19
    %v412 = vld [vmem:[%s411] ss:$4 sm:$0x7]
    %415 = vst [vmem:[#allocation1] ss:$9 sm:$0xff] %v410
    %s416 = scalar_lea.vmem [#allocation1], 1
    %417 = vst [vmem:[%s416] ss:$9 sm:$0xff] %v412
    %v418 = vld [vmem:[#allocation1] sm:$0xff]
    %v419 = vld [vmem:[#allocation1 + $0x9] sm:$0xff]
    %v420 = vld [vmem:[#allocation1 + $0x12] sm:$0xff]
    %421 = vrot.lane.b32.xlu0 %v418, 15
    %v422 = vpop.permute.xlu0 %421
    %423 = vrot.lane.b32.xlu0 %v419, 15
    %v424 = vpop.permute.xlu0 %423
    %425 = vrot.lane.b32.xlu0 %v420, 15
    %v426 = vpop.permute.xlu0 %425
    %v427 = vsel %vm141, %v422, %v424
    %v428 = vsel %vm141, %v424, %v426
    %431 = vst [vmem:[#allocation1] ss:$9 sm:$0xff] %v410
    %s432 = scalar_lea.vmem [#allocation1], 1
    %433 = vst [vmem:[%s432] ss:$9 sm:$0xff] %v412
    %v434 = vld [vmem:[#allocation1] sm:$0xff]
    %v435 = vld [vmem:[#allocation1 + $0x9] sm:$0xff]
    %v436 = vld [vmem:[#allocation1 + $0x12] sm:$0xff]
    %437 = vrot.lane.b32.xlu0 %v434, 17
    %v438 = vpop.permute.xlu0 %437
    %439 = vrot.lane.b32.xlu0 %v435, 17
    %v440 = vpop.permute.xlu0 %439
    %441 = vrot.lane.b32.xlu0 %v436, 17
    %v442 = vpop.permute.xlu0 %441
    %v443 = vsel %vm158, %v438, %v440
    %v444 = vsel %vm158, %v440, %v442
    %v447 = vsel %vm116, %v427, %v443
    %v448 = vsel %vm117, %v428, %v444
    %s449 = scalar_lea.vmem [#allocation2], 7
    %v450 = vld [vmem:[%s449] ss:$4 sm:$0x7]
    %s451 = scalar_lea.vmem [#allocation2], 23
    %v452 = vld [vmem:[%s451] ss:$4 sm:$0x7]
    %455 = vst [vmem:[#allocation1] ss:$9 sm:$0xff] %v450
    %s456 = scalar_lea.vmem [#allocation1], 1
    %457 = vst [vmem:[%s456] ss:$9 sm:$0xff] %v452
    %v458 = vld [vmem:[#allocation1] sm:$0xff]
    %v459 = vld [vmem:[#allocation1 + $0x9] sm:$0xff]
    %v460 = vld [vmem:[#allocation1 + $0x12] sm:$0xff]
    %461 = vrot.lane.b32.xlu0 %v458, 111
    %v462 = vpop.permute.xlu0 %461
    %463 = vrot.lane.b32.xlu0 %v459, 111
    %v464 = vpop.permute.xlu0 %463
    %465 = vrot.lane.b32.xlu0 %v460, 111
    %v466 = vpop.permute.xlu0 %465
    %v467 = vsel %vm183, %v462, %v464
    %v468 = vsel %vm183, %v464, %v466
    %471 = vst [vmem:[#allocation1] ss:$9 sm:$0xff] %v450
    %s472 = scalar_lea.vmem [#allocation1], 1
    %473 = vst [vmem:[%s472] ss:$9 sm:$0xff] %v452
    %v474 = vld [vmem:[#allocation1] sm:$0xff]
    %v475 = vld [vmem:[#allocation1 + $0x9] sm:$0xff]
    %v476 = vld [vmem:[#allocation1 + $0x12] sm:$0xff]
    %477 = vrot.lane.b32.xlu0 %v474, 113
    %v478 = vpop.permute.xlu0 %477
    %479 = vrot.lane.b32.xlu0 %v475, 113
    %v480 = vpop.permute.xlu0 %479
    %481 = vrot.lane.b32.xlu0 %v476, 113
    %v482 = vpop.permute.xlu0 %481
    %v483 = vsel %vm200, %v478, %v480
    %v484 = vsel %vm200, %v480, %v482
    %v487 = vsel %vm116, %v467, %v483
    %v488 = vsel %vm117, %v468, %v484
    %v489 = vsel %vm112, %v487, %v447
    %v490 = vsel %vm113, %v488, %v448
    %s491 = sld [smem:[#allocation9 + $0x6]]
    %v492 = vstv %s491
    %v493 = vmul.f32 %v492, %v489
    %v494 = vmul.f32 %v492, %v490
    %v495 = vadd.f32 %v401, %v493
    %v496 = vadd.f32 %v402, %v494
    %s497 = sld [smem:[#allocation9 + $0x7]]
    %v498 = vstv %s497
    %v499 = vmul.f32 %v498, %v489
    %v500 = vmul.f32 %v498, %v490
    %v501 = vadd.f32 %v407, %v499
    %v502 = vadd.f32 %v408, %v500
    %v503 = vld [vmem:[#allocation2] ss:$4 sm:$0x7]
    %v504 = vld [vmem:[%s125] ss:$4 sm:$0x7]
    %v505 = vld [vmem:[%s165] ss:$4 sm:$0x7]
    %v506 = vld [vmem:[%s167] ss:$4 sm:$0x7]
    %509 = vst [vmem:[#allocation1] ss:$9 sm:$0xff] %v505
    %s510 = scalar_lea.vmem [#allocation1], 1
    %511 = vst [vmem:[%s510] ss:$9 sm:$0xff] %v506
    %v512 = vld [vmem:[#allocation1] sm:$0xff]
    %v513 = vld [vmem:[#allocation1 + $0x9] sm:$0xff]
    %v514 = vld [vmem:[#allocation1 + $0x12] sm:$0xff]
    %515 = vrot.lane.b32.xlu0 %v512, 112
    %v516 = vpop.permute.xlu0 %515
    %517 = vrot.lane.b32.xlu0 %v513, 112
    %v518 = vpop.permute.xlu0 %517
    %519 = vrot.lane.b32.xlu0 %v514, 112
    %v520 = vpop.permute.xlu0 %519
    %vm521 = vcmask 916480
    %v522 = vsel %vm521, %v516, %v518
    %v523 = vsel %vm521, %v518, %v520
    %528 = vst [vmem:[#allocation1] ss:$9 sm:$0xff] %v503
    %s529 = scalar_lea.vmem [#allocation1], 1
    %530 = vst [vmem:[%s529] ss:$9 sm:$0xff] %v504
    %v531 = vld [vmem:[#allocation1] sm:$0xff]
    %v532 = vld [vmem:[#allocation1 + $0x9] sm:$0xff]
    %v533 = vld [vmem:[#allocation1 + $0x12] sm:$0xff]
    %534 = vrot.lane.b32.xlu0 %v531, 16
    %v535 = vpop.permute.xlu0 %534
    %536 = vrot.lane.b32.xlu0 %v532, 16
    %v537 = vpop.permute.xlu0 %536
    %538 = vrot.lane.b32.xlu0 %v533, 16
    %v539 = vpop.permute.xlu0 %538
    %vm540 = vcmask 130048
    %v541 = vsel %vm540, %v535, %v537
    %v542 = vsel %vm540, %v537, %v539
    %v545 = vsel %vm112, %v522, %v541
    %v546 = vsel %vm113, %v523, %v542
    %s547 = sld [smem:[#allocation9 + $0x8]]
    %v548 = vstv %s547
    %v549 = vmul.f32 %v548, %v545
    %v550 = vmul.f32 %v548, %v546
    %v551 = vadd.f32 %v495, %v549
    %v552 = vadd.f32 %v496, %v550
    %s553 = sld [smem:[#allocation9 + $0x9]]
    %v554 = vstv %s553
    %v555 = vmul.f32 %v554, %v545
    %v556 = vmul.f32 %v554, %v546
    %v557 = vadd.f32 %v501, %v555
    %v558 = vadd.f32 %v502, %v556
    %v559 = vld [vmem:[%s221] ss:$4 sm:$0x7]
    %v560 = vld [vmem:[%s223] ss:$4 sm:$0x7]
    %v561 = vld [vmem:[%s261] ss:$4 sm:$0x7]
    %v562 = vld [vmem:[%s263] ss:$4 sm:$0x7]
    %565 = vst [vmem:[#allocation1] ss:$9 sm:$0xff] %v561
    %s566 = scalar_lea.vmem [#allocation1], 1
    %567 = vst [vmem:[%s566] ss:$9 sm:$0xff] %v562
    %v568 = vld [vmem:[#allocation1] sm:$0xff]
    %v569 = vld [vmem:[#allocation1 + $0x9] sm:$0xff]
    %v570 = vld [vmem:[#allocation1 + $0x12] sm:$0xff]
    %571 = vrot.lane.b32.xlu0 %v568, 112
    %v572 = vpop.permute.xlu0 %571
    %573 = vrot.lane.b32.xlu0 %v569, 112
    %v574 = vpop.permute.xlu0 %573
    %575 = vrot.lane.b32.xlu0 %v570, 112
    %v576 = vpop.permute.xlu0 %575
    %v577 = vsel %vm521, %v572, %v574
    %v578 = vsel %vm521, %v574, %v576
    %583 = vst [vmem:[#allocation1] ss:$9 sm:$0xff] %v559
    %s584 = scalar_lea.vmem [#allocation1], 1
    %585 = vst [vmem:[%s584] ss:$9 sm:$0xff] %v560
    %v586 = vld [vmem:[#allocation1] sm:$0xff]
    %v587 = vld [vmem:[#allocation1 + $0x9] sm:$0xff]
    %v588 = vld [vmem:[#allocation1 + $0x12] sm:$0xff]
    %589 = vrot.lane.b32.xlu0 %v586, 16
    %v590 = vpop.permute.xlu0 %589
    %591 = vrot.lane.b32.xlu0 %v587, 16
    %v592 = vpop.permute.xlu0 %591
    %593 = vrot.lane.b32.xlu0 %v588, 16
    %v594 = vpop.permute.xlu0 %593
    %v595 = vsel %vm540, %v590, %v592
    %v596 = vsel %vm540, %v592, %v594
    %v599 = vsel %vm112, %v577, %v595
    %v600 = vsel %vm113, %v578, %v596
    %s601 = sld [smem:[#allocation9 + $0xa]]
    %v602 = vstv %s601
    %v603 = vmul.f32 %v602, %v599
    %v604 = vmul.f32 %v602, %v600
    %v605 = vadd.f32 %v551, %v603
    %v606 = vadd.f32 %v552, %v604
    %s607 = sld [smem:[#allocation9 + $0xb]]
    %v608 = vstv %s607
    %v609 = vmul.f32 %v608, %v599
    %v610 = vmul.f32 %v608, %v600
    %v611 = vadd.f32 %v557, %v609
    %v612 = vadd.f32 %v558, %v610
    %v613 = vld [vmem:[%s315] ss:$4 sm:$0x7]
    %v614 = vld [vmem:[%s317] ss:$4 sm:$0x7]
    %v615 = vld [vmem:[%s355] ss:$4 sm:$0x7]
    %v616 = vld [vmem:[%s357] ss:$4 sm:$0x7]
    %619 = vst [vmem:[#allocation1] ss:$9 sm:$0xff] %v615
    %s620 = scalar_lea.vmem [#allocation1], 1
    %621 = vst [vmem:[%s620] ss:$9 sm:$0xff] %v616
    %v622 = vld [vmem:[#allocation1] sm:$0xff]
    %v623 = vld [vmem:[#allocation1 + $0x9] sm:$0xff]
    %v624 = vld [vmem:[#allocation1 + $0x12] sm:$0xff]
    %625 = vrot.lane.b32.xlu0 %v622, 112
    %v626 = vpop.permute.xlu0 %625
    %627 = vrot.lane.b32.xlu0 %v623, 112
    %v628 = vpop.permute.xlu0 %627
    %629 = vrot.lane.b32.xlu0 %v624, 112
    %v630 = vpop.permute.xlu0 %629
    %v631 = vsel %vm521, %v626, %v628
    %v632 = vsel %vm521, %v628, %v630
    %637 = vst [vmem:[#allocation1] ss:$9 sm:$0xff] %v613
    %s638 = scalar_lea.vmem [#allocation1], 1
    %639 = vst [vmem:[%s638] ss:$9 sm:$0xff] %v614
    %v640 = vld [vmem:[#allocation1] sm:$0xff]
    %v641 = vld [vmem:[#allocation1 + $0x9] sm:$0xff]
    %v642 = vld [vmem:[#allocation1 + $0x12] sm:$0xff]
    %643 = vrot.lane.b32.xlu0 %v640, 16
    %v644 = vpop.permute.xlu0 %643
    %645 = vrot.lane.b32.xlu0 %v641, 16
    %v646 = vpop.permute.xlu0 %645
    %647 = vrot.lane.b32.xlu0 %v642, 16
    %v648 = vpop.permute.xlu0 %647
    %v649 = vsel %vm540, %v644, %v646
    %v650 = vsel %vm540, %v646, %v648
    %v653 = vsel %vm112, %v631, %v649
    %v654 = vsel %vm113, %v632, %v650
    %s655 = sld [smem:[#allocation9 + $0xc]]
    %v656 = vstv %s655
    %v657 = vmul.f32 %v656, %v653
    %v658 = vmul.f32 %v656, %v654
    %v659 = vadd.f32 %v605, %v657
    %v660 = vadd.f32 %v606, %v658
    %s661 = sld [smem:[#allocation9 + $0xd]]
    %v662 = vstv %s661
    %v663 = vmul.f32 %v662, %v653
    %v664 = vmul.f32 %v662, %v654
    %v665 = vadd.f32 %v611, %v663
    %v666 = vadd.f32 %v612, %v664
    %v667 = vld [vmem:[%s409] ss:$4 sm:$0x7]
    %v668 = vld [vmem:[%s411] ss:$4 sm:$0x7]
    %v669 = vld [vmem:[%s449] ss:$4 sm:$0x7]
    %v670 = vld [vmem:[%s451] ss:$4 sm:$0x7]
    %673 = vst [vmem:[#allocation1] ss:$9 sm:$0xff] %v669
    %s674 = scalar_lea.vmem [#allocation1], 1
    %675 = vst [vmem:[%s674] ss:$9 sm:$0xff] %v670
    %v676 = vld [vmem:[#allocation1] sm:$0xff]
    %v677 = vld [vmem:[#allocation1 + $0x9] sm:$0xff]
    %v678 = vld [vmem:[#allocation1 + $0x12] sm:$0xff]
    %679 = vrot.lane.b32.xlu0 %v676, 112
    %v680 = vpop.permute.xlu0 %679
    %681 = vrot.lane.b32.xlu0 %v677, 112
    %v682 = vpop.permute.xlu0 %681
    %683 = vrot.lane.b32.xlu0 %v678, 112
    %v684 = vpop.permute.xlu0 %683
    %v685 = vsel %vm521, %v680, %v682
    %v686 = vsel %vm521, %v682, %v684
    %691 = vst [vmem:[#allocation1] ss:$9 sm:$0xff] %v667
    %s692 = scalar_lea.vmem [#allocation1], 1
    %693 = vst [vmem:[%s692] ss:$9 sm:$0xff] %v668
    %v694 = vld [vmem:[#allocation1] sm:$0xff]
    %v695 = vld [vmem:[#allocation1 + $0x9] sm:$0xff]
    %v696 = vld [vmem:[#allocation1 + $0x12] sm:$0xff]
    %697 = vrot.lane.b32.xlu0 %v694, 16
    %v698 = vpop.permute.xlu0 %697
    %699 = vrot.lane.b32.xlu0 %v695, 16
    %v700 = vpop.permute.xlu0 %699
    %701 = vrot.lane.b32.xlu0 %v696, 16
    %v702 = vpop.permute.xlu0 %701
    %v703 = vsel %vm540, %v698, %v700
    %v704 = vsel %vm540, %v700, %v702
    %v707 = vsel %vm112, %v685, %v703
    %v708 = vsel %vm113, %v686, %v704
    %s709 = sld [smem:[#allocation9 + $0xe]]
    %v710 = vstv %s709
    %v711 = vmul.f32 %v710, %v707
    %v712 = vmul.f32 %v710, %v708
    %v713 = vadd.f32 %v659, %v711
    %v714 = vadd.f32 %v660, %v712
    %s715 = sld [smem:[#allocation9 + $0xf]]
    %v716 = vstv %s715
    %v717 = vmul.f32 %v716, %v707
    %v718 = vmul.f32 %v716, %v708
    %v719 = vadd.f32 %v665, %v717
    %v720 = vadd.f32 %v666, %v718
    %721 = vst [vmem:[#allocation1] ss:$9 sm:$0xff] %v124
    %s722 = scalar_lea.vmem [#allocation1], 1
    %723 = vst [vmem:[%s722] ss:$9 sm:$0xff] %v126
    %v724 = vld [vmem:[#allocation1] sm:$0xff]
    %v725 = vld [vmem:[#allocation1 + $0x9] sm:$0xff]
    %v726 = vld [vmem:[#allocation1 + $0x12] sm:$0xff]
    %727 = vrot.lane.b32.xlu0 %v724, 17
    %v728 = vpop.permute.xlu0 %727
    %729 = vrot.lane.b32.xlu0 %v725, 17
    %v730 = vpop.permute.xlu0 %729
    %731 = vrot.lane.b32.xlu0 %v726, 17
    %v732 = vpop.permute.xlu0 %731
    %v733 = vsel %vm158, %v728, %v730
    %v734 = vsel %vm158, %v730, %v732
    %737 = vst [vmem:[#allocation1] ss:$9 sm:$0xff] %v124
    %s738 = scalar_lea.vmem [#allocation1], 1
    %739 = vst [vmem:[%s738] ss:$9 sm:$0xff] %v126
    %v740 = vld [vmem:[#allocation1] sm:$0xff]
    %v741 = vld [vmem:[#allocation1 + $0x9] sm:$0xff]
    %v742 = vld [vmem:[#allocation1 + $0x12] sm:$0xff]
    %743 = vrot.lane.b32.xlu0 %v740, 15
    %v744 = vpop.permute.xlu0 %743
    %745 = vrot.lane.b32.xlu0 %v741, 15
    %v746 = vpop.permute.xlu0 %745
    %747 = vrot.lane.b32.xlu0 %v742, 15
    %v748 = vpop.permute.xlu0 %747
    %v749 = vsel %vm141, %v744, %v746
    %v750 = vsel %vm141, %v746, %v748
    %v753 = vsel %vm118, %v733, %v749
    %v754 = vsel %vm119, %v734, %v750
    %755 = vst [vmem:[#allocation1] ss:$9 sm:$0xff] %v166
    %s756 = scalar_lea.vmem [#allocation1], 1
    %757 = vst [vmem:[%s756] ss:$9 sm:$0xff] %v168
    %v758 = vld [vmem:[#allocation1] sm:$0xff]
    %v759 = vld [vmem:[#allocation1 + $0x9] sm:$0xff]
    %v760 = vld [vmem:[#allocation1 + $0x12] sm:$0xff]
    %761 = vrot.lane.b32.xlu0 %v758, 113
    %v762 = vpop.permute.xlu0 %761
    %763 = vrot.lane.b32.xlu0 %v759, 113
    %v764 = vpop.permute.xlu0 %763
    %765 = vrot.lane.b32.xlu0 %v760, 113
    %v766 = vpop.permute.xlu0 %765
    %v767 = vsel %vm200, %v762, %v764
    %v768 = vsel %vm200, %v764, %v766
    %771 = vst [vmem:[#allocation1] ss:$9 sm:$0xff] %v166
    %s772 = scalar_lea.vmem [#allocation1], 1
    %773 = vst [vmem:[%s772] ss:$9 sm:$0xff] %v168
    %v774 = vld [vmem:[#allocation1] sm:$0xff]
    %v775 = vld [vmem:[#allocation1 + $0x9] sm:$0xff]
    %v776 = vld [vmem:[#allocation1 + $0x12] sm:$0xff]
    %777 = vrot.lane.b32.xlu0 %v774, 111
    %v778 = vpop.permute.xlu0 %777
    %779 = vrot.lane.b32.xlu0 %v775, 111
    %v780 = vpop.permute.xlu0 %779
    %781 = vrot.lane.b32.xlu0 %v776, 111
    %v782 = vpop.permute.xlu0 %781
    %v783 = vsel %vm183, %v778, %v780
    %v784 = vsel %vm183, %v780, %v782
    %v787 = vsel %vm118, %v767, %v783
    %v788 = vsel %vm119, %v768, %v784
    %v789 = vsel %vm112, %v787, %v753
    %v790 = vsel %vm113, %v788, %v754
    %s791 = sld [smem:[#allocation9 + $0x10]]
    %v792 = vstv %s791
    %v793 = vmul.f32 %v792, %v789
    %v794 = vmul.f32 %v792, %v790
    %v795 = vadd.f32 %v713, %v793
    %v796 = vadd.f32 %v714, %v794
    %s797 = sld [smem:[#allocation9 + $0x11]]
    %v798 = vstv %s797
    %v799 = vmul.f32 %v798, %v789
    %v800 = vmul.f32 %v798, %v790
    %v801 = vadd.f32 %v719, %v799
    %v802 = vadd.f32 %v720, %v800
    %803 = vst [vmem:[#allocation1] ss:$9 sm:$0xff] %v222
    %s804 = scalar_lea.vmem [#allocation1], 1
    %805 = vst [vmem:[%s804] ss:$9 sm:$0xff] %v224
    %v806 = vld [vmem:[#allocation1] sm:$0xff]
    %v807 = vld [vmem:[#allocation1 + $0x9] sm:$0xff]
    %v808 = vld [vmem:[#allocation1 + $0x12] sm:$0xff]
    %809 = vrot.lane.b32.xlu0 %v806, 17
    %v810 = vpop.permute.xlu0 %809
    %811 = vrot.lane.b32.xlu0 %v807, 17
    %v812 = vpop.permute.xlu0 %811
    %813 = vrot.lane.b32.xlu0 %v808, 17
    %v814 = vpop.permute.xlu0 %813
    %v815 = vsel %vm158, %v810, %v812
    %v816 = vsel %vm158, %v812, %v814
    %819 = vst [vmem:[#allocation1] ss:$9 sm:$0xff] %v222
    %s820 = scalar_lea.vmem [#allocation1], 1
    %821 = vst [vmem:[%s820] ss:$9 sm:$0xff] %v224
    %v822 = vld [vmem:[#allocation1] sm:$0xff]
    %v823 = vld [vmem:[#allocation1 + $0x9] sm:$0xff]
    %v824 = vld [vmem:[#allocation1 + $0x12] sm:$0xff]
    %825 = vrot.lane.b32.xlu0 %v822, 15
    %v826 = vpop.permute.xlu0 %825
    %827 = vrot.lane.b32.xlu0 %v823, 15
    %v828 = vpop.permute.xlu0 %827
    %829 = vrot.lane.b32.xlu0 %v824, 15
    %v830 = vpop.permute.xlu0 %829
    %v831 = vsel %vm141, %v826, %v828
    %v832 = vsel %vm141, %v828, %v830
    %v835 = vsel %vm118, %v815, %v831
    %v836 = vsel %vm119, %v816, %v832
    %837 = vst [vmem:[#allocation1] ss:$9 sm:$0xff] %v262
    %s838 = scalar_lea.vmem [#allocation1], 1
    %839 = vst [vmem:[%s838] ss:$9 sm:$0xff] %v264
    %v840 = vld [vmem:[#allocation1] sm:$0xff]
    %v841 = vld [vmem:[#allocation1 + $0x9] sm:$0xff]
    %v842 = vld [vmem:[#allocation1 + $0x12] sm:$0xff]
    %843 = vrot.lane.b32.xlu0 %v840, 113
    %v844 = vpop.permute.xlu0 %843
    %845 = vrot.lane.b32.xlu0 %v841, 113
    %v846 = vpop.permute.xlu0 %845
    %847 = vrot.lane.b32.xlu0 %v842, 113
    %v848 = vpop.permute.xlu0 %847
    %v849 = vsel %vm200, %v844, %v846
    %v850 = vsel %vm200, %v846, %v848
    %853 = vst [vmem:[#allocation1] ss:$9 sm:$0xff] %v262
    %s854 = scalar_lea.vmem [#allocation1], 1
    %855 = vst [vmem:[%s854] ss:$9 sm:$0xff] %v264
    %v856 = vld [vmem:[#allocation1] sm:$0xff]
    %v857 = vld [vmem:[#allocation1 + $0x9] sm:$0xff]
    %v858 = vld [vmem:[#allocation1 + $0x12] sm:$0xff]
    %859 = vrot.lane.b32.xlu0 %v856, 111
    %v860 = vpop.permute.xlu0 %859
    %861 = vrot.lane.b32.xlu0 %v857, 111
    %v862 = vpop.permute.xlu0 %861
    %863 = vrot.lane.b32.xlu0 %v858, 111
    %v864 = vpop.permute.xlu0 %863
    %v865 = vsel %vm183, %v860, %v862
    %v866 = vsel %vm183, %v862, %v864
    %v869 = vsel %vm118, %v849, %v865
    %v870 = vsel %vm119, %v850, %v866
    %v871 = vsel %vm112, %v869, %v835
    %v872 = vsel %vm113, %v870, %v836
    %s873 = sld [smem:[#allocation9 + $0x12]]
    %v874 = vstv %s873
    %v875 = vmul.f32 %v874, %v871
    %v876 = vmul.f32 %v874, %v872
    %v877 = vadd.f32 %v795, %v875
    %v878 = vadd.f32 %v796, %v876
    %s879 = sld [smem:[#allocation9 + $0x13]]
    %v880 = vstv %s879
    %v881 = vmul.f32 %v880, %v871
    %v882 = vmul.f32 %v880, %v872
    %v883 = vadd.f32 %v801, %v881
    %v884 = vadd.f32 %v802, %v882
    %885 = vst [vmem:[#allocation1] ss:$9 sm:$0xff] %v316
    %s886 = scalar_lea.vmem [#allocation1], 1
    %887 = vst [vmem:[%s886] ss:$9 sm:$0xff] %v318
    %v888 = vld [vmem:[#allocation1] sm:$0xff]
    %v889 = vld [vmem:[#allocation1 + $0x9] sm:$0xff]
    %v890 = vld [vmem:[#allocation1 + $0x12] sm:$0xff]
    %891 = vrot.lane.b32.xlu0 %v888, 17
    %v892 = vpop.permute.xlu0 %891
    %893 = vrot.lane.b32.xlu0 %v889, 17
    %v894 = vpop.permute.xlu0 %893
    %895 = vrot.lane.b32.xlu0 %v890, 17
    %v896 = vpop.permute.xlu0 %895
    %v897 = vsel %vm158, %v892, %v894
    %v898 = vsel %vm158, %v894, %v896
    %901 = vst [vmem:[#allocation1] ss:$9 sm:$0xff] %v316
    %s902 = scalar_lea.vmem [#allocation1], 1
    %903 = vst [vmem:[%s902] ss:$9 sm:$0xff] %v318
    %v904 = vld [vmem:[#allocation1] sm:$0xff]
    %v905 = vld [vmem:[#allocation1 + $0x9] sm:$0xff]
    %v906 = vld [vmem:[#allocation1 + $0x12] sm:$0xff]
    %907 = vrot.lane.b32.xlu0 %v904, 15
    %v908 = vpop.permute.xlu0 %907
    %909 = vrot.lane.b32.xlu0 %v905, 15
    %v910 = vpop.permute.xlu0 %909
    %911 = vrot.lane.b32.xlu0 %v906, 15
    %v912 = vpop.permute.xlu0 %911
    %v913 = vsel %vm141, %v908, %v910
    %v914 = vsel %vm141, %v910, %v912
    %v917 = vsel %vm118, %v897, %v913
    %v918 = vsel %vm119, %v898, %v914
    %919 = vst [vmem:[#allocation1] ss:$9 sm:$0xff] %v356
    %s920 = scalar_lea.vmem [#allocation1], 1
    %921 = vst [vmem:[%s920] ss:$9 sm:$0xff] %v358
    %v922 = vld [vmem:[#allocation1] sm:$0xff]
    %v923 = vld [vmem:[#allocation1 + $0x9] sm:$0xff]
    %v924 = vld [vmem:[#allocation1 + $0x12] sm:$0xff]
    %925 = vrot.lane.b32.xlu0 %v922, 113
    %v926 = vpop.permute.xlu0 %925
    %927 = vrot.lane.b32.xlu0 %v923, 113
    %v928 = vpop.permute.xlu0 %927
    %929 = vrot.lane.b32.xlu0 %v924, 113
    %v930 = vpop.permute.xlu0 %929
    %v931 = vsel %vm200, %v926, %v928
    %v932 = vsel %vm200, %v928, %v930
    %935 = vst [vmem:[#allocation1] ss:$9 sm:$0xff] %v356
    %s936 = scalar_lea.vmem [#allocation1], 1
    %937 = vst [vmem:[%s936] ss:$9 sm:$0xff] %v358
    %v938 = vld [vmem:[#allocation1] sm:$0xff]
    %v939 = vld [vmem:[#allocation1 + $0x9] sm:$0xff]
    %v940 = vld [vmem:[#allocation1 + $0x12] sm:$0xff]
    %941 = vrot.lane.b32.xlu0 %v938, 111
    %v942 = vpop.permute.xlu0 %941
    %943 = vrot.lane.b32.xlu0 %v939, 111
    %v944 = vpop.permute.xlu0 %943
    %945 = vrot.lane.b32.xlu0 %v940, 111
    %v946 = vpop.permute.xlu0 %945
    %v947 = vsel %vm183, %v942, %v944
    %v948 = vsel %vm183, %v944, %v946
    %v951 = vsel %vm118, %v931, %v947
    %v952 = vsel %vm119, %v932, %v948
    %v953 = vsel %vm112, %v951, %v917
    %v954 = vsel %vm113, %v952, %v918
    %s955 = sld [smem:[#allocation9 + $0x14]]
    %v956 = vstv %s955
    %v957 = vmul.f32 %v956, %v953
    %v958 = vmul.f32 %v956, %v954
    %v959 = vadd.f32 %v877, %v957
    %v960 = vadd.f32 %v878, %v958
    %s961 = sld [smem:[#allocation9 + $0x15]]
    %v962 = vstv %s961
    %v963 = vmul.f32 %v962, %v953
    %v964 = vmul.f32 %v962, %v954
    %v965 = vadd.f32 %v883, %v963
    %v966 = vadd.f32 %v884, %v964
    %967 = vst [vmem:[#allocation1] ss:$9 sm:$0xff] %v410
    %s968 = scalar_lea.vmem [#allocation1], 1
    %969 = vst [vmem:[%s968] ss:$9 sm:$0xff] %v412
    %v970 = vld [vmem:[#allocation1] sm:$0xff]
    %v971 = vld [vmem:[#allocation1 + $0x9] sm:$0xff]
    %v972 = vld [vmem:[#allocation1 + $0x12] sm:$0xff]
    %973 = vrot.lane.b32.xlu0 %v970, 17
    %v974 = vpop.permute.xlu0 %973
    %975 = vrot.lane.b32.xlu0 %v971, 17
    %v976 = vpop.permute.xlu0 %975
    %977 = vrot.lane.b32.xlu0 %v972, 17
    %v978 = vpop.permute.xlu0 %977
    %v979 = vsel %vm158, %v974, %v976
    %v980 = vsel %vm158, %v976, %v978
    %983 = vst [vmem:[#allocation1] ss:$9 sm:$0xff] %v410
    %s984 = scalar_lea.vmem [#allocation1], 1
    %985 = vst [vmem:[%s984] ss:$9 sm:$0xff] %v412
    %v986 = vld [vmem:[#allocation1] sm:$0xff]
    %v987 = vld [vmem:[#allocation1 + $0x9] sm:$0xff]
    %v988 = vld [vmem:[#allocation1 + $0x12] sm:$0xff]
    %989 = vrot.lane.b32.xlu0 %v986, 15
    %v990 = vpop.permute.xlu0 %989
    %991 = vrot.lane.b32.xlu0 %v987, 15
    %v992 = vpop.permute.xlu0 %991
    %993 = vrot.lane.b32.xlu0 %v988, 15
    %v994 = vpop.permute.xlu0 %993
    %v995 = vsel %vm141, %v990, %v992
    %v996 = vsel %vm141, %v992, %v994
    %v999 = vsel %vm118, %v979, %v995
    %v1000 = vsel %vm119, %v980, %v996
    %1001 = vst [vmem:[#allocation1] ss:$9 sm:$0xff] %v450
    %s1002 = scalar_lea.vmem [#allocation1], 1
    %1003 = vst [vmem:[%s1002] ss:$9 sm:$0xff] %v452
    %v1004 = vld [vmem:[#allocation1] sm:$0xff]
    %v1005 = vld [vmem:[#allocation1 + $0x9] sm:$0xff]
    %v1006 = vld [vmem:[#allocation1 + $0x12] sm:$0xff]
    %1007 = vrot.lane.b32.xlu0 %v1004, 113
    %v1008 = vpop.permute.xlu0 %1007
    %1009 = vrot.lane.b32.xlu0 %v1005, 113
    %v1010 = vpop.permute.xlu0 %1009
    %1011 = vrot.lane.b32.xlu0 %v1006, 113
    %v1012 = vpop.permute.xlu0 %1011
    %v1013 = vsel %vm200, %v1008, %v1010
    %v1014 = vsel %vm200, %v1010, %v1012
    %1017 = vst [vmem:[#allocation1] ss:$9 sm:$0xff] %v450
    %s1018 = scalar_lea.vmem [#allocation1], 1
    %1019 = vst [vmem:[%s1018] ss:$9 sm:$0xff] %v452
    %v1020 = vld [vmem:[#allocation1] sm:$0xff]
    %v1021 = vld [vmem:[#allocation1 + $0x9] sm:$0xff]
    %v1022 = vld [vmem:[#allocation1 + $0x12] sm:$0xff]
    %1023 = vrot.lane.b32.xlu0 %v1020, 111
    %v1024 = vpop.permute.xlu0 %1023
    %1025 = vrot.lane.b32.xlu0 %v1021, 111
    %v1026 = vpop.permute.xlu0 %1025
    %1027 = vrot.lane.b32.xlu0 %v1022, 111
    %v1028 = vpop.permute.xlu0 %1027
    %v1029 = vsel %vm183, %v1024, %v1026
    %v1030 = vsel %vm183, %v1026, %v1028
    %v1033 = vsel %vm118, %v1013, %v1029
    %v1034 = vsel %vm119, %v1014, %v1030
    %v1035 = vsel %vm112, %v1033, %v999
    %v1036 = vsel %vm113, %v1034, %v1000
    %s1037 = sld [smem:[#allocation9 + $0x16]]
    %v1038 = vstv %s1037
    %v1039 = vmul.f32 %v1038, %v1035
    %v1040 = vmul.f32 %v1038, %v1036
    %v1041 = vadd.f32 %v959, %v1039
    %v1042 = vadd.f32 %v960, %v1040
    %s1043 = sld [smem:[#allocation9 + $0x17]]
    %v1044 = vstv %s1043
    %v1045 = vmul.f32 %v1044, %v1035
    %v1046 = vmul.f32 %v1044, %v1036
    %v1047 = vadd.f32 %v965, %v1045
    %v1048 = vadd.f32 %v966, %v1046
    %v1049 = vld [vmem:[#allocation2] ss:$4 sm:$0x7]
    %v1050 = vld [vmem:[%s125] ss:$4 sm:$0x7]
    %v1051 = vld [vmem:[%s165] ss:$4 sm:$0x7]
    %v1052 = vld [vmem:[%s167] ss:$4 sm:$0x7]
    %1055 = vst [vmem:[#allocation1] ss:$9 sm:$0xff] %v1051
    %s1056 = scalar_lea.vmem [#allocation1], 1
    %1057 = vst [vmem:[%s1056] ss:$9 sm:$0xff] %v1052
    %v1058 = vld [vmem:[#allocation1] sm:$0xff]
    %v1059 = vld [vmem:[#allocation1 + $0x9] sm:$0xff]
    %v1060 = vld [vmem:[#allocation1 + $0x12] sm:$0xff]
    %1061 = vrot.lane.b32.xlu0 %v1058, 127
    %v1062 = vpop.permute.xlu0 %1061
    %1063 = vrot.lane.b32.xlu0 %v1059, 127
    %v1064 = vpop.permute.xlu0 %1063
    %1065 = vrot.lane.b32.xlu0 %v1060, 127
    %v1066 = vpop.permute.xlu0 %1065
    %vm1067 = vcmask 1039360
    %v1068 = vsel %vm1067, %v1062, %v1064
    %v1069 = vsel %vm1067, %v1064, %v1066
    %1074 = vst [vmem:[#allocation1] ss:$9 sm:$0xff] %v1049
    %s1075 = scalar_lea.vmem [#allocation1], 1
    %1076 = vst [vmem:[%s1075] ss:$9 sm:$0xff] %v1050
    %v1077 = vld [vmem:[#allocation1] sm:$0xff]
    %v1078 = vld [vmem:[#allocation1 + $0x9] sm:$0xff]
    %v1079 = vld [vmem:[#allocation1 + $0x12] sm:$0xff]
    %1080 = vrot.lane.b32.xlu0 %v1077, 1
    %v1081 = vpop.permute.xlu0 %1080
    %1082 = vrot.lane.b32.xlu0 %v1078, 1
    %v1083 = vpop.permute.xlu0 %1082
    %1084 = vrot.lane.b32.xlu0 %v1079, 1
    %v1085 = vpop.permute.xlu0 %1084
    %vm1086 = vcmask 7168
    %v1087 = vsel %vm1086, %v1081, %v1083
    %v1088 = vsel %vm1086, %v1083, %v1085
    %v1091 = vsel %vm116, %v1068, %v1087
    %v1092 = vsel %vm117, %v1069, %v1088
    %s1093 = sld [smem:[#allocation9 + $0x18]]
    %v1094 = vstv %s1093
    %v1095 = vmul.f32 %v1094, %v1091
    %v1096 = vmul.f32 %v1094, %v1092
    %v1097 = vadd.f32 %v1095, 0.0
    %v1098 = vadd.f32 %v1096, 0.0
    %s1099 = sld [smem:[#allocation9 + $0x19]]
    %v1100 = vstv %s1099
    %v1101 = vmul.f32 %v1100, %v1091
    %v1102 = vmul.f32 %v1100, %v1092
    %v1103 = vadd.f32 %v1101, 0.0
    %v1104 = vadd.f32 %v1102, 0.0
    %v1105 = vld [vmem:[%s221] ss:$4 sm:$0x7]
    %v1106 = vld [vmem:[%s223] ss:$4 sm:$0x7]
    %v1107 = vld [vmem:[%s261] ss:$4 sm:$0x7]
    %v1108 = vld [vmem:[%s263] ss:$4 sm:$0x7]
    %1111 = vst [vmem:[#allocation1] ss:$9 sm:$0xff] %v1107
    %s1112 = scalar_lea.vmem [#allocation1], 1
    %1113 = vst [vmem:[%s1112] ss:$9 sm:$0xff] %v1108
    %v1114 = vld [vmem:[#allocation1] sm:$0xff]
    %v1115 = vld [vmem:[#allocation1 + $0x9] sm:$0xff]
    %v1116 = vld [vmem:[#allocation1 + $0x12] sm:$0xff]
    %1117 = vrot.lane.b32.xlu0 %v1114, 127
    %v1118 = vpop.permute.xlu0 %1117
    %1119 = vrot.lane.b32.xlu0 %v1115, 127
    %v1120 = vpop.permute.xlu0 %1119
    %1121 = vrot.lane.b32.xlu0 %v1116, 127
    %v1122 = vpop.permute.xlu0 %1121
    %v1123 = vsel %vm1067, %v1118, %v1120
    %v1124 = vsel %vm1067, %v1120, %v1122
    %1129 = vst [vmem:[#allocation1] ss:$9 sm:$0xff] %v1105
    %s1130 = scalar_lea.vmem [#allocation1], 1
    %1131 = vst [vmem:[%s1130] ss:$9 sm:$0xff] %v1106
    %v1132 = vld [vmem:[#allocation1] sm:$0xff]
    %v1133 = vld [vmem:[#allocation1 + $0x9] sm:$0xff]
    %v1134 = vld [vmem:[#allocation1 + $0x12] sm:$0xff]
    %1135 = vrot.lane.b32.xlu0 %v1132, 1
    %v1136 = vpop.permute.xlu0 %1135
    %1137 = vrot.lane.b32.xlu0 %v1133, 1
    %v1138 = vpop.permute.xlu0 %1137
    %1139 = vrot.lane.b32.xlu0 %v1134, 1
    %v1140 = vpop.permute.xlu0 %1139
    %v1141 = vsel %vm1086, %v1136, %v1138
    %v1142 = vsel %vm1086, %v1138, %v1140
    %v1145 = vsel %vm116, %v1123, %v1141
    %v1146 = vsel %vm117, %v1124, %v1142
    %s1147 = sld [smem:[#allocation9 + $0x1a]]
    %v1148 = vstv %s1147
    %v1149 = vmul.f32 %v1148, %v1145
    %v1150 = vmul.f32 %v1148, %v1146
    %v1151 = vadd.f32 %v1097, %v1149
    %v1152 = vadd.f32 %v1098, %v1150
    %s1153 = sld [smem:[#allocation9 + $0x1b]]
    %v1154 = vstv %s1153
    %v1155 = vmul.f32 %v1154, %v1145
    %v1156 = vmul.f32 %v1154, %v1146
    %v1157 = vadd.f32 %v1103, %v1155
    %v1158 = vadd.f32 %v1104, %v1156
    %v1159 = vld [vmem:[%s315] ss:$4 sm:$0x7]
    %v1160 = vld [vmem:[%s317] ss:$4 sm:$0x7]
    %v1161 = vld [vmem:[%s355] ss:$4 sm:$0x7]
    %v1162 = vld [vmem:[%s357] ss:$4 sm:$0x7]
    %1165 = vst [vmem:[#allocation1] ss:$9 sm:$0xff] %v1161
    %s1166 = scalar_lea.vmem [#allocation1], 1
    %1167 = vst [vmem:[%s1166] ss:$9 sm:$0xff] %v1162
    %v1168 = vld [vmem:[#allocation1] sm:$0xff]
    %v1169 = vld [vmem:[#allocation1 + $0x9] sm:$0xff]
    %v1170 = vld [vmem:[#allocation1 + $0x12] sm:$0xff]
    %1171 = vrot.lane.b32.xlu0 %v1168, 127
    %v1172 = vpop.permute.xlu0 %1171
    %1173 = vrot.lane.b32.xlu0 %v1169, 127
    %v1174 = vpop.permute.xlu0 %1173
    %1175 = vrot.lane.b32.xlu0 %v1170, 127
    %v1176 = vpop.permute.xlu0 %1175
    %v1177 = vsel %vm1067, %v1172, %v1174
    %v1178 = vsel %vm1067, %v1174, %v1176
    %1183 = vst [vmem:[#allocation1] ss:$9 sm:$0xff] %v1159
    %s1184 = scalar_lea.vmem [#allocation1], 1
    %1185 = vst [vmem:[%s1184] ss:$9 sm:$0xff] %v1160
    %v1186 = vld [vmem:[#allocation1] sm:$0xff]
    %v1187 = vld [vmem:[#allocation1 + $0x9] sm:$0xff]
    %v1188 = vld [vmem:[#allocation1 + $0x12] sm:$0xff]
    %1189 = vrot.lane.b32.xlu0 %v1186, 1
    %v1190 = vpop.permute.xlu0 %1189
    %1191 = vrot.lane.b32.xlu0 %v1187, 1
    %v1192 = vpop.permute.xlu0 %1191
    %1193 = vrot.lane.b32.xlu0 %v1188, 1
    %v1194 = vpop.permute.xlu0 %1193
    %v1195 = vsel %vm1086, %v1190, %v1192
    %v1196 = vsel %vm1086, %v1192, %v1194
    %v1199 = vsel %vm116, %v1177, %v1195
    %v1200 = vsel %vm117, %v1178, %v1196
    %s1201 = sld [smem:[#allocation9 + $0x1c]]
    %v1202 = vstv %s1201
    %v1203 = vmul.f32 %v1202, %v1199
    %v1204 = vmul.f32 %v1202, %v1200
    %v1205 = vadd.f32 %v1151, %v1203
    %v1206 = vadd.f32 %v1152, %v1204
    %s1207 = sld [smem:[#allocation9 + $0x1d]]
    %v1208 = vstv %s1207
    %v1209 = vmul.f32 %v1208, %v1199
    %v1210 = vmul.f32 %v1208, %v1200
    %v1211 = vadd.f32 %v1157, %v1209
    %v1212 = vadd.f32 %v1158, %v1210
    %v1213 = vld [vmem:[%s409] ss:$4 sm:$0x7]
    %v1214 = vld [vmem:[%s411] ss:$4 sm:$0x7]
    %v1215 = vld [vmem:[%s449] ss:$4 sm:$0x7]
    %v1216 = vld [vmem:[%s451] ss:$4 sm:$0x7]
    %1219 = vst [vmem:[#allocation1] ss:$9 sm:$0xff] %v1215
    %s1220 = scalar_lea.vmem [#allocation1], 1
    %1221 = vst [vmem:[%s1220] ss:$9 sm:$0xff] %v1216
    %v1222 = vld [vmem:[#allocation1] sm:$0xff]
    %v1223 = vld [vmem:[#allocation1 + $0x9] sm:$0xff]
    %v1224 = vld [vmem:[#allocation1 + $0x12] sm:$0xff]
    %1225 = vrot.lane.b32.xlu0 %v1222, 127
    %v1226 = vpop.permute.xlu0 %1225
    %1227 = vrot.lane.b32.xlu0 %v1223, 127
    %v1228 = vpop.permute.xlu0 %1227
    %1229 = vrot.lane.b32.xlu0 %v1224, 127
    %v1230 = vpop.permute.xlu0 %1229
    %v1231 = vsel %vm1067, %v1226, %v1228
    %v1232 = vsel %vm1067, %v1228, %v1230
    %1237 = vst [vmem:[#allocation1] ss:$9 sm:$0xff] %v1213
    %s1238 = scalar_lea.vmem [#allocation1], 1
    %1239 = vst [vmem:[%s1238] ss:$9 sm:$0xff] %v1214
    %v1240 = vld [vmem:[#allocation1] sm:$0xff]
    %v1241 = vld [vmem:[#allocation1 + $0x9] sm:$0xff]
    %v1242 = vld [vmem:[#allocation1 + $0x12] sm:$0xff]
    %1243 = vrot.lane.b32.xlu0 %v1240, 1
    %v1244 = vpop.permute.xlu0 %1243
    %1245 = vrot.lane.b32.xlu0 %v1241, 1
    %v1246 = vpop.permute.xlu0 %1245
    %1247 = vrot.lane.b32.xlu0 %v1242, 1
    %v1248 = vpop.permute.xlu0 %1247
    %v1249 = vsel %vm1086, %v1244, %v1246
    %v1250 = vsel %vm1086, %v1246, %v1248
    %v1253 = vsel %vm116, %v1231, %v1249
    %v1254 = vsel %vm117, %v1232, %v1250
    %s1255 = sld [smem:[#allocation9 + $0x1e]]
    %v1256 = vstv %s1255
    %v1257 = vmul.f32 %v1256, %v1253
    %v1258 = vmul.f32 %v1256, %v1254
    %v1259 = vadd.f32 %v1205, %v1257
    %v1260 = vadd.f32 %v1206, %v1258
    %s1261 = sld [smem:[#allocation9 + $0x1f]]
    %v1262 = vstv %s1261
    %v1263 = vmul.f32 %v1262, %v1253
    %v1264 = vmul.f32 %v1262, %v1254
    %v1265 = vadd.f32 %v1211, %v1263
    %v1266 = vadd.f32 %v1212, %v1264
    %s1267 = scalar_lea.vmem [#allocation2], 4
    %v1268 = vld [vmem:[%s1267] ss:$4 sm:$0x3]
    %s1269 = scalar_lea.vmem [#allocation2], 20
    %v1270 = vld [vmem:[%s1269] ss:$4 sm:$0x3]
    %s1271 = sld [smem:[#allocation9 + $0x20]]
    %v1272 = vstv %s1271
    %v1273 = vmul.f32 %v1272, %v1268
    %v1274 = vmul.f32 %v1272, %v1270
    %1277 = vst [vmem:[#allocation1] ss:$9 sm:$0xff] %v1273
    %s1278 = scalar_lea.vmem [#allocation1], 1
    %1279 = vst [vmem:[%s1278] ss:$9 sm:$0xff] %v1274
    %v1280 = vld [vmem:[#allocation1] sm:$0xff]
    %v1281 = vld [vmem:[#allocation1 + $0x9] sm:$0xff]
    %v1284 = vadd.f32 %v1259, %v1280
    %v1285 = vadd.f32 %v1260, %v1281
    %s1286 = sld [smem:[#allocation9 + $0x21]]
    %v1287 = vstv %s1286
    %v1288 = vmul.f32 %v1287, %v1268
    %v1289 = vmul.f32 %v1287, %v1270
    %1292 = vst [vmem:[#allocation1] ss:$9 sm:$0xff] %v1288
    %s1293 = scalar_lea.vmem [#allocation1], 1
    %1294 = vst [vmem:[%s1293] ss:$9 sm:$0xff] %v1289
    %v1295 = vld [vmem:[#allocation1] sm:$0xff]
    %v1296 = vld [vmem:[#allocation1 + $0x9] sm:$0xff]
    %v1299 = vadd.f32 %v1265, %v1295
    %v1300 = vadd.f32 %v1266, %v1296
    %s1301 = scalar_lea.vmem [#allocation2], 5
    %v1302 = vld [vmem:[%s1301] ss:$4 sm:$0x3]
    %s1303 = scalar_lea.vmem [#allocation2], 21
    %v1304 = vld [vmem:[%s1303] ss:$4 sm:$0x3]
    %s1305 = sld [smem:[#allocation9 + $0x22]]
    %v1306 = vstv %s1305
    %v1307 = vmul.f32 %v1306, %v1302
    %v1308 = vmul.f32 %v1306, %v1304
    %1311 = vst [vmem:[#allocation1] ss:$9 sm:$0xff] %v1307
    %s1312 = scalar_lea.vmem [#allocation1], 1
    %1313 = vst [vmem:[%s1312] ss:$9 sm:$0xff] %v1308
    %v1314 = vld [vmem:[#allocation1] sm:$0xff]
    %v1315 = vld [vmem:[#allocation1 + $0x9] sm:$0xff]
    %v1318 = vadd.f32 %v1284, %v1314
    %v1319 = vadd.f32 %v1285, %v1315
    %s1320 = sld [smem:[#allocation9 + $0x23]]
    %v1321 = vstv %s1320
    %v1322 = vmul.f32 %v1321, %v1302
    %v1323 = vmul.f32 %v1321, %v1304
    %1326 = vst [vmem:[#allocation1] ss:$9 sm:$0xff] %v1322
    %s1327 = scalar_lea.vmem [#allocation1], 1
    %1328 = vst [vmem:[%s1327] ss:$9 sm:$0xff] %v1323
    %v1329 = vld [vmem:[#allocation1] sm:$0xff]
    %v1330 = vld [vmem:[#allocation1 + $0x9] sm:$0xff]
    %v1333 = vadd.f32 %v1299, %v1329
    %v1334 = vadd.f32 %v1300, %v1330
    %s1335 = scalar_lea.vmem [#allocation2], 6
    %v1336 = vld [vmem:[%s1335] ss:$4 sm:$0x3]
    %s1337 = scalar_lea.vmem [#allocation2], 22
    %v1338 = vld [vmem:[%s1337] ss:$4 sm:$0x3]
    %s1339 = sld [smem:[#allocation9 + $0x24]]
    %v1340 = vstv %s1339
    %v1341 = vmul.f32 %v1340, %v1336
    %v1342 = vmul.f32 %v1340, %v1338
    %1345 = vst [vmem:[#allocation1] ss:$9 sm:$0xff] %v1341
    %s1346 = scalar_lea.vmem [#allocation1], 1
    %1347 = vst [vmem:[%s1346] ss:$9 sm:$0xff] %v1342
    %v1348 = vld [vmem:[#allocation1] sm:$0xff]
    %v1349 = vld [vmem:[#allocation1 + $0x9] sm:$0xff]
    %v1352 = vadd.f32 %v1318, %v1348
    %v1353 = vadd.f32 %v1319, %v1349
    %s1354 = sld [smem:[#allocation9 + $0x25]]
    %v1355 = vstv %s1354
    %v1356 = vmul.f32 %v1355, %v1336
    %v1357 = vmul.f32 %v1355, %v1338
    %1360 = vst [vmem:[#allocation1] ss:$9 sm:$0xff] %v1356
    %s1361 = scalar_lea.vmem [#allocation1], 1
    %1362 = vst [vmem:[%s1361] ss:$9 sm:$0xff] %v1357
    %v1363 = vld [vmem:[#allocation1] sm:$0xff]
    %v1364 = vld [vmem:[#allocation1 + $0x9] sm:$0xff]
    %v1367 = vadd.f32 %v1333, %v1363
    %v1368 = vadd.f32 %v1334, %v1364
    %s1369 = scalar_lea.vmem [#allocation2], 7
    %v1370 = vld [vmem:[%s1369] ss:$4 sm:$0x3]
    %s1371 = scalar_lea.vmem [#allocation2], 23
    %v1372 = vld [vmem:[%s1371] ss:$4 sm:$0x3]
    %s1373 = sld [smem:[#allocation9 + $0x26]]
    %v1374 = vstv %s1373
    %v1375 = vmul.f32 %v1374, %v1370
    %v1376 = vmul.f32 %v1374, %v1372
    %1379 = vst [vmem:[#allocation1] ss:$9 sm:$0xff] %v1375
    %s1380 = scalar_lea.vmem [#allocation1], 1
    %1381 = vst [vmem:[%s1380] ss:$9 sm:$0xff] %v1376
    %v1382 = vld [vmem:[#allocation1] sm:$0xff]
    %v1383 = vld [vmem:[#allocation1 + $0x9] sm:$0xff]
    %v1386 = vadd.f32 %v1352, %v1382
    %v1387 = vadd.f32 %v1353, %v1383
    %s1388 = sld [smem:[#allocation9 + $0x27]]
    %v1389 = vstv %s1388
    %v1390 = vmul.f32 %v1389, %v1370
    %v1391 = vmul.f32 %v1389, %v1372
    %1394 = vst [vmem:[#allocation1] ss:$9 sm:$0xff] %v1390
    %s1395 = scalar_lea.vmem [#allocation1], 1
    %1396 = vst [vmem:[%s1395] ss:$9 sm:$0xff] %v1391
    %v1397 = vld [vmem:[#allocation1] sm:$0xff]
    %v1398 = vld [vmem:[#allocation1 + $0x9] sm:$0xff]
    %v1401 = vadd.f32 %v1367, %v1397
    %v1402 = vadd.f32 %v1368, %v1398
    %1403 = vst [vmem:[#allocation1] ss:$9 sm:$0xff] %v1049
    %s1404 = scalar_lea.vmem [#allocation1], 1
    %1405 = vst [vmem:[%s1404] ss:$9 sm:$0xff] %v1050
    %v1406 = vld [vmem:[#allocation1] sm:$0xff]
    %v1407 = vld [vmem:[#allocation1 + $0x9] sm:$0xff]
    %v1408 = vld [vmem:[#allocation1 + $0x12] sm:$0xff]
    %1409 = vrot.lane.b32.xlu0 %v1406, 1
    %v1410 = vpop.permute.xlu0 %1409
    %1411 = vrot.lane.b32.xlu0 %v1407, 1
    %v1412 = vpop.permute.xlu0 %1411
    %1413 = vrot.lane.b32.xlu0 %v1408, 1
    %v1414 = vpop.permute.xlu0 %1413
    %v1415 = vsel %vm1086, %v1410, %v1412
    %v1416 = vsel %vm1086, %v1412, %v1414
    %1419 = vst [vmem:[#allocation1] ss:$9 sm:$0xff] %v1051
    %s1420 = scalar_lea.vmem [#allocation1], 1
    %1421 = vst [vmem:[%s1420] ss:$9 sm:$0xff] %v1052
    %v1422 = vld [vmem:[#allocation1] sm:$0xff]
    %v1423 = vld [vmem:[#allocation1 + $0x9] sm:$0xff]
    %v1424 = vld [vmem:[#allocation1 + $0x12] sm:$0xff]
    %1425 = vrot.lane.b32.xlu0 %v1422, 127
    %v1426 = vpop.permute.xlu0 %1425
    %1427 = vrot.lane.b32.xlu0 %v1423, 127
    %v1428 = vpop.permute.xlu0 %1427
    %1429 = vrot.lane.b32.xlu0 %v1424, 127
    %v1430 = vpop.permute.xlu0 %1429
    %v1431 = vsel %vm1067, %v1426, %v1428
    %v1432 = vsel %vm1067, %v1428, %v1430
    %v1435 = vsel %vm118, %v1415, %v1431
    %v1436 = vsel %vm119, %v1416, %v1432
    %s1437 = sld [smem:[#allocation9 + $0x28]]
    %v1438 = vstv %s1437
    %v1439 = vmul.f32 %v1438, %v1435
    %v1440 = vmul.f32 %v1438, %v1436
    %v1441 = vadd.f32 %v1386, %v1439
    %v1442 = vadd.f32 %v1387, %v1440
    %s1443 = sld [smem:[#allocation9 + $0x29]]
    %v1444 = vstv %s1443
    %v1445 = vmul.f32 %v1444, %v1435
    %v1446 = vmul.f32 %v1444, %v1436
    %v1447 = vadd.f32 %v1401, %v1445
    %v1448 = vadd.f32 %v1402, %v1446
    %1449 = vst [vmem:[#allocation1] ss:$9 sm:$0xff] %v1105
    %s1450 = scalar_lea.vmem [#allocation1], 1
    %1451 = vst [vmem:[%s1450] ss:$9 sm:$0xff] %v1106
    %v1452 = vld [vmem:[#allocation1] sm:$0xff]
    %v1453 = vld [vmem:[#allocation1 + $0x9] sm:$0xff]
    %v1454 = vld [vmem:[#allocation1 + $0x12] sm:$0xff]
    %1455 = vrot.lane.b32.xlu0 %v1452, 1
    %v1456 = vpop.permute.xlu0 %1455
    %1457 = vrot.lane.b32.xlu0 %v1453, 1
    %v1458 = vpop.permute.xlu0 %1457
    %1459 = vrot.lane.b32.xlu0 %v1454, 1
    %v1460 = vpop.permute.xlu0 %1459
    %v1461 = vsel %vm1086, %v1456, %v1458
    %v1462 = vsel %vm1086, %v1458, %v1460
    %1465 = vst [vmem:[#allocation1] ss:$9 sm:$0xff] %v1107
    %s1466 = scalar_lea.vmem [#allocation1], 1
    %1467 = vst [vmem:[%s1466] ss:$9 sm:$0xff] %v1108
    %v1468 = vld [vmem:[#allocation1] sm:$0xff]
    %v1469 = vld [vmem:[#allocation1 + $0x9] sm:$0xff]
    %v1470 = vld [vmem:[#allocation1 + $0x12] sm:$0xff]
    %1471 = vrot.lane.b32.xlu0 %v1468, 127
    %v1472 = vpop.permute.xlu0 %1471
    %1473 = vrot.lane.b32.xlu0 %v1469, 127
    %v1474 = vpop.permute.xlu0 %1473
    %1475 = vrot.lane.b32.xlu0 %v1470, 127
    %v1476 = vpop.permute.xlu0 %1475
    %v1477 = vsel %vm1067, %v1472, %v1474
    %v1478 = vsel %vm1067, %v1474, %v1476
    %v1481 = vsel %vm118, %v1461, %v1477
    %v1482 = vsel %vm119, %v1462, %v1478
    %s1483 = sld [smem:[#allocation9 + $0x2a]]
    %v1484 = vstv %s1483
    %v1485 = vmul.f32 %v1484, %v1481
    %v1486 = vmul.f32 %v1484, %v1482
    %v1487 = vadd.f32 %v1441, %v1485
    %v1488 = vadd.f32 %v1442, %v1486
    %s1489 = sld [smem:[#allocation9 + $0x2b]]
    %v1490 = vstv %s1489
    %v1491 = vmul.f32 %v1490, %v1481
    %v1492 = vmul.f32 %v1490, %v1482
    %v1493 = vadd.f32 %v1447, %v1491
    %v1494 = vadd.f32 %v1448, %v1492
    %1495 = vst [vmem:[#allocation1] ss:$9 sm:$0xff] %v1159
    %s1496 = scalar_lea.vmem [#allocation1], 1
    %1497 = vst [vmem:[%s1496] ss:$9 sm:$0xff] %v1160
    %v1498 = vld [vmem:[#allocation1] sm:$0xff]
    %v1499 = vld [vmem:[#allocation1 + $0x9] sm:$0xff]
    %v1500 = vld [vmem:[#allocation1 + $0x12] sm:$0xff]
    %1501 = vrot.lane.b32.xlu0 %v1498, 1
    %v1502 = vpop.permute.xlu0 %1501
    %1503 = vrot.lane.b32.xlu0 %v1499, 1
    %v1504 = vpop.permute.xlu0 %1503
    %1505 = vrot.lane.b32.xlu0 %v1500, 1
    %v1506 = vpop.permute.xlu0 %1505
    %v1507 = vsel %vm1086, %v1502, %v1504
    %v1508 = vsel %vm1086, %v1504, %v1506
    %1511 = vst [vmem:[#allocation1] ss:$9 sm:$0xff] %v1161
    %s1512 = scalar_lea.vmem [#allocation1], 1
    %1513 = vst [vmem:[%s1512] ss:$9 sm:$0xff] %v1162
    %v1514 = vld [vmem:[#allocation1] sm:$0xff]
    %v1515 = vld [vmem:[#allocation1 + $0x9] sm:$0xff]
    %v1516 = vld [vmem:[#allocation1 + $0x12] sm:$0xff]
    %1517 = vrot.lane.b32.xlu0 %v1514, 127
    %v1518 = vpop.permute.xlu0 %1517
    %1519 = vrot.lane.b32.xlu0 %v1515, 127
    %v1520 = vpop.permute.xlu0 %1519
    %1521 = vrot.lane.b32.xlu0 %v1516, 127
    %v1522 = vpop.permute.xlu0 %1521
    %v1523 = vsel %vm1067, %v1518, %v1520
    %v1524 = vsel %vm1067, %v1520, %v1522
    %v1527 = vsel %vm118, %v1507, %v1523
    %v1528 = vsel %vm119, %v1508, %v1524
    %s1529 = sld [smem:[#allocation9 + $0x2c]]
    %v1530 = vstv %s1529
    %v1531 = vmul.f32 %v1530, %v1527
    %v1532 = vmul.f32 %v1530, %v1528
    %v1533 = vadd.f32 %v1487, %v1531
    %v1534 = vadd.f32 %v1488, %v1532
    %s1535 = sld [smem:[#allocation9 + $0x2d]]
    %v1536 = vstv %s1535
    %v1537 = vmul.f32 %v1536, %v1527
    %v1538 = vmul.f32 %v1536, %v1528
    %v1539 = vadd.f32 %v1493, %v1537
    %v1540 = vadd.f32 %v1494, %v1538
    %1541 = vst [vmem:[#allocation1] ss:$9 sm:$0xff] %v1213
    %s1542 = scalar_lea.vmem [#allocation1], 1
    %1543 = vst [vmem:[%s1542] ss:$9 sm:$0xff] %v1214
    %v1544 = vld [vmem:[#allocation1] sm:$0xff]
    %v1545 = vld [vmem:[#allocation1 + $0x9] sm:$0xff]
    %v1546 = vld [vmem:[#allocation1 + $0x12] sm:$0xff]
    %1547 = vrot.lane.b32.xlu0 %v1544, 1
    %v1548 = vpop.permute.xlu0 %1547
    %1549 = vrot.lane.b32.xlu0 %v1545, 1
    %v1550 = vpop.permute.xlu0 %1549
    %1551 = vrot.lane.b32.xlu0 %v1546, 1
    %v1552 = vpop.permute.xlu0 %1551
    %v1553 = vsel %vm1086, %v1548, %v1550
    %v1554 = vsel %vm1086, %v1550, %v1552
    %1557 = vst [vmem:[#allocation1] ss:$9 sm:$0xff] %v1215
    %s1558 = scalar_lea.vmem [#allocation1], 1
    %1559 = vst [vmem:[%s1558] ss:$9 sm:$0xff] %v1216
    %v1560 = vld [vmem:[#allocation1] sm:$0xff]
    %v1561 = vld [vmem:[#allocation1 + $0x9] sm:$0xff]
    %v1562 = vld [vmem:[#allocation1 + $0x12] sm:$0xff]
    %1563 = vrot.lane.b32.xlu0 %v1560, 127
    %v1564 = vpop.permute.xlu0 %1563
    %1565 = vrot.lane.b32.xlu0 %v1561, 127
    %v1566 = vpop.permute.xlu0 %1565
    %1567 = vrot.lane.b32.xlu0 %v1562, 127
    %v1568 = vpop.permute.xlu0 %1567
    %v1569 = vsel %vm1067, %v1564, %v1566
    %v1570 = vsel %vm1067, %v1566, %v1568
    %v1573 = vsel %vm118, %v1553, %v1569
    %v1574 = vsel %vm119, %v1554, %v1570
    %s1575 = sld [smem:[#allocation9 + $0x2e]]
    %v1576 = vstv %s1575
    %v1577 = vmul.f32 %v1576, %v1573
    %v1578 = vmul.f32 %v1576, %v1574
    %v1579 = vadd.f32 %v1533, %v1577
    %v1580 = vadd.f32 %v1534, %v1578
    %s1581 = sld [smem:[#allocation9 + $0x2f]]
    %v1582 = vstv %s1581
    %v1583 = vmul.f32 %v1582, %v1573
    %v1584 = vmul.f32 %v1582, %v1574
    %v1585 = vadd.f32 %v1539, %v1583
    %v1586 = vadd.f32 %v1540, %v1584
    %v1587 = vsel %vm114, %v163, %v205
    %v1588 = vsel %vm115, %v164, %v206
    %s1589 = sld [smem:[#allocation9 + $0x30]]
    %v1590 = vstv %s1589
    %v1591 = vmul.f32 %v1590, %v1587
    %v1592 = vmul.f32 %v1590, %v1588
    %v1593 = vadd.f32 %v1591, 0.0
    %v1594 = vadd.f32 %v1592, 0.0
    %s1595 = sld [smem:[#allocation9 + $0x31]]
    %v1596 = vstv %s1595
    %v1597 = vmul.f32 %v1596, %v1587
    %v1598 = vmul.f32 %v1596, %v1588
    %v1599 = vadd.f32 %v1597, 0.0
    %v1600 = vadd.f32 %v1598, 0.0
    %v1601 = vsel %vm114, %v259, %v299
    %v1602 = vsel %vm115, %v260, %v300
    %s1603 = sld [smem:[#allocation9 + $0x32]]
    %v1604 = vstv %s1603
    %v1605 = vmul.f32 %v1604, %v1601
    %v1606 = vmul.f32 %v1604, %v1602
    %v1607 = vadd.f32 %v1593, %v1605
    %v1608 = vadd.f32 %v1594, %v1606
    %s1609 = sld [smem:[#allocation9 + $0x33]]
    %v1610 = vstv %s1609
    %v1611 = vmul.f32 %v1610, %v1601
    %v1612 = vmul.f32 %v1610, %v1602
    %v1613 = vadd.f32 %v1599, %v1611
    %v1614 = vadd.f32 %v1600, %v1612
    %v1615 = vsel %vm114, %v353, %v393
    %v1616 = vsel %vm115, %v354, %v394
    %s1617 = sld [smem:[#allocation9 + $0x34]]
    %v1618 = vstv %s1617
    %v1619 = vmul.f32 %v1618, %v1615
    %v1620 = vmul.f32 %v1618, %v1616
    %v1621 = vadd.f32 %v1607, %v1619
    %v1622 = vadd.f32 %v1608, %v1620
    %s1623 = sld [smem:[#allocation9 + $0x35]]
    %v1624 = vstv %s1623
    %v1625 = vmul.f32 %v1624, %v1615
    %v1626 = vmul.f32 %v1624, %v1616
    %v1627 = vadd.f32 %v1613, %v1625
    %v1628 = vadd.f32 %v1614, %v1626
    %v1629 = vsel %vm114, %v447, %v487
    %v1630 = vsel %vm115, %v448, %v488
    %s1631 = sld [smem:[#allocation9 + $0x36]]
    %v1632 = vstv %s1631
    %v1633 = vmul.f32 %v1632, %v1629
    %v1634 = vmul.f32 %v1632, %v1630
    %v1635 = vadd.f32 %v1621, %v1633
    %v1636 = vadd.f32 %v1622, %v1634
    %s1637 = sld [smem:[#allocation9 + $0x37]]
    %v1638 = vstv %s1637
    %v1639 = vmul.f32 %v1638, %v1629
    %v1640 = vmul.f32 %v1638, %v1630
    %v1641 = vadd.f32 %v1627, %v1639
    %v1642 = vadd.f32 %v1628, %v1640
    %1643 = vst [vmem:[#allocation1] ss:$9 sm:$0xff] %v503
    %s1644 = scalar_lea.vmem [#allocation1], 1
    %1645 = vst [vmem:[%s1644] ss:$9 sm:$0xff] %v504
    %v1646 = vld [vmem:[#allocation1] sm:$0xff]
    %v1647 = vld [vmem:[#allocation1 + $0x9] sm:$0xff]
    %v1648 = vld [vmem:[#allocation1 + $0x12] sm:$0xff]
    %1649 = vrot.lane.b32.xlu0 %v1646, 16
    %v1650 = vpop.permute.xlu0 %1649
    %1651 = vrot.lane.b32.xlu0 %v1647, 16
    %v1652 = vpop.permute.xlu0 %1651
    %1653 = vrot.lane.b32.xlu0 %v1648, 16
    %v1654 = vpop.permute.xlu0 %1653
    %v1655 = vsel %vm540, %v1650, %v1652
    %v1656 = vsel %vm540, %v1652, %v1654
    %1659 = vst [vmem:[#allocation1] ss:$9 sm:$0xff] %v505
    %s1660 = scalar_lea.vmem [#allocation1], 1
    %1661 = vst [vmem:[%s1660] ss:$9 sm:$0xff] %v506
    %v1662 = vld [vmem:[#allocation1] sm:$0xff]
    %v1663 = vld [vmem:[#allocation1 + $0x9] sm:$0xff]
    %v1664 = vld [vmem:[#allocation1 + $0x12] sm:$0xff]
    %1665 = vrot.lane.b32.xlu0 %v1662, 112
    %v1666 = vpop.permute.xlu0 %1665
    %1667 = vrot.lane.b32.xlu0 %v1663, 112
    %v1668 = vpop.permute.xlu0 %1667
    %1669 = vrot.lane.b32.xlu0 %v1664, 112
    %v1670 = vpop.permute.xlu0 %1669
    %v1671 = vsel %vm521, %v1666, %v1668
    %v1672 = vsel %vm521, %v1668, %v1670
    %v1675 = vsel %vm114, %v1655, %v1671
    %v1676 = vsel %vm115, %v1656, %v1672
    %s1677 = sld [smem:[#allocation9 + $0x38]]
    %v1678 = vstv %s1677
    %v1679 = vmul.f32 %v1678, %v1675
    %v1680 = vmul.f32 %v1678, %v1676
    %v1681 = vadd.f32 %v1635, %v1679
    %v1682 = vadd.f32 %v1636, %v1680
    %s1683 = sld [smem:[#allocation9 + $0x39]]
    %v1684 = vstv %s1683
    %v1685 = vmul.f32 %v1684, %v1675
    %v1686 = vmul.f32 %v1684, %v1676
    %v1687 = vadd.f32 %v1641, %v1685
    %v1688 = vadd.f32 %v1642, %v1686
    %1689 = vst [vmem:[#allocation1] ss:$9 sm:$0xff] %v559
    %s1690 = scalar_lea.vmem [#allocation1], 1
    %1691 = vst [vmem:[%s1690] ss:$9 sm:$0xff] %v560
    %v1692 = vld [vmem:[#allocation1] sm:$0xff]
    %v1693 = vld [vmem:[#allocation1 + $0x9] sm:$0xff]
    %v1694 = vld [vmem:[#allocation1 + $0x12] sm:$0xff]
    %1695 = vrot.lane.b32.xlu0 %v1692, 16
    %v1696 = vpop.permute.xlu0 %1695
    %1697 = vrot.lane.b32.xlu0 %v1693, 16
    %v1698 = vpop.permute.xlu0 %1697
    %1699 = vrot.lane.b32.xlu0 %v1694, 16
    %v1700 = vpop.permute.xlu0 %1699
    %v1701 = vsel %vm540, %v1696, %v1698
    %v1702 = vsel %vm540, %v1698, %v1700
    %1705 = vst [vmem:[#allocation1] ss:$9 sm:$0xff] %v561
    %s1706 = scalar_lea.vmem [#allocation1], 1
    %1707 = vst [vmem:[%s1706] ss:$9 sm:$0xff] %v562
    %v1708 = vld [vmem:[#allocation1] sm:$0xff]
    %v1709 = vld [vmem:[#allocation1 + $0x9] sm:$0xff]
    %v1710 = vld [vmem:[#allocation1 + $0x12] sm:$0xff]
    %1711 = vrot.lane.b32.xlu0 %v1708, 112
    %v1712 = vpop.permute.xlu0 %1711
    %1713 = vrot.lane.b32.xlu0 %v1709, 112
    %v1714 = vpop.permute.xlu0 %1713
    %1715 = vrot.lane.b32.xlu0 %v1710, 112
    %v1716 = vpop.permute.xlu0 %1715
    %v1717 = vsel %vm521, %v1712, %v1714
    %v1718 = vsel %vm521, %v1714, %v1716
    %v1721 = vsel %vm114, %v1701, %v1717
    %v1722 = vsel %vm115, %v1702, %v1718
    %s1723 = sld [smem:[#allocation9 + $0x3a]]
    %v1724 = vstv %s1723
    %v1725 = vmul.f32 %v1724, %v1721
    %v1726 = vmul.f32 %v1724, %v1722
    %v1727 = vadd.f32 %v1681, %v1725
    %v1728 = vadd.f32 %v1682, %v1726
    %s1729 = sld [smem:[#allocation9 + $0x3b]]
    %v1730 = vstv %s1729
    %v1731 = vmul.f32 %v1730, %v1721
    %v1732 = vmul.f32 %v1730, %v1722
    %v1733 = vadd.f32 %v1687, %v1731
    %v1734 = vadd.f32 %v1688, %v1732
    %1735 = vst [vmem:[#allocation1] ss:$9 sm:$0xff] %v613
    %s1736 = scalar_lea.vmem [#allocation1], 1
    %1737 = vst [vmem:[%s1736] ss:$9 sm:$0xff] %v614
    %v1738 = vld [vmem:[#allocation1] sm:$0xff]
    %v1739 = vld [vmem:[#allocation1 + $0x9] sm:$0xff]
    %v1740 = vld [vmem:[#allocation1 + $0x12] sm:$0xff]
    %1741 = vrot.lane.b32.xlu0 %v1738, 16
    %v1742 = vpop.permute.xlu0 %1741
    %1743 = vrot.lane.b32.xlu0 %v1739, 16
    %v1744 = vpop.permute.xlu0 %1743
    %1745 = vrot.lane.b32.xlu0 %v1740, 16
    %v1746 = vpop.permute.xlu0 %1745
    %v1747 = vsel %vm540, %v1742, %v1744
    %v1748 = vsel %vm540, %v1744, %v1746
    %1751 = vst [vmem:[#allocation1] ss:$9 sm:$0xff] %v615
    %s1752 = scalar_lea.vmem [#allocation1], 1
    %1753 = vst [vmem:[%s1752] ss:$9 sm:$0xff] %v616
    %v1754 = vld [vmem:[#allocation1] sm:$0xff]
    %v1755 = vld [vmem:[#allocation1 + $0x9] sm:$0xff]
    %v1756 = vld [vmem:[#allocation1 + $0x12] sm:$0xff]
    %1757 = vrot.lane.b32.xlu0 %v1754, 112
    %v1758 = vpop.permute.xlu0 %1757
    %1759 = vrot.lane.b32.xlu0 %v1755, 112
    %v1760 = vpop.permute.xlu0 %1759
    %1761 = vrot.lane.b32.xlu0 %v1756, 112
    %v1762 = vpop.permute.xlu0 %1761
    %v1763 = vsel %vm521, %v1758, %v1760
    %v1764 = vsel %vm521, %v1760, %v1762
    %v1767 = vsel %vm114, %v1747, %v1763
    %v1768 = vsel %vm115, %v1748, %v1764
    %s1769 = sld [smem:[#allocation9 + $0x3c]]
    %v1770 = vstv %s1769
    %v1771 = vmul.f32 %v1770, %v1767
    %v1772 = vmul.f32 %v1770, %v1768
    %v1773 = vadd.f32 %v1727, %v1771
    %v1774 = vadd.f32 %v1728, %v1772
    %s1775 = sld [smem:[#allocation9 + $0x3d]]
    %v1776 = vstv %s1775
    %v1777 = vmul.f32 %v1776, %v1767
    %v1778 = vmul.f32 %v1776, %v1768
    %v1779 = vadd.f32 %v1733, %v1777
    %v1780 = vadd.f32 %v1734, %v1778
    %1781 = vst [vmem:[#allocation1] ss:$9 sm:$0xff] %v667
    %s1782 = scalar_lea.vmem [#allocation1], 1
    %1783 = vst [vmem:[%s1782] ss:$9 sm:$0xff] %v668
    %v1784 = vld [vmem:[#allocation1] sm:$0xff]
    %v1785 = vld [vmem:[#allocation1 + $0x9] sm:$0xff]
    %v1786 = vld [vmem:[#allocation1 + $0x12] sm:$0xff]
    %1787 = vrot.lane.b32.xlu0 %v1784, 16
    %v1788 = vpop.permute.xlu0 %1787
    %1789 = vrot.lane.b32.xlu0 %v1785, 16
    %v1790 = vpop.permute.xlu0 %1789
    %1791 = vrot.lane.b32.xlu0 %v1786, 16
    %v1792 = vpop.permute.xlu0 %1791
    %v1793 = vsel %vm540, %v1788, %v1790
    %v1794 = vsel %vm540, %v1790, %v1792
    %1797 = vst [vmem:[#allocation1] ss:$9 sm:$0xff] %v669
    %s1798 = scalar_lea.vmem [#allocation1], 1
    %1799 = vst [vmem:[%s1798] ss:$9 sm:$0xff] %v670
    %v1800 = vld [vmem:[#allocation1] sm:$0xff]
    %v1801 = vld [vmem:[#allocation1 + $0x9] sm:$0xff]
    %v1802 = vld [vmem:[#allocation1 + $0x12] sm:$0xff]
    %1803 = vrot.lane.b32.xlu0 %v1800, 112
    %v1804 = vpop.permute.xlu0 %1803
    %1805 = vrot.lane.b32.xlu0 %v1801, 112
    %v1806 = vpop.permute.xlu0 %1805
    %1807 = vrot.lane.b32.xlu0 %v1802, 112
    %v1808 = vpop.permute.xlu0 %1807
    %v1809 = vsel %vm521, %v1804, %v1806
    %v1810 = vsel %vm521, %v1806, %v1808
    %v1813 = vsel %vm114, %v1793, %v1809
    %v1814 = vsel %vm115, %v1794, %v1810
    %s1815 = sld [smem:[#allocation9 + $0x3e]]
    %v1816 = vstv %s1815
    %v1817 = vmul.f32 %v1816, %v1813
    %v1818 = vmul.f32 %v1816, %v1814
    %v1819 = vadd.f32 %v1773, %v1817
    %v1820 = vadd.f32 %v1774, %v1818
    %s1821 = sld [smem:[#allocation9 + $0x3f]]
    %v1822 = vstv %s1821
    %v1823 = vmul.f32 %v1822, %v1813
    %v1824 = vmul.f32 %v1822, %v1814
    %v1825 = vadd.f32 %v1779, %v1823
    %v1826 = vadd.f32 %v1780, %v1824
    %v1827 = vsel %vm114, %v753, %v787
    %v1828 = vsel %vm115, %v754, %v788
    %s1829 = sld [smem:[#allocation9 + $0x40]]
    %v1830 = vstv %s1829
    %v1831 = vmul.f32 %v1830, %v1827
    %v1832 = vmul.f32 %v1830, %v1828
    %v1833 = vadd.f32 %v1819, %v1831
    %v1834 = vadd.f32 %v1820, %v1832
    %s1835 = sld [smem:[#allocation9 + $0x41]]
    %v1836 = vstv %s1835
    %v1837 = vmul.f32 %v1836, %v1827
    %v1838 = vmul.f32 %v1836, %v1828
    %v1839 = vadd.f32 %v1825, %v1837
    %v1840 = vadd.f32 %v1826, %v1838
    %v1841 = vsel %vm114, %v835, %v869
    %v1842 = vsel %vm115, %v836, %v870
    %s1843 = sld [smem:[#allocation9 + $0x42]]
    %v1844 = vstv %s1843
    %v1845 = vmul.f32 %v1844, %v1841
    %v1846 = vmul.f32 %v1844, %v1842
    %v1847 = vadd.f32 %v1833, %v1845
    %v1848 = vadd.f32 %v1834, %v1846
    %s1849 = sld [smem:[#allocation9 + $0x43]]
    %v1850 = vstv %s1849
    %v1851 = vmul.f32 %v1850, %v1841
    %v1852 = vmul.f32 %v1850, %v1842
    %v1853 = vadd.f32 %v1839, %v1851
    %v1854 = vadd.f32 %v1840, %v1852
    %v1855 = vsel %vm114, %v917, %v951
    %v1856 = vsel %vm115, %v918, %v952
    %s1857 = sld [smem:[#allocation9 + $0x44]]
    %v1858 = vstv %s1857
    %v1859 = vmul.f32 %v1858, %v1855
    %v1860 = vmul.f32 %v1858, %v1856
    %v1861 = vadd.f32 %v1847, %v1859
    %v1862 = vadd.f32 %v1848, %v1860
    %s1863 = sld [smem:[#allocation9 + $0x45]]
    %v1864 = vstv %s1863
    %v1865 = vmul.f32 %v1864, %v1855
    %v1866 = vmul.f32 %v1864, %v1856
    %v1867 = vadd.f32 %v1853, %v1865
    %v1868 = vadd.f32 %v1854, %v1866
    %v1869 = vsel %vm114, %v999, %v1033
    %v1870 = vsel %vm115, %v1000, %v1034
    %s1871 = sld [smem:[#allocation9 + $0x46]]
    %v1872 = vstv %s1871
    %v1873 = vmul.f32 %v1872, %v1869
    %v1874 = vmul.f32 %v1872, %v1870
    %v1875 = vadd.f32 %v1861, %v1873
    %v1876 = vadd.f32 %v1862, %v1874
    %s1877 = sld [smem:[#allocation9 + $0x47]]
    %v1878 = vstv %s1877
    %v1879 = vmul.f32 %v1878, %v1869
    %v1880 = vmul.f32 %v1878, %v1870
    %v1881 = vadd.f32 %v1867, %v1879
    %v1882 = vadd.f32 %v1868, %v1880
    %v1883 = vadd.f32 %v1041, %v1579
    %v1884 = vadd.f32 %v1042, %v1580
    %v1885 = vadd.f32 %v1883, %v1875
    %v1886 = vadd.f32 %v1884, %v1876
    %s1887 = sld [smem:[#allocation10]]
    %v1888 = vstv %s1887
    %v1889 = vadd.f32 %v1885, %v1888
    %v1890 = vadd.f32 %v1886, %v1888
    %v1891 = vmax.f32 %v1889, 0.0
    %v1892 = vmax.f32 %v1890, 0.0
    %v1895 = vrot.slane %v1892, 7
    %vm1896 = vcmask 1040384
    %v1897 = vsel %vm1896, %v1891, %v1895
    %vm1898 = vcmask 1041409
    %v1899 = vsel %vm1898, %v1891, %v1895
    %v1900 = vrot.slane %v1899, 1
    %v1903 = vlaneseq
    %vm1904 = vcmp.ge.s32.totalorder %v1903, 0
    %vm1905 = vcmp.lt.s32.totalorder %v1903, 256
    %vm1906 = vmand %vm1904, %vm1905
    %s1907 = scalar_lea.vmem [#allocation3], 2
    %1908 = vst.msk [vmem:[%s1907] ss:$2 sm:$0x3] %vm1906, %v1897
    %s1909 = scalar_lea.vmem [#allocation3], 10
    %1910 = vst.msk [vmem:[%s1909] ss:$2 sm:$0x3] %vm1906, %v1900
    %v1911 = vadd.f32 %v1047, %v1585
    %v1912 = vadd.f32 %v1048, %v1586
    %v1913 = vadd.f32 %v1911, %v1881
    %v1914 = vadd.f32 %v1912, %v1882
    %s1915 = sld [smem:[#allocation10 + $0x1]]
    %v1916 = vstv %s1915
    %v1917 = vadd.f32 %v1913, %v1916
    %v1918 = vadd.f32 %v1914, %v1916
    %v1919 = vmax.f32 %v1917, 0.0
    %v1920 = vmax.f32 %v1918, 0.0
    %v1923 = vrot.slane %v1920, 7
    %v1924 = vsel %vm1896, %v1919, %v1923
    %v1925 = vsel %vm1898, %v1919, %v1923
    %v1926 = vrot.slane %v1925, 1
    %s1929 = scalar_lea.vmem [#allocation3], 3
    %1930 = vst.msk [vmem:[%s1929] ss:$2 sm:$0x3] %vm1906, %v1924
    %s1931 = scalar_lea.vmem [#allocation3], 11
    %1932 = vst.msk [vmem:[%s1931] ss:$2 sm:$0x3] %vm1906, %v1926
    %v1933 = vld [vmem:[#allocation3] ss:$2 sm:$0x7]
    %s1934 = scalar_lea.vmem [#allocation3], 8
    %v1935 = vld [vmem:[%s1934] ss:$2 sm:$0x7]
    %1938 = vst [vmem:[#allocation1] ss:$9 sm:$0xff] %v1933
    %s1939 = scalar_lea.vmem [#allocation1], 1
    %1940 = vst [vmem:[%s1939] ss:$9 sm:$0xff] %v1935
    %v1941 = vld [vmem:[#allocation1] sm:$0xff]
    %v1942 = vld [vmem:[#allocation1 + $0x9] sm:$0xff]
    %v1943 = vld [vmem:[#allocation1 + $0x12] sm:$0xff]
    %1944 = vrot.lane.b32.xlu0 %v1941, 15
    %v1945 = vpop.permute.xlu0 %1944
    %1946 = vrot.lane.b32.xlu0 %v1942, 15
    %v1947 = vpop.permute.xlu0 %1946
    %1948 = vrot.lane.b32.xlu0 %v1943, 15
    %v1949 = vpop.permute.xlu0 %1948
    %v1950 = vsel %vm141, %v1945, %v1947
    %v1951 = vsel %vm141, %v1947, %v1949
    %1954 = vst [vmem:[#allocation1] ss:$9 sm:$0xff] %v1933
    %s1955 = scalar_lea.vmem [#allocation1], 1
    %1956 = vst [vmem:[%s1955] ss:$9 sm:$0xff] %v1935
    %v1957 = vld [vmem:[#allocation1] sm:$0xff]
    %v1958 = vld [vmem:[#allocation1 + $0x9] sm:$0xff]
    %v1959 = vld [vmem:[#allocation1 + $0x12] sm:$0xff]
    %1960 = vrot.lane.b32.xlu0 %v1957, 17
    %v1961 = vpop.permute.xlu0 %1960
    %1962 = vrot.lane.b32.xlu0 %v1958, 17
    %v1963 = vpop.permute.xlu0 %1962
    %1964 = vrot.lane.b32.xlu0 %v1959, 17
    %v1965 = vpop.permute.xlu0 %1964
    %v1966 = vsel %vm158, %v1961, %v1963
    %v1967 = vsel %vm158, %v1963, %v1965
    %v1970 = vsel %vm116, %v1950, %v1966
    %v1971 = vsel %vm117, %v1951, %v1967
    %s1972 = scalar_lea.vmem [#allocation3], 2
    %v1973 = vld [vmem:[%s1972] ss:$2 sm:$0x7]
    %s1974 = scalar_lea.vmem [#allocation3], 10
    %v1975 = vld [vmem:[%s1974] ss:$2 sm:$0x7]
    %1978 = vst [vmem:[#allocation1] ss:$9 sm:$0xff] %v1973
    %s1979 = scalar_lea.vmem [#allocation1], 1
    %1980 = vst [vmem:[%s1979] ss:$9 sm:$0xff] %v1975
    %v1981 = vld [vmem:[#allocation1] sm:$0xff]
    %v1982 = vld [vmem:[#allocation1 + $0x9] sm:$0xff]
    %v1983 = vld [vmem:[#allocation1 + $0x12] sm:$0xff]
    %1984 = vrot.lane.b32.xlu0 %v1981, 111
    %v1985 = vpop.permute.xlu0 %1984
    %1986 = vrot.lane.b32.xlu0 %v1982, 111
    %v1987 = vpop.permute.xlu0 %1986
    %1988 = vrot.lane.b32.xlu0 %v1983, 111
    %v1989 = vpop.permute.xlu0 %1988
    %v1990 = vsel %vm183, %v1985, %v1987
    %v1991 = vsel %vm183, %v1987, %v1989
    %1994 = vst [vmem:[#allocation1] ss:$9 sm:$0xff] %v1973
    %s1995 = scalar_lea.vmem [#allocation1], 1
    %1996 = vst [vmem:[%s1995] ss:$9 sm:$0xff] %v1975
    %v1997 = vld [vmem:[#allocation1] sm:$0xff]
    %v1998 = vld [vmem:[#allocation1 + $0x9] sm:$0xff]
    %v1999 = vld [vmem:[#allocation1 + $0x12] sm:$0xff]
    %2000 = vrot.lane.b32.xlu0 %v1997, 113
    %v2001 = vpop.permute.xlu0 %2000
    %2002 = vrot.lane.b32.xlu0 %v1998, 113
    %v2003 = vpop.permute.xlu0 %2002
    %2004 = vrot.lane.b32.xlu0 %v1999, 113
    %v2005 = vpop.permute.xlu0 %2004
    %v2006 = vsel %vm200, %v2001, %v2003
    %v2007 = vsel %vm200, %v2003, %v2005
    %v2010 = vsel %vm116, %v1990, %v2006
    %v2011 = vsel %vm117, %v1991, %v2007
    %v2012 = vsel %vm112, %v2010, %v1970
    %v2013 = vsel %vm113, %v2011, %v1971
    %s2014 = sld [smem:[#allocation11]]
    %v2015 = vstv %s2014
    %v2016 = vmul.f32 %v2015, %v2012
    %v2017 = vmul.f32 %v2015, %v2013
    %v2018 = vadd.f32 %v2016, 0.0
    %v2019 = vadd.f32 %v2017, 0.0
    %s2020 = sld [smem:[#allocation11 + $0x1]]
    %v2021 = vstv %s2020
    %v2022 = vmul.f32 %v2021, %v2012
    %v2023 = vmul.f32 %v2021, %v2013
    %v2024 = vadd.f32 %v2022, 0.0
    %v2025 = vadd.f32 %v2023, 0.0
    %s2026 = sld [smem:[#allocation11 + $0x2]]
    %v2027 = vstv %s2026
    %v2028 = vmul.f32 %v2027, %v2012
    %v2029 = vmul.f32 %v2027, %v2013
    %v2030 = vadd.f32 %v2028, 0.0
    %v2031 = vadd.f32 %v2029, 0.0
    %s2032 = sld [smem:[#allocation11 + $0x3]]
    %v2033 = vstv %s2032
    %v2034 = vmul.f32 %v2033, %v2012
    %v2035 = vmul.f32 %v2033, %v2013
    %v2036 = vadd.f32 %v2034, 0.0
    %v2037 = vadd.f32 %v2035, 0.0
    %s2038 = scalar_lea.vmem [#allocation3], 1
    %v2039 = vld [vmem:[%s2038] ss:$2 sm:$0x7]
    %s2040 = scalar_lea.vmem [#allocation3], 9
    %v2041 = vld [vmem:[%s2040] ss:$2 sm:$0x7]
    %2044 = vst [vmem:[#allocation1] ss:$9 sm:$0xff] %v2039
    %s2045 = scalar_lea.vmem [#allocation1], 1
    %2046 = vst [vmem:[%s2045] ss:$9 sm:$0xff] %v2041
    %v2047 = vld [vmem:[#allocation1] sm:$0xff]
    %v2048 = vld [vmem:[#allocation1 + $0x9] sm:$0xff]
    %v2049 = vld [vmem:[#allocation1 + $0x12] sm:$0xff]
    %2050 = vrot.lane.b32.xlu0 %v2047, 15
    %v2051 = vpop.permute.xlu0 %2050
    %2052 = vrot.lane.b32.xlu0 %v2048, 15
    %v2053 = vpop.permute.xlu0 %2052
    %2054 = vrot.lane.b32.xlu0 %v2049, 15
    %v2055 = vpop.permute.xlu0 %2054
    %v2056 = vsel %vm141, %v2051, %v2053
    %v2057 = vsel %vm141, %v2053, %v2055
    %2060 = vst [vmem:[#allocation1] ss:$9 sm:$0xff] %v2039
    %s2061 = scalar_lea.vmem [#allocation1], 1
    %2062 = vst [vmem:[%s2061] ss:$9 sm:$0xff] %v2041
    %v2063 = vld [vmem:[#allocation1] sm:$0xff]
    %v2064 = vld [vmem:[#allocation1 + $0x9] sm:$0xff]
    %v2065 = vld [vmem:[#allocation1 + $0x12] sm:$0xff]
    %2066 = vrot.lane.b32.xlu0 %v2063, 17
    %v2067 = vpop.permute.xlu0 %2066
    %2068 = vrot.lane.b32.xlu0 %v2064, 17
    %v2069 = vpop.permute.xlu0 %2068
    %2070 = vrot.lane.b32.xlu0 %v2065, 17
    %v2071 = vpop.permute.xlu0 %2070
    %v2072 = vsel %vm158, %v2067, %v2069
    %v2073 = vsel %vm158, %v2069, %v2071
    %v2076 = vsel %vm116, %v2056, %v2072
    %v2077 = vsel %vm117, %v2057, %v2073
    %s2078 = scalar_lea.vmem [#allocation3], 3
    %v2079 = vld [vmem:[%s2078] ss:$2 sm:$0x7]
    %s2080 = scalar_lea.vmem [#allocation3], 11
    %v2081 = vld [vmem:[%s2080] ss:$2 sm:$0x7]
    %2084 = vst [vmem:[#allocation1] ss:$9 sm:$0xff] %v2079
    %s2085 = scalar_lea.vmem [#allocation1], 1
    %2086 = vst [vmem:[%s2085] ss:$9 sm:$0xff] %v2081
    %v2087 = vld [vmem:[#allocation1] sm:$0xff]
    %v2088 = vld [vmem:[#allocation1 + $0x9] sm:$0xff]
    %v2089 = vld [vmem:[#allocation1 + $0x12] sm:$0xff]
    %2090 = vrot.lane.b32.xlu0 %v2087, 111
    %v2091 = vpop.permute.xlu0 %2090
    %2092 = vrot.lane.b32.xlu0 %v2088, 111
    %v2093 = vpop.permute.xlu0 %2092
    %2094 = vrot.lane.b32.xlu0 %v2089, 111
    %v2095 = vpop.permute.xlu0 %2094
    %v2096 = vsel %vm183, %v2091, %v2093
    %v2097 = vsel %vm183, %v2093, %v2095
    %2100 = vst [vmem:[#allocation1] ss:$9 sm:$0xff] %v2079
    %s2101 = scalar_lea.vmem [#allocation1], 1
    %2102 = vst [vmem:[%s2101] ss:$9 sm:$0xff] %v2081
    %v2103 = vld [vmem:[#allocation1] sm:$0xff]
    %v2104 = vld [vmem:[#allocation1 + $0x9] sm:$0xff]
    %v2105 = vld [vmem:[#allocation1 + $0x12] sm:$0xff]
    %2106 = vrot.lane.b32.xlu0 %v2103, 113
    %v2107 = vpop.permute.xlu0 %2106
    %2108 = vrot.lane.b32.xlu0 %v2104, 113
    %v2109 = vpop.permute.xlu0 %2108
    %2110 = vrot.lane.b32.xlu0 %v2105, 113
    %v2111 = vpop.permute.xlu0 %2110
    %v2112 = vsel %vm200, %v2107, %v2109
    %v2113 = vsel %vm200, %v2109, %v2111
    %v2116 = vsel %vm116, %v2096, %v2112
    %v2117 = vsel %vm117, %v2097, %v2113
    %v2118 = vsel %vm112, %v2116, %v2076
    %v2119 = vsel %vm113, %v2117, %v2077
    %s2120 = sld [smem:[#allocation11 + $0x4]]
    %v2121 = vstv %s2120
    %v2122 = vmul.f32 %v2121, %v2118
    %v2123 = vmul.f32 %v2121, %v2119
    %v2124 = vadd.f32 %v2018, %v2122
    %v2125 = vadd.f32 %v2019, %v2123
    %s2126 = sld [smem:[#allocation11 + $0x5]]
    %v2127 = vstv %s2126
    %v2128 = vmul.f32 %v2127, %v2118
    %v2129 = vmul.f32 %v2127, %v2119
    %v2130 = vadd.f32 %v2024, %v2128
    %v2131 = vadd.f32 %v2025, %v2129
    %s2132 = sld [smem:[#allocation11 + $0x6]]
    %v2133 = vstv %s2132
    %v2134 = vmul.f32 %v2133, %v2118
    %v2135 = vmul.f32 %v2133, %v2119
    %v2136 = vadd.f32 %v2030, %v2134
    %v2137 = vadd.f32 %v2031, %v2135
    %s2138 = sld [smem:[#allocation11 + $0x7]]
    %v2139 = vstv %s2138
    %v2140 = vmul.f32 %v2139, %v2118
    %v2141 = vmul.f32 %v2139, %v2119
    %v2142 = vadd.f32 %v2036, %v2140
    %v2143 = vadd.f32 %v2037, %v2141
    %v2144 = vld [vmem:[#allocation3] ss:$2 sm:$0x7]
    %v2145 = vld [vmem:[%s1934] ss:$2 sm:$0x7]
    %v2146 = vld [vmem:[%s1972] ss:$2 sm:$0x7]
    %v2147 = vld [vmem:[%s1974] ss:$2 sm:$0x7]
    %2150 = vst [vmem:[#allocation1] ss:$9 sm:$0xff] %v2146
    %s2151 = scalar_lea.vmem [#allocation1], 1
    %2152 = vst [vmem:[%s2151] ss:$9 sm:$0xff] %v2147
    %v2153 = vld [vmem:[#allocation1] sm:$0xff]
    %v2154 = vld [vmem:[#allocation1 + $0x9] sm:$0xff]
    %v2155 = vld [vmem:[#allocation1 + $0x12] sm:$0xff]
    %2156 = vrot.lane.b32.xlu0 %v2153, 112
    %v2157 = vpop.permute.xlu0 %2156
    %2158 = vrot.lane.b32.xlu0 %v2154, 112
    %v2159 = vpop.permute.xlu0 %2158
    %2160 = vrot.lane.b32.xlu0 %v2155, 112
    %v2161 = vpop.permute.xlu0 %2160
    %v2162 = vsel %vm521, %v2157, %v2159
    %v2163 = vsel %vm521, %v2159, %v2161
    %2168 = vst [vmem:[#allocation1] ss:$9 sm:$0xff] %v2144
    %s2169 = scalar_lea.vmem [#allocation1], 1
    %2170 = vst [vmem:[%s2169] ss:$9 sm:$0xff] %v2145
    %v2171 = vld [vmem:[#allocation1] sm:$0xff]
    %v2172 = vld [vmem:[#allocation1 + $0x9] sm:$0xff]
    %v2173 = vld [vmem:[#allocation1 + $0x12] sm:$0xff]
    %2174 = vrot.lane.b32.xlu0 %v2171, 16
    %v2175 = vpop.permute.xlu0 %2174
    %2176 = vrot.lane.b32.xlu0 %v2172, 16
    %v2177 = vpop.permute.xlu0 %2176
    %2178 = vrot.lane.b32.xlu0 %v2173, 16
    %v2179 = vpop.permute.xlu0 %2178
    %v2180 = vsel %vm540, %v2175, %v2177
    %v2181 = vsel %vm540, %v2177, %v2179
    %v2184 = vsel %vm112, %v2162, %v2180
    %v2185 = vsel %vm113, %v2163, %v2181
    %s2186 = sld [smem:[#allocation11 + $0x8]]
    %v2187 = vstv %s2186
    %v2188 = vmul.f32 %v2187, %v2184
    %v2189 = vmul.f32 %v2187, %v2185
    %v2190 = vadd.f32 %v2124, %v2188
    %v2191 = vadd.f32 %v2125, %v2189
    %s2192 = sld [smem:[#allocation11 + $0x9]]
    %v2193 = vstv %s2192
    %v2194 = vmul.f32 %v2193, %v2184
    %v2195 = vmul.f32 %v2193, %v2185
    %v2196 = vadd.f32 %v2130, %v2194
    %v2197 = vadd.f32 %v2131, %v2195
    %s2198 = sld [smem:[#allocation11 + $0xa]]
    %v2199 = vstv %s2198
    %v2200 = vmul.f32 %v2199, %v2184
    %v2201 = vmul.f32 %v2199, %v2185
    %v2202 = vadd.f32 %v2136, %v2200
    %v2203 = vadd.f32 %v2137, %v2201
    %s2204 = sld [smem:[#allocation11 + $0xb]]
    %v2205 = vstv %s2204
    %v2206 = vmul.f32 %v2205, %v2184
    %v2207 = vmul.f32 %v2205, %v2185
    %v2208 = vadd.f32 %v2142, %v2206
    %v2209 = vadd.f32 %v2143, %v2207
    %v2210 = vld [vmem:[%s2038] ss:$2 sm:$0x7]
    %v2211 = vld [vmem:[%s2040] ss:$2 sm:$0x7]
    %v2212 = vld [vmem:[%s2078] ss:$2 sm:$0x7]
    %v2213 = vld [vmem:[%s2080] ss:$2 sm:$0x7]
    %2216 = vst [vmem:[#allocation1] ss:$9 sm:$0xff] %v2212
    %s2217 = scalar_lea.vmem [#allocation1], 1
    %2218 = vst [vmem:[%s2217] ss:$9 sm:$0xff] %v2213
    %v2219 = vld [vmem:[#allocation1] sm:$0xff]
    %v2220 = vld [vmem:[#allocation1 + $0x9] sm:$0xff]
    %v2221 = vld [vmem:[#allocation1 + $0x12] sm:$0xff]
    %2222 = vrot.lane.b32.xlu0 %v2219, 112
    %v2223 = vpop.permute.xlu0 %2222
    %2224 = vrot.lane.b32.xlu0 %v2220, 112
    %v2225 = vpop.permute.xlu0 %2224
    %2226 = vrot.lane.b32.xlu0 %v2221, 112
    %v2227 = vpop.permute.xlu0 %2226
    %v2228 = vsel %vm521, %v2223, %v2225
    %v2229 = vsel %vm521, %v2225, %v2227
    %2234 = vst [vmem:[#allocation1] ss:$9 sm:$0xff] %v2210
    %s2235 = scalar_lea.vmem [#allocation1], 1
    %2236 = vst [vmem:[%s2235] ss:$9 sm:$0xff] %v2211
    %v2237 = vld [vmem:[#allocation1] sm:$0xff]
    %v2238 = vld [vmem:[#allocation1 + $0x9] sm:$0xff]
    %v2239 = vld [vmem:[#allocation1 + $0x12] sm:$0xff]
    %2240 = vrot.lane.b32.xlu0 %v2237, 16
    %v2241 = vpop.permute.xlu0 %2240
    %2242 = vrot.lane.b32.xlu0 %v2238, 16
    %v2243 = vpop.permute.xlu0 %2242
    %2244 = vrot.lane.b32.xlu0 %v2239, 16
    %v2245 = vpop.permute.xlu0 %2244
    %v2246 = vsel %vm540, %v2241, %v2243
    %v2247 = vsel %vm540, %v2243, %v2245
    %v2250 = vsel %vm112, %v2228, %v2246
    %v2251 = vsel %vm113, %v2229, %v2247
    %s2252 = sld [smem:[#allocation11 + $0xc]]
    %v2253 = vstv %s2252
    %v2254 = vmul.f32 %v2253, %v2250
    %v2255 = vmul.f32 %v2253, %v2251
    %v2256 = vadd.f32 %v2190, %v2254
    %v2257 = vadd.f32 %v2191, %v2255
    %s2258 = sld [smem:[#allocation11 + $0xd]]
    %v2259 = vstv %s2258
    %v2260 = vmul.f32 %v2259, %v2250
    %v2261 = vmul.f32 %v2259, %v2251
    %v2262 = vadd.f32 %v2196, %v2260
    %v2263 = vadd.f32 %v2197, %v2261
    %s2264 = sld [smem:[#allocation11 + $0xe]]
    %v2265 = vstv %s2264
    %v2266 = vmul.f32 %v2265, %v2250
    %v2267 = vmul.f32 %v2265, %v2251
    %v2268 = vadd.f32 %v2202, %v2266
    %v2269 = vadd.f32 %v2203, %v2267
    %s2270 = sld [smem:[#allocation11 + $0xf]]
    %v2271 = vstv %s2270
    %v2272 = vmul.f32 %v2271, %v2250
    %v2273 = vmul.f32 %v2271, %v2251
    %v2274 = vadd.f32 %v2208, %v2272
    %v2275 = vadd.f32 %v2209, %v2273
    %2276 = vst [vmem:[#allocation1] ss:$9 sm:$0xff] %v1933
    %s2277 = scalar_lea.vmem [#allocation1], 1
    %2278 = vst [vmem:[%s2277] ss:$9 sm:$0xff] %v1935
    %v2279 = vld [vmem:[#allocation1] sm:$0xff]
    %v2280 = vld [vmem:[#allocation1 + $0x9] sm:$0xff]
    %v2281 = vld [vmem:[#allocation1 + $0x12] sm:$0xff]
    %2282 = vrot.lane.b32.xlu0 %v2279, 17
    %v2283 = vpop.permute.xlu0 %2282
    %2284 = vrot.lane.b32.xlu0 %v2280, 17
    %v2285 = vpop.permute.xlu0 %2284
    %2286 = vrot.lane.b32.xlu0 %v2281, 17
    %v2287 = vpop.permute.xlu0 %2286
    %v2288 = vsel %vm158, %v2283, %v2285
    %v2289 = vsel %vm158, %v2285, %v2287
    %2292 = vst [vmem:[#allocation1] ss:$9 sm:$0xff] %v1933
    %s2293 = scalar_lea.vmem [#allocation1], 1
    %2294 = vst [vmem:[%s2293] ss:$9 sm:$0xff] %v1935
    %v2295 = vld [vmem:[#allocation1] sm:$0xff]
    %v2296 = vld [vmem:[#allocation1 + $0x9] sm:$0xff]
    %v2297 = vld [vmem:[#allocation1 + $0x12] sm:$0xff]
    %2298 = vrot.lane.b32.xlu0 %v2295, 15
    %v2299 = vpop.permute.xlu0 %2298
    %2300 = vrot.lane.b32.xlu0 %v2296, 15
    %v2301 = vpop.permute.xlu0 %2300
    %2302 = vrot.lane.b32.xlu0 %v2297, 15
    %v2303 = vpop.permute.xlu0 %2302
    %v2304 = vsel %vm141, %v2299, %v2301
    %v2305 = vsel %vm141, %v2301, %v2303
    %v2308 = vsel %vm118, %v2288, %v2304
    %v2309 = vsel %vm119, %v2289, %v2305
    %2310 = vst [vmem:[#allocation1] ss:$9 sm:$0xff] %v1973
    %s2311 = scalar_lea.vmem [#allocation1], 1
    %2312 = vst [vmem:[%s2311] ss:$9 sm:$0xff] %v1975
    %v2313 = vld [vmem:[#allocation1] sm:$0xff]
    %v2314 = vld [vmem:[#allocation1 + $0x9] sm:$0xff]
    %v2315 = vld [vmem:[#allocation1 + $0x12] sm:$0xff]
    %2316 = vrot.lane.b32.xlu0 %v2313, 113
    %v2317 = vpop.permute.xlu0 %2316
    %2318 = vrot.lane.b32.xlu0 %v2314, 113
    %v2319 = vpop.permute.xlu0 %2318
    %2320 = vrot.lane.b32.xlu0 %v2315, 113
    %v2321 = vpop.permute.xlu0 %2320
    %v2322 = vsel %vm200, %v2317, %v2319
    %v2323 = vsel %vm200, %v2319, %v2321
    %2326 = vst [vmem:[#allocation1] ss:$9 sm:$0xff] %v1973
    %s2327 = scalar_lea.vmem [#allocation1], 1
    %2328 = vst [vmem:[%s2327] ss:$9 sm:$0xff] %v1975
    %v2329 = vld [vmem:[#allocation1] sm:$0xff]
    %v2330 = vld [vmem:[#allocation1 + $0x9] sm:$0xff]
    %v2331 = vld [vmem:[#allocation1 + $0x12] sm:$0xff]
    %2332 = vrot.lane.b32.xlu0 %v2329, 111
    %v2333 = vpop.permute.xlu0 %2332
    %2334 = vrot.lane.b32.xlu0 %v2330, 111
    %v2335 = vpop.permute.xlu0 %2334
    %2336 = vrot.lane.b32.xlu0 %v2331, 111
    %v2337 = vpop.permute.xlu0 %2336
    %v2338 = vsel %vm183, %v2333, %v2335
    %v2339 = vsel %vm183, %v2335, %v2337
    %v2342 = vsel %vm118, %v2322, %v2338
    %v2343 = vsel %vm119, %v2323, %v2339
    %v2344 = vsel %vm112, %v2342, %v2308
    %v2345 = vsel %vm113, %v2343, %v2309
    %s2346 = sld [smem:[#allocation11 + $0x10]]
    %v2347 = vstv %s2346
    %v2348 = vmul.f32 %v2347, %v2344
    %v2349 = vmul.f32 %v2347, %v2345
    %v2350 = vadd.f32 %v2256, %v2348
    %v2351 = vadd.f32 %v2257, %v2349
    %s2352 = sld [smem:[#allocation11 + $0x11]]
    %v2353 = vstv %s2352
    %v2354 = vmul.f32 %v2353, %v2344
    %v2355 = vmul.f32 %v2353, %v2345
    %v2356 = vadd.f32 %v2262, %v2354
    %v2357 = vadd.f32 %v2263, %v2355
    %s2358 = sld [smem:[#allocation11 + $0x12]]
    %v2359 = vstv %s2358
    %v2360 = vmul.f32 %v2359, %v2344
    %v2361 = vmul.f32 %v2359, %v2345
    %v2362 = vadd.f32 %v2268, %v2360
    %v2363 = vadd.f32 %v2269, %v2361
    %s2364 = sld [smem:[#allocation11 + $0x13]]
    %v2365 = vstv %s2364
    %v2366 = vmul.f32 %v2365, %v2344
    %v2367 = vmul.f32 %v2365, %v2345
    %v2368 = vadd.f32 %v2274, %v2366
    %v2369 = vadd.f32 %v2275, %v2367
    %2370 = vst [vmem:[#allocation1] ss:$9 sm:$0xff] %v2039
    %s2371 = scalar_lea.vmem [#allocation1], 1
    %2372 = vst [vmem:[%s2371] ss:$9 sm:$0xff] %v2041
    %v2373 = vld [vmem:[#allocation1] sm:$0xff]
    %v2374 = vld [vmem:[#allocation1 + $0x9] sm:$0xff]
    %v2375 = vld [vmem:[#allocation1 + $0x12] sm:$0xff]
    %2376 = vrot.lane.b32.xlu0 %v2373, 17
    %v2377 = vpop.permute.xlu0 %2376
    %2378 = vrot.lane.b32.xlu0 %v2374, 17
    %v2379 = vpop.permute.xlu0 %2378
    %2380 = vrot.lane.b32.xlu0 %v2375, 17
    %v2381 = vpop.permute.xlu0 %2380
    %v2382 = vsel %vm158, %v2377, %v2379
    %v2383 = vsel %vm158, %v2379, %v2381
    %2386 = vst [vmem:[#allocation1] ss:$9 sm:$0xff] %v2039
    %s2387 = scalar_lea.vmem [#allocation1], 1
    %2388 = vst [vmem:[%s2387] ss:$9 sm:$0xff] %v2041
    %v2389 = vld [vmem:[#allocation1] sm:$0xff]
    %v2390 = vld [vmem:[#allocation1 + $0x9] sm:$0xff]
    %v2391 = vld [vmem:[#allocation1 + $0x12] sm:$0xff]
    %2392 = vrot.lane.b32.xlu0 %v2389, 15
    %v2393 = vpop.permute.xlu0 %2392
    %2394 = vrot.lane.b32.xlu0 %v2390, 15
    %v2395 = vpop.permute.xlu0 %2394
    %2396 = vrot.lane.b32.xlu0 %v2391, 15
    %v2397 = vpop.permute.xlu0 %2396
    %v2398 = vsel %vm141, %v2393, %v2395
    %v2399 = vsel %vm141, %v2395, %v2397
    %v2402 = vsel %vm118, %v2382, %v2398
    %v2403 = vsel %vm119, %v2383, %v2399
    %2404 = vst [vmem:[#allocation1] ss:$9 sm:$0xff] %v2079
    %s2405 = scalar_lea.vmem [#allocation1], 1
    %2406 = vst [vmem:[%s2405] ss:$9 sm:$0xff] %v2081
    %v2407 = vld [vmem:[#allocation1] sm:$0xff]
    %v2408 = vld [vmem:[#allocation1 + $0x9] sm:$0xff]
    %v2409 = vld [vmem:[#allocation1 + $0x12] sm:$0xff]
    %2410 = vrot.lane.b32.xlu0 %v2407, 113
    %v2411 = vpop.permute.xlu0 %2410
    %2412 = vrot.lane.b32.xlu0 %v2408, 113
    %v2413 = vpop.permute.xlu0 %2412
    %2414 = vrot.lane.b32.xlu0 %v2409, 113
    %v2415 = vpop.permute.xlu0 %2414
    %v2416 = vsel %vm200, %v2411, %v2413
    %v2417 = vsel %vm200, %v2413, %v2415
    %2420 = vst [vmem:[#allocation1] ss:$9 sm:$0xff] %v2079
    %s2421 = scalar_lea.vmem [#allocation1], 1
    %2422 = vst [vmem:[%s2421] ss:$9 sm:$0xff] %v2081
    %v2423 = vld [vmem:[#allocation1] sm:$0xff]
    %v2424 = vld [vmem:[#allocation1 + $0x9] sm:$0xff]
    %v2425 = vld [vmem:[#allocation1 + $0x12] sm:$0xff]
    %2426 = vrot.lane.b32.xlu0 %v2423, 111
    %v2427 = vpop.permute.xlu0 %2426
    %2428 = vrot.lane.b32.xlu0 %v2424, 111
    %v2429 = vpop.permute.xlu0 %2428
    %2430 = vrot.lane.b32.xlu0 %v2425, 111
    %v2431 = vpop.permute.xlu0 %2430
    %v2432 = vsel %vm183, %v2427, %v2429
    %v2433 = vsel %vm183, %v2429, %v2431
    %v2436 = vsel %vm118, %v2416, %v2432
    %v2437 = vsel %vm119, %v2417, %v2433
    %v2438 = vsel %vm112, %v2436, %v2402
    %v2439 = vsel %vm113, %v2437, %v2403
    %s2440 = sld [smem:[#allocation11 + $0x14]]
    %v2441 = vstv %s2440
    %v2442 = vmul.f32 %v2441, %v2438
    %v2443 = vmul.f32 %v2441, %v2439
    %v2444 = vadd.f32 %v2350, %v2442
    %v2445 = vadd.f32 %v2351, %v2443
    %s2446 = sld [smem:[#allocation11 + $0x15]]
    %v2447 = vstv %s2446
    %v2448 = vmul.f32 %v2447, %v2438
    %v2449 = vmul.f32 %v2447, %v2439
    %v2450 = vadd.f32 %v2356, %v2448
    %v2451 = vadd.f32 %v2357, %v2449
    %s2452 = sld [smem:[#allocation11 + $0x16]]
    %v2453 = vstv %s2452
    %v2454 = vmul.f32 %v2453, %v2438
    %v2455 = vmul.f32 %v2453, %v2439
    %v2456 = vadd.f32 %v2362, %v2454
    %v2457 = vadd.f32 %v2363, %v2455
    %s2458 = sld [smem:[#allocation11 + $0x17]]
    %v2459 = vstv %s2458
    %v2460 = vmul.f32 %v2459, %v2438
    %v2461 = vmul.f32 %v2459, %v2439
    %v2462 = vadd.f32 %v2368, %v2460
    %v2463 = vadd.f32 %v2369, %v2461
    %v2464 = vld [vmem:[#allocation3] ss:$2 sm:$0x7]
    %v2465 = vld [vmem:[%s1934] ss:$2 sm:$0x7]
    %v2466 = vld [vmem:[%s1972] ss:$2 sm:$0x7]
    %v2467 = vld [vmem:[%s1974] ss:$2 sm:$0x7]
    %2470 = vst [vmem:[#allocation1] ss:$9 sm:$0xff] %v2466
    %s2471 = scalar_lea.vmem [#allocation1], 1
    %2472 = vst [vmem:[%s2471] ss:$9 sm:$0xff] %v2467
    %v2473 = vld [vmem:[#allocation1] sm:$0xff]
    %v2474 = vld [vmem:[#allocation1 + $0x9] sm:$0xff]
    %v2475 = vld [vmem:[#allocation1 + $0x12] sm:$0xff]
    %2476 = vrot.lane.b32.xlu0 %v2473, 127
    %v2477 = vpop.permute.xlu0 %2476
    %2478 = vrot.lane.b32.xlu0 %v2474, 127
    %v2479 = vpop.permute.xlu0 %2478
    %2480 = vrot.lane.b32.xlu0 %v2475, 127
    %v2481 = vpop.permute.xlu0 %2480
    %v2482 = vsel %vm1067, %v2477, %v2479
    %v2483 = vsel %vm1067, %v2479, %v2481
    %2488 = vst [vmem:[#allocation1] ss:$9 sm:$0xff] %v2464
    %s2489 = scalar_lea.vmem [#allocation1], 1
    %2490 = vst [vmem:[%s2489] ss:$9 sm:$0xff] %v2465
    %v2491 = vld [vmem:[#allocation1] sm:$0xff]
    %v2492 = vld [vmem:[#allocation1 + $0x9] sm:$0xff]
    %v2493 = vld [vmem:[#allocation1 + $0x12] sm:$0xff]
    %2494 = vrot.lane.b32.xlu0 %v2491, 1
    %v2495 = vpop.permute.xlu0 %2494
    %2496 = vrot.lane.b32.xlu0 %v2492, 1
    %v2497 = vpop.permute.xlu0 %2496
    %2498 = vrot.lane.b32.xlu0 %v2493, 1
    %v2499 = vpop.permute.xlu0 %2498
    %v2500 = vsel %vm1086, %v2495, %v2497
    %v2501 = vsel %vm1086, %v2497, %v2499
    %v2504 = vsel %vm116, %v2482, %v2500
    %v2505 = vsel %vm117, %v2483, %v2501
    %s2506 = sld [smem:[#allocation11 + $0x18]]
    %v2507 = vstv %s2506
    %v2508 = vmul.f32 %v2507, %v2504
    %v2509 = vmul.f32 %v2507, %v2505
    %v2510 = vadd.f32 %v2508, 0.0
    %v2511 = vadd.f32 %v2509, 0.0
    %s2512 = sld [smem:[#allocation11 + $0x19]]
    %v2513 = vstv %s2512
    %v2514 = vmul.f32 %v2513, %v2504
    %v2515 = vmul.f32 %v2513, %v2505
    %v2516 = vadd.f32 %v2514, 0.0
    %v2517 = vadd.f32 %v2515, 0.0
    %s2518 = sld [smem:[#allocation11 + $0x1a]]
    %v2519 = vstv %s2518
    %v2520 = vmul.f32 %v2519, %v2504
    %v2521 = vmul.f32 %v2519, %v2505
    %v2522 = vadd.f32 %v2520, 0.0
    %v2523 = vadd.f32 %v2521, 0.0
    %s2524 = sld [smem:[#allocation11 + $0x1b]]
    %v2525 = vstv %s2524
    %v2526 = vmul.f32 %v2525, %v2504
    %v2527 = vmul.f32 %v2525, %v2505
    %v2528 = vadd.f32 %v2526, 0.0
    %v2529 = vadd.f32 %v2527, 0.0
    %v2530 = vld [vmem:[%s2038] ss:$2 sm:$0x7]
    %v2531 = vld [vmem:[%s2040] ss:$2 sm:$0x7]
    %v2532 = vld [vmem:[%s2078] ss:$2 sm:$0x7]
    %v2533 = vld [vmem:[%s2080] ss:$2 sm:$0x7]
    %2536 = vst [vmem:[#allocation1] ss:$9 sm:$0xff] %v2532
    %s2537 = scalar_lea.vmem [#allocation1], 1
    %2538 = vst [vmem:[%s2537] ss:$9 sm:$0xff] %v2533
    %v2539 = vld [vmem:[#allocation1] sm:$0xff]
    %v2540 = vld [vmem:[#allocation1 + $0x9] sm:$0xff]
    %v2541 = vld [vmem:[#allocation1 + $0x12] sm:$0xff]
    %2542 = vrot.lane.b32.xlu0 %v2539, 127
    %v2543 = vpop.permute.xlu0 %2542
    %2544 = vrot.lane.b32.xlu0 %v2540, 127
    %v2545 = vpop.permute.xlu0 %2544
    %2546 = vrot.lane.b32.xlu0 %v2541, 127
    %v2547 = vpop.permute.xlu0 %2546
    %v2548 = vsel %vm1067, %v2543, %v2545
    %v2549 = vsel %vm1067, %v2545, %v2547
    %2554 = vst [vmem:[#allocation1] ss:$9 sm:$0xff] %v2530
    %s2555 = scalar_lea.vmem [#allocation1], 1
    %2556 = vst [vmem:[%s2555] ss:$9 sm:$0xff] %v2531
    %v2557 = vld [vmem:[#allocation1] sm:$0xff]
    %v2558 = vld [vmem:[#allocation1 + $0x9] sm:$0xff]
    %v2559 = vld [vmem:[#allocation1 + $0x12] sm:$0xff]
    %2560 = vrot.lane.b32.xlu0 %v2557, 1
    %v2561 = vpop.permute.xlu0 %2560
    %2562 = vrot.lane.b32.xlu0 %v2558, 1
    %v2563 = vpop.permute.xlu0 %2562
    %2564 = vrot.lane.b32.xlu0 %v2559, 1
    %v2565 = vpop.permute.xlu0 %2564
    %v2566 = vsel %vm1086, %v2561, %v2563
    %v2567 = vsel %vm1086, %v2563, %v2565
    %v2570 = vsel %vm116, %v2548, %v2566
    %v2571 = vsel %vm117, %v2549, %v2567
    %s2572 = sld [smem:[#allocation11 + $0x1c]]
    %v2573 = vstv %s2572
    %v2574 = vmul.f32 %v2573, %v2570
    %v2575 = vmul.f32 %v2573, %v2571
    %v2576 = vadd.f32 %v2510, %v2574
    %v2577 = vadd.f32 %v2511, %v2575
    %s2578 = sld [smem:[#allocation11 + $0x1d]]
    %v2579 = vstv %s2578
    %v2580 = vmul.f32 %v2579, %v2570
    %v2581 = vmul.f32 %v2579, %v2571
    %v2582 = vadd.f32 %v2516, %v2580
    %v2583 = vadd.f32 %v2517, %v2581
    %s2584 = sld [smem:[#allocation11 + $0x1e]]
    %v2585 = vstv %s2584
    %v2586 = vmul.f32 %v2585, %v2570
    %v2587 = vmul.f32 %v2585, %v2571
    %v2588 = vadd.f32 %v2522, %v2586
    %v2589 = vadd.f32 %v2523, %v2587
    %s2590 = sld [smem:[#allocation11 + $0x1f]]
    %v2591 = vstv %s2590
    %v2592 = vmul.f32 %v2591, %v2570
    %v2593 = vmul.f32 %v2591, %v2571
    %v2594 = vadd.f32 %v2528, %v2592
    %v2595 = vadd.f32 %v2529, %v2593
    %v2596 = vld [vmem:[%s1907] ss:$2 sm:$0x3]
    %v2597 = vld [vmem:[%s1909] ss:$2 sm:$0x3]
    %s2598 = sld [smem:[#allocation11 + $0x20]]
    %v2599 = vstv %s2598
    %v2600 = vmul.f32 %v2599, %v2596
    %v2601 = vmul.f32 %v2599, %v2597
    %2604 = vst [vmem:[#allocation1] ss:$9 sm:$0xff] %v2600
    %s2605 = scalar_lea.vmem [#allocation1], 1
    %2606 = vst [vmem:[%s2605] ss:$9 sm:$0xff] %v2601
    %v2607 = vld [vmem:[#allocation1] sm:$0xff]
    %v2608 = vld [vmem:[#allocation1 + $0x9] sm:$0xff]
    %v2611 = vadd.f32 %v2576, %v2607
    %v2612 = vadd.f32 %v2577, %v2608
    %s2613 = sld [smem:[#allocation11 + $0x21]]
    %v2614 = vstv %s2613
    %v2615 = vmul.f32 %v2614, %v2596
    %v2616 = vmul.f32 %v2614, %v2597
    %2619 = vst [vmem:[#allocation1] ss:$9 sm:$0xff] %v2615
    %s2620 = scalar_lea.vmem [#allocation1], 1
    %2621 = vst [vmem:[%s2620] ss:$9 sm:$0xff] %v2616
    %v2622 = vld [vmem:[#allocation1] sm:$0xff]
    %v2623 = vld [vmem:[#allocation1 + $0x9] sm:$0xff]
    %v2626 = vadd.f32 %v2582, %v2622
    %v2627 = vadd.f32 %v2583, %v2623
    %s2628 = sld [smem:[#allocation11 + $0x22]]
    %v2629 = vstv %s2628
    %v2630 = vmul.f32 %v2629, %v2596
    %v2631 = vmul.f32 %v2629, %v2597
    %2634 = vst [vmem:[#allocation1] ss:$9 sm:$0xff] %v2630
    %s2635 = scalar_lea.vmem [#allocation1], 1
    %2636 = vst [vmem:[%s2635] ss:$9 sm:$0xff] %v2631
    %v2637 = vld [vmem:[#allocation1] sm:$0xff]
    %v2638 = vld [vmem:[#allocation1 + $0x9] sm:$0xff]
    %v2641 = vadd.f32 %v2588, %v2637
    %v2642 = vadd.f32 %v2589, %v2638
    %s2643 = sld [smem:[#allocation11 + $0x23]]
    %v2644 = vstv %s2643
    %v2645 = vmul.f32 %v2644, %v2596
    %v2646 = vmul.f32 %v2644, %v2597
    %2649 = vst [vmem:[#allocation1] ss:$9 sm:$0xff] %v2645
    %s2650 = scalar_lea.vmem [#allocation1], 1
    %2651 = vst [vmem:[%s2650] ss:$9 sm:$0xff] %v2646
    %v2652 = vld [vmem:[#allocation1] sm:$0xff]
    %v2653 = vld [vmem:[#allocation1 + $0x9] sm:$0xff]
    %v2656 = vadd.f32 %v2594, %v2652
    %v2657 = vadd.f32 %v2595, %v2653
    %v2658 = vld [vmem:[%s1929] ss:$2 sm:$0x3]
    %v2659 = vld [vmem:[%s1931] ss:$2 sm:$0x3]
    %s2660 = sld [smem:[#allocation11 + $0x24]]
    %v2661 = vstv %s2660
    %v2662 = vmul.f32 %v2661, %v2658
    %v2663 = vmul.f32 %v2661, %v2659
    %2666 = vst [vmem:[#allocation1] ss:$9 sm:$0xff] %v2662
    %s2667 = scalar_lea.vmem [#allocation1], 1
    %2668 = vst [vmem:[%s2667] ss:$9 sm:$0xff] %v2663
    %v2669 = vld [vmem:[#allocation1] sm:$0xff]
    %v2670 = vld [vmem:[#allocation1 + $0x9] sm:$0xff]
    %v2673 = vadd.f32 %v2611, %v2669
    %v2674 = vadd.f32 %v2612, %v2670
    %s2675 = sld [smem:[#allocation11 + $0x25]]
    %v2676 = vstv %s2675
    %v2677 = vmul.f32 %v2676, %v2658
    %v2678 = vmul.f32 %v2676, %v2659
    %2681 = vst [vmem:[#allocation1] ss:$9 sm:$0xff] %v2677
    %s2682 = scalar_lea.vmem [#allocation1], 1
    %2683 = vst [vmem:[%s2682] ss:$9 sm:$0xff] %v2678
    %v2684 = vld [vmem:[#allocation1] sm:$0xff]
    %v2685 = vld [vmem:[#allocation1 + $0x9] sm:$0xff]
    %v2688 = vadd.f32 %v2626, %v2684
    %v2689 = vadd.f32 %v2627, %v2685
    %s2690 = sld [smem:[#allocation11 + $0x26]]
    %v2691 = vstv %s2690
    %v2692 = vmul.f32 %v2691, %v2658
    %v2693 = vmul.f32 %v2691, %v2659
    %2696 = vst [vmem:[#allocation1] ss:$9 sm:$0xff] %v2692
    %s2697 = scalar_lea.vmem [#allocation1], 1
    %2698 = vst [vmem:[%s2697] ss:$9 sm:$0xff] %v2693
    %v2699 = vld [vmem:[#allocation1] sm:$0xff]
    %v2700 = vld [vmem:[#allocation1 + $0x9] sm:$0xff]
    %v2703 = vadd.f32 %v2641, %v2699
    %v2704 = vadd.f32 %v2642, %v2700
    %s2705 = sld [smem:[#allocation11 + $0x27]]
    %v2706 = vstv %s2705
    %v2707 = vmul.f32 %v2706, %v2658
    %v2708 = vmul.f32 %v2706, %v2659
    %2711 = vst [vmem:[#allocation1] ss:$9 sm:$0xff] %v2707
    %s2712 = scalar_lea.vmem [#allocation1], 1
    %2713 = vst [vmem:[%s2712] ss:$9 sm:$0xff] %v2708
    %v2714 = vld [vmem:[#allocation1] sm:$0xff]
    %v2715 = vld [vmem:[#allocation1 + $0x9] sm:$0xff]
    %v2718 = vadd.f32 %v2656, %v2714
    %v2719 = vadd.f32 %v2657, %v2715
    %2720 = vst [vmem:[#allocation1] ss:$9 sm:$0xff] %v2464
    %s2721 = scalar_lea.vmem [#allocation1], 1
    %2722 = vst [vmem:[%s2721] ss:$9 sm:$0xff] %v2465
    %v2723 = vld [vmem:[#allocation1] sm:$0xff]
    %v2724 = vld [vmem:[#allocation1 + $0x9] sm:$0xff]
    %v2725 = vld [vmem:[#allocation1 + $0x12] sm:$0xff]
    %2726 = vrot.lane.b32.xlu0 %v2723, 1
    %v2727 = vpop.permute.xlu0 %2726
    %2728 = vrot.lane.b32.xlu0 %v2724, 1
    %v2729 = vpop.permute.xlu0 %2728
    %2730 = vrot.lane.b32.xlu0 %v2725, 1
    %v2731 = vpop.permute.xlu0 %2730
    %v2732 = vsel %vm1086, %v2727, %v2729
    %v2733 = vsel %vm1086, %v2729, %v2731
    %2736 = vst [vmem:[#allocation1] ss:$9 sm:$0xff] %v2466
    %s2737 = scalar_lea.vmem [#allocation1], 1
    %2738 = vst [vmem:[%s2737] ss:$9 sm:$0xff] %v2467
    %v2739 = vld [vmem:[#allocation1] sm:$0xff]
    %v2740 = vld [vmem:[#allocation1 + $0x9] sm:$0xff]
    %v2741 = vld [vmem:[#allocation1 + $0x12] sm:$0xff]
    %2742 = vrot.lane.b32.xlu0 %v2739, 127
    %v2743 = vpop.permute.xlu0 %2742
    %2744 = vrot.lane.b32.xlu0 %v2740, 127
    %v2745 = vpop.permute.xlu0 %2744
    %2746 = vrot.lane.b32.xlu0 %v2741, 127
    %v2747 = vpop.permute.xlu0 %2746
    %v2748 = vsel %vm1067, %v2743, %v2745
    %v2749 = vsel %vm1067, %v2745, %v2747
    %v2752 = vsel %vm118, %v2732, %v2748
    %v2753 = vsel %vm119, %v2733, %v2749
    %s2754 = sld [smem:[#allocation11 + $0x28]]
    %v2755 = vstv %s2754
    %v2756 = vmul.f32 %v2755, %v2752
    %v2757 = vmul.f32 %v2755, %v2753
    %v2758 = vadd.f32 %v2673, %v2756
    %v2759 = vadd.f32 %v2674, %v2757
    %s2760 = sld [smem:[#allocation11 + $0x29]]
    %v2761 = vstv %s2760
    %v2762 = vmul.f32 %v2761, %v2752
    %v2763 = vmul.f32 %v2761, %v2753
    %v2764 = vadd.f32 %v2688, %v2762
    %v2765 = vadd.f32 %v2689, %v2763
    %s2766 = sld [smem:[#allocation11 + $0x2a]]
    %v2767 = vstv %s2766
    %v2768 = vmul.f32 %v2767, %v2752
    %v2769 = vmul.f32 %v2767, %v2753
    %v2770 = vadd.f32 %v2703, %v2768
    %v2771 = vadd.f32 %v2704, %v2769
    %s2772 = sld [smem:[#allocation11 + $0x2b]]
    %v2773 = vstv %s2772
    %v2774 = vmul.f32 %v2773, %v2752
    %v2775 = vmul.f32 %v2773, %v2753
    %v2776 = vadd.f32 %v2718, %v2774
    %v2777 = vadd.f32 %v2719, %v2775
    %2778 = vst [vmem:[#allocation1] ss:$9 sm:$0xff] %v2530
    %s2779 = scalar_lea.vmem [#allocation1], 1
    %2780 = vst [vmem:[%s2779] ss:$9 sm:$0xff] %v2531
    %v2781 = vld [vmem:[#allocation1] sm:$0xff]
    %v2782 = vld [vmem:[#allocation1 + $0x9] sm:$0xff]
    %v2783 = vld [vmem:[#allocation1 + $0x12] sm:$0xff]
    %2784 = vrot.lane.b32.xlu0 %v2781, 1
    %v2785 = vpop.permute.xlu0 %2784
    %2786 = vrot.lane.b32.xlu0 %v2782, 1
    %v2787 = vpop.permute.xlu0 %2786
    %2788 = vrot.lane.b32.xlu0 %v2783, 1
    %v2789 = vpop.permute.xlu0 %2788
    %v2790 = vsel %vm1086, %v2785, %v2787
    %v2791 = vsel %vm1086, %v2787, %v2789
    %2794 = vst [vmem:[#allocation1] ss:$9 sm:$0xff] %v2532
    %s2795 = scalar_lea.vmem [#allocation1], 1
    %2796 = vst [vmem:[%s2795] ss:$9 sm:$0xff] %v2533
    %v2797 = vld [vmem:[#allocation1] sm:$0xff]
    %v2798 = vld [vmem:[#allocation1 + $0x9] sm:$0xff]
    %v2799 = vld [vmem:[#allocation1 + $0x12] sm:$0xff]
    %2800 = vrot.lane.b32.xlu0 %v2797, 127
    %v2801 = vpop.permute.xlu0 %2800
    %2802 = vrot.lane.b32.xlu0 %v2798, 127
    %v2803 = vpop.permute.xlu0 %2802
    %2804 = vrot.lane.b32.xlu0 %v2799, 127
    %v2805 = vpop.permute.xlu0 %2804
    %v2806 = vsel %vm1067, %v2801, %v2803
    %v2807 = vsel %vm1067, %v2803, %v2805
    %v2810 = vsel %vm118, %v2790, %v2806
    %v2811 = vsel %vm119, %v2791, %v2807
    %s2812 = sld [smem:[#allocation11 + $0x2c]]
    %v2813 = vstv %s2812
    %v2814 = vmul.f32 %v2813, %v2810
    %v2815 = vmul.f32 %v2813, %v2811
    %v2816 = vadd.f32 %v2758, %v2814
    %v2817 = vadd.f32 %v2759, %v2815
    %s2818 = sld [smem:[#allocation11 + $0x2d]]
    %v2819 = vstv %s2818
    %v2820 = vmul.f32 %v2819, %v2810
    %v2821 = vmul.f32 %v2819, %v2811
    %v2822 = vadd.f32 %v2764, %v2820
    %v2823 = vadd.f32 %v2765, %v2821
    %s2824 = sld [smem:[#allocation11 + $0x2e]]
    %v2825 = vstv %s2824
    %v2826 = vmul.f32 %v2825, %v2810
    %v2827 = vmul.f32 %v2825, %v2811
    %v2828 = vadd.f32 %v2770, %v2826
    %v2829 = vadd.f32 %v2771, %v2827
    %s2830 = sld [smem:[#allocation11 + $0x2f]]
    %v2831 = vstv %s2830
    %v2832 = vmul.f32 %v2831, %v2810
    %v2833 = vmul.f32 %v2831, %v2811
    %v2834 = vadd.f32 %v2776, %v2832
    %v2835 = vadd.f32 %v2777, %v2833
    %v2836 = vsel %vm114, %v1970, %v2010
    %v2837 = vsel %vm115, %v1971, %v2011
    %s2838 = sld [smem:[#allocation11 + $0x30]]
    %v2839 = vstv %s2838
    %v2840 = vmul.f32 %v2839, %v2836
    %v2841 = vmul.f32 %v2839, %v2837
    %v2842 = vadd.f32 %v2840, 0.0
    %v2843 = vadd.f32 %v2841, 0.0
    %s2844 = sld [smem:[#allocation11 + $0x31]]
    %v2845 = vstv %s2844
    %v2846 = vmul.f32 %v2845, %v2836
    %v2847 = vmul.f32 %v2845, %v2837
    %v2848 = vadd.f32 %v2846, 0.0
    %v2849 = vadd.f32 %v2847, 0.0
    %s2850 = sld [smem:[#allocation11 + $0x32]]
    %v2851 = vstv %s2850
    %v2852 = vmul.f32 %v2851, %v2836
    %v2853 = vmul.f32 %v2851, %v2837
    %v2854 = vadd.f32 %v2852, 0.0
    %v2855 = vadd.f32 %v2853, 0.0
    %s2856 = sld [smem:[#allocation11 + $0x33]]
    %v2857 = vstv %s2856
    %v2858 = vmul.f32 %v2857, %v2836
    %v2859 = vmul.f32 %v2857, %v2837
    %v2860 = vadd.f32 %v2858, 0.0
    %v2861 = vadd.f32 %v2859, 0.0
    %v2862 = vsel %vm114, %v2076, %v2116
    %v2863 = vsel %vm115, %v2077, %v2117
    %s2864 = sld [smem:[#allocation11 + $0x34]]
    %v2865 = vstv %s2864
    %v2866 = vmul.f32 %v2865, %v2862
    %v2867 = vmul.f32 %v2865, %v2863
    %v2868 = vadd.f32 %v2842, %v2866
    %v2869 = vadd.f32 %v2843, %v2867
    %s2870 = sld [smem:[#allocation11 + $0x35]]
    %v2871 = vstv %s2870
    %v2872 = vmul.f32 %v2871, %v2862
    %v2873 = vmul.f32 %v2871, %v2863
    %v2874 = vadd.f32 %v2848, %v2872
    %v2875 = vadd.f32 %v2849, %v2873
    %s2876 = sld [smem:[#allocation11 + $0x36]]
    %v2877 = vstv %s2876
    %v2878 = vmul.f32 %v2877, %v2862
    %v2879 = vmul.f32 %v2877, %v2863
    %v2880 = vadd.f32 %v2854, %v2878
    %v2881 = vadd.f32 %v2855, %v2879
    %s2882 = sld [smem:[#allocation11 + $0x37]]
    %v2883 = vstv %s2882
    %v2884 = vmul.f32 %v2883, %v2862
    %v2885 = vmul.f32 %v2883, %v2863
    %v2886 = vadd.f32 %v2860, %v2884
    %v2887 = vadd.f32 %v2861, %v2885
    %2888 = vst [vmem:[#allocation1] ss:$9 sm:$0xff] %v2144
    %s2889 = scalar_lea.vmem [#allocation1], 1
    %2890 = vst [vmem:[%s2889] ss:$9 sm:$0xff] %v2145
    %v2891 = vld [vmem:[#allocation1] sm:$0xff]
    %v2892 = vld [vmem:[#allocation1 + $0x9] sm:$0xff]
    %v2893 = vld [vmem:[#allocation1 + $0x12] sm:$0xff]
    %2894 = vrot.lane.b32.xlu0 %v2891, 16
    %v2895 = vpop.permute.xlu0 %2894
    %2896 = vrot.lane.b32.xlu0 %v2892, 16
    %v2897 = vpop.permute.xlu0 %2896
    %2898 = vrot.lane.b32.xlu0 %v2893, 16
    %v2899 = vpop.permute.xlu0 %2898
    %v2900 = vsel %vm540, %v2895, %v2897
    %v2901 = vsel %vm540, %v2897, %v2899
    %2904 = vst [vmem:[#allocation1] ss:$9 sm:$0xff] %v2146
    %s2905 = scalar_lea.vmem [#allocation1], 1
    %2906 = vst [vmem:[%s2905] ss:$9 sm:$0xff] %v2147
    %v2907 = vld [vmem:[#allocation1] sm:$0xff]
    %v2908 = vld [vmem:[#allocation1 + $0x9] sm:$0xff]
    %v2909 = vld [vmem:[#allocation1 + $0x12] sm:$0xff]
    %2910 = vrot.lane.b32.xlu0 %v2907, 112
    %v2911 = vpop.permute.xlu0 %2910
    %2912 = vrot.lane.b32.xlu0 %v2908, 112
    %v2913 = vpop.permute.xlu0 %2912
    %2914 = vrot.lane.b32.xlu0 %v2909, 112
    %v2915 = vpop.permute.xlu0 %2914
    %v2916 = vsel %vm521, %v2911, %v2913
    %v2917 = vsel %vm521, %v2913, %v2915
    %v2920 = vsel %vm114, %v2900, %v2916
    %v2921 = vsel %vm115, %v2901, %v2917
    %s2922 = sld [smem:[#allocation11 + $0x38]]
    %v2923 = vstv %s2922
    %v2924 = vmul.f32 %v2923, %v2920
    %v2925 = vmul.f32 %v2923, %v2921
    %v2926 = vadd.f32 %v2868, %v2924
    %v2927 = vadd.f32 %v2869, %v2925
    %s2928 = sld [smem:[#allocation11 + $0x39]]
    %v2929 = vstv %s2928
    %v2930 = vmul.f32 %v2929, %v2920
    %v2931 = vmul.f32 %v2929, %v2921
    %v2932 = vadd.f32 %v2874, %v2930
    %v2933 = vadd.f32 %v2875, %v2931
    %s2934 = sld [smem:[#allocation11 + $0x3a]]
    %v2935 = vstv %s2934
    %v2936 = vmul.f32 %v2935, %v2920
    %v2937 = vmul.f32 %v2935, %v2921
    %v2938 = vadd.f32 %v2880, %v2936
    %v2939 = vadd.f32 %v2881, %v2937
    %s2940 = sld [smem:[#allocation11 + $0x3b]]
    %v2941 = vstv %s2940
    %v2942 = vmul.f32 %v2941, %v2920
    %v2943 = vmul.f32 %v2941, %v2921
    %v2944 = vadd.f32 %v2886, %v2942
    %v2945 = vadd.f32 %v2887, %v2943
    %2946 = vst [vmem:[#allocation1] ss:$9 sm:$0xff] %v2210
    %s2947 = scalar_lea.vmem [#allocation1], 1
    %2948 = vst [vmem:[%s2947] ss:$9 sm:$0xff] %v2211
    %v2949 = vld [vmem:[#allocation1] sm:$0xff]
    %v2950 = vld [vmem:[#allocation1 + $0x9] sm:$0xff]
    %v2951 = vld [vmem:[#allocation1 + $0x12] sm:$0xff]
    %2952 = vrot.lane.b32.xlu0 %v2949, 16
    %v2953 = vpop.permute.xlu0 %2952
    %2954 = vrot.lane.b32.xlu0 %v2950, 16
    %v2955 = vpop.permute.xlu0 %2954
    %2956 = vrot.lane.b32.xlu0 %v2951, 16
    %v2957 = vpop.permute.xlu0 %2956
    %v2958 = vsel %vm540, %v2953, %v2955
    %v2959 = vsel %vm540, %v2955, %v2957
    %2962 = vst [vmem:[#allocation1] ss:$9 sm:$0xff] %v2212
    %s2963 = scalar_lea.vmem [#allocation1], 1
    %2964 = vst [vmem:[%s2963] ss:$9 sm:$0xff] %v2213
    %v2965 = vld [vmem:[#allocation1] sm:$0xff]
    %v2966 = vld [vmem:[#allocation1 + $0x9] sm:$0xff]
    %v2967 = vld [vmem:[#allocation1 + $0x12] sm:$0xff]
    %2968 = vrot.lane.b32.xlu0 %v2965, 112
    %v2969 = vpop.permute.xlu0 %2968
    %2970 = vrot.lane.b32.xlu0 %v2966, 112
    %v2971 = vpop.permute.xlu0 %2970
    %2972 = vrot.lane.b32.xlu0 %v2967, 112
    %v2973 = vpop.permute.xlu0 %2972
    %v2974 = vsel %vm521, %v2969, %v2971
    %v2975 = vsel %vm521, %v2971, %v2973
    %v2978 = vsel %vm114, %v2958, %v2974
    %v2979 = vsel %vm115, %v2959, %v2975
    %s2980 = sld [smem:[#allocation11 + $0x3c]]
    %v2981 = vstv %s2980
    %v2982 = vmul.f32 %v2981, %v2978
    %v2983 = vmul.f32 %v2981, %v2979
    %v2984 = vadd.f32 %v2926, %v2982
    %v2985 = vadd.f32 %v2927, %v2983
    %s2986 = sld [smem:[#allocation11 + $0x3d]]
    %v2987 = vstv %s2986
    %v2988 = vmul.f32 %v2987, %v2978
    %v2989 = vmul.f32 %v2987, %v2979
    %v2990 = vadd.f32 %v2932, %v2988
    %v2991 = vadd.f32 %v2933, %v2989
    %s2992 = sld [smem:[#allocation11 + $0x3e]]
    %v2993 = vstv %s2992
    %v2994 = vmul.f32 %v2993, %v2978
    %v2995 = vmul.f32 %v2993, %v2979
    %v2996 = vadd.f32 %v2938, %v2994
    %v2997 = vadd.f32 %v2939, %v2995
    %s2998 = sld [smem:[#allocation11 + $0x3f]]
    %v2999 = vstv %s2998
    %v3000 = vmul.f32 %v2999, %v2978
    %v3001 = vmul.f32 %v2999, %v2979
    %v3002 = vadd.f32 %v2944, %v3000
    %v3003 = vadd.f32 %v2945, %v3001
    %v3004 = vsel %vm114, %v2308, %v2342
    %v3005 = vsel %vm115, %v2309, %v2343
    %s3006 = sld [smem:[#allocation11 + $0x40]]
    %v3007 = vstv %s3006
    %v3008 = vmul.f32 %v3007, %v3004
    %v3009 = vmul.f32 %v3007, %v3005
    %v3010 = vadd.f32 %v2984, %v3008
    %v3011 = vadd.f32 %v2985, %v3009
    %s3012 = sld [smem:[#allocation11 + $0x41]]
    %v3013 = vstv %s3012
    %v3014 = vmul.f32 %v3013, %v3004
    %v3015 = vmul.f32 %v3013, %v3005
    %v3016 = vadd.f32 %v2990, %v3014
    %v3017 = vadd.f32 %v2991, %v3015
    %s3018 = sld [smem:[#allocation11 + $0x42]]
    %v3019 = vstv %s3018
    %v3020 = vmul.f32 %v3019, %v3004
    %v3021 = vmul.f32 %v3019, %v3005
    %v3022 = vadd.f32 %v2996, %v3020
    %v3023 = vadd.f32 %v2997, %v3021
    %s3024 = sld [smem:[#allocation11 + $0x43]]
    %v3025 = vstv %s3024
    %v3026 = vmul.f32 %v3025, %v3004
    %v3027 = vmul.f32 %v3025, %v3005
    %v3028 = vadd.f32 %v3002, %v3026
    %v3029 = vadd.f32 %v3003, %v3027
    %v3030 = vsel %vm114, %v2402, %v2436
    %v3031 = vsel %vm115, %v2403, %v2437
    %s3032 = sld [smem:[#allocation11 + $0x44]]
    %v3033 = vstv %s3032
    %v3034 = vmul.f32 %v3033, %v3030
    %v3035 = vmul.f32 %v3033, %v3031
    %v3036 = vadd.f32 %v3010, %v3034
    %v3037 = vadd.f32 %v3011, %v3035
    %s3038 = sld [smem:[#allocation11 + $0x45]]
    %v3039 = vstv %s3038
    %v3040 = vmul.f32 %v3039, %v3030
    %v3041 = vmul.f32 %v3039, %v3031
    %v3042 = vadd.f32 %v3016, %v3040
    %v3043 = vadd.f32 %v3017, %v3041
    %s3044 = sld [smem:[#allocation11 + $0x46]]
    %v3045 = vstv %s3044
    %v3046 = vmul.f32 %v3045, %v3030
    %v3047 = vmul.f32 %v3045, %v3031
    %v3048 = vadd.f32 %v3022, %v3046
    %v3049 = vadd.f32 %v3023, %v3047
    %s3050 = sld [smem:[#allocation11 + $0x47]]
    %v3051 = vstv %s3050
    %v3052 = vmul.f32 %v3051, %v3030
    %v3053 = vmul.f32 %v3051, %v3031
    %v3054 = vadd.f32 %v3028, %v3052
    %v3055 = vadd.f32 %v3029, %v3053
    %v3056 = vadd.f32 %v2444, %v2816
    %v3057 = vadd.f32 %v2445, %v2817
    %v3058 = vadd.f32 %v3056, %v3036
    %v3059 = vadd.f32 %v3057, %v3037
    %s3060 = sld [smem:[#allocation13]]
    %v3061 = vstv %s3060
    %v3062 = vadd.f32 %v3058, %v3061
    %v3063 = vadd.f32 %v3059, %v3061
    %v3064 = vmax.f32 %v3062, 0.0
    %v3065 = vmax.f32 %v3063, 0.0
    %v3066 = vld [vmem:[#allocation4] ss:$4 sm:$0x3]
    %s3067 = scalar_lea.vmem [#allocation4], 8
    %v3068 = vld [vmem:[%s3067] ss:$4 sm:$0x3]
    %3071 = vst [vmem:[#allocation1] ss:$9 sm:$0xff] %v3066
    %s3072 = scalar_lea.vmem [#allocation1], 1
    %3073 = vst [vmem:[%s3072] ss:$9 sm:$0xff] %v3068
    %v3074 = vld [vmem:[#allocation1] sm:$0xff]
    %v3075 = vld [vmem:[#allocation1 + $0x9] sm:$0xff]
    %v3078 = vadd.f32 %v3064, %v3074
    %v3079 = vadd.f32 %v3065, %v3075
    %v3082 = vrot.slane %v3079, 7
    %v3083 = vsel %vm1896, %v3078, %v3082
    %v3084 = vsel %vm1898, %v3078, %v3082
    %v3085 = vrot.slane %v3084, 1
    %3088 = vst.msk [vmem:[#allocation14] ss:$4 sm:$0x3] %vm1906, %v3083
    %s3089 = scalar_lea.vmem [#allocation14], 8
    %3090 = vst.msk [vmem:[%s3089] ss:$4 sm:$0x3] %vm1906, %v3085
    %v3091 = vadd.f32 %v2450, %v2822
    %v3092 = vadd.f32 %v2451, %v2823
    %v3093 = vadd.f32 %v3091, %v3042
    %v3094 = vadd.f32 %v3092, %v3043
    %s3095 = sld [smem:[#allocation13 + $0x1]]
    %v3096 = vstv %s3095
    %v3097 = vadd.f32 %v3093, %v3096
    %v3098 = vadd.f32 %v3094, %v3096
    %v3099 = vmax.f32 %v3097, 0.0
    %v3100 = vmax.f32 %v3098, 0.0
    %s3101 = scalar_lea.vmem [#allocation4], 1
    %v3102 = vld [vmem:[%s3101] ss:$4 sm:$0x3]
    %s3103 = scalar_lea.vmem [#allocation4], 9
    %v3104 = vld [vmem:[%s3103] ss:$4 sm:$0x3]
    %3107 = vst [vmem:[#allocation1] ss:$9 sm:$0xff] %v3102
    %s3108 = scalar_lea.vmem [#allocation1], 1
    %3109 = vst [vmem:[%s3108] ss:$9 sm:$0xff] %v3104
    %v3110 = vld [vmem:[#allocation1] sm:$0xff]
    %v3111 = vld [vmem:[#allocation1 + $0x9] sm:$0xff]
    %v3114 = vadd.f32 %v3099, %v3110
    %v3115 = vadd.f32 %v3100, %v3111
    %v3118 = vrot.slane %v3115, 7
    %v3119 = vsel %vm1896, %v3114, %v3118
    %v3120 = vsel %vm1898, %v3114, %v3118
    %v3121 = vrot.slane %v3120, 1
    %s3124 = scalar_lea.vmem [#allocation14], 1
    %3125 = vst.msk [vmem:[%s3124] ss:$4 sm:$0x3] %vm1906, %v3119
    %s3126 = scalar_lea.vmem [#allocation14], 9
    %3127 = vst.msk [vmem:[%s3126] ss:$4 sm:$0x3] %vm1906, %v3121
    %v3128 = vadd.f32 %v2456, %v2828
    %v3129 = vadd.f32 %v2457, %v2829
    %v3130 = vadd.f32 %v3128, %v3048
    %v3131 = vadd.f32 %v3129, %v3049
    %s3132 = sld [smem:[#allocation13 + $0x2]]
    %v3133 = vstv %s3132
    %v3134 = vadd.f32 %v3130, %v3133
    %v3135 = vadd.f32 %v3131, %v3133
    %v3136 = vmax.f32 %v3134, 0.0
    %v3137 = vmax.f32 %v3135, 0.0
    %s3138 = scalar_lea.vmem [#allocation4], 2
    %v3139 = vld [vmem:[%s3138] ss:$4 sm:$0x3]
    %s3140 = scalar_lea.vmem [#allocation4], 10
    %v3141 = vld [vmem:[%s3140] ss:$4 sm:$0x3]
    %3144 = vst [vmem:[#allocation1] ss:$9 sm:$0xff] %v3139
    %s3145 = scalar_lea.vmem [#allocation1], 1
    %3146 = vst [vmem:[%s3145] ss:$9 sm:$0xff] %v3141
    %v3147 = vld [vmem:[#allocation1] sm:$0xff]
    %v3148 = vld [vmem:[#allocation1 + $0x9] sm:$0xff]
    %v3151 = vadd.f32 %v3136, %v3147
    %v3152 = vadd.f32 %v3137, %v3148
    %v3155 = vrot.slane %v3152, 7
    %v3156 = vsel %vm1896, %v3151, %v3155
    %v3157 = vsel %vm1898, %v3151, %v3155
    %v3158 = vrot.slane %v3157, 1
    %s3161 = scalar_lea.vmem [#allocation14], 2
    %3162 = vst.msk [vmem:[%s3161] ss:$4 sm:$0x3] %vm1906, %v3156
    %s3163 = scalar_lea.vmem [#allocation14], 10
    %3164 = vst.msk [vmem:[%s3163] ss:$4 sm:$0x3] %vm1906, %v3158
    %v3165 = vadd.f32 %v2462, %v2834
    %v3166 = vadd.f32 %v2463, %v2835
    %v3167 = vadd.f32 %v3165, %v3054
    %v3168 = vadd.f32 %v3166, %v3055
    %s3169 = sld [smem:[#allocation13 + $0x3]]
    %v3170 = vstv %s3169
    %v3171 = vadd.f32 %v3167, %v3170
    %v3172 = vadd.f32 %v3168, %v3170
    %v3173 = vmax.f32 %v3171, 0.0
    %v3174 = vmax.f32 %v3172, 0.0
    %s3175 = scalar_lea.vmem [#allocation4], 3
    %v3176 = vld [vmem:[%s3175] ss:$4 sm:$0x3]
    %s3177 = scalar_lea.vmem [#allocation4], 11
    %v3178 = vld [vmem:[%s3177] ss:$4 sm:$0x3]
    %3181 = vst [vmem:[#allocation1] ss:$9 sm:$0xff] %v3176
    %s3182 = scalar_lea.vmem [#allocation1], 1
    %3183 = vst [vmem:[%s3182] ss:$9 sm:$0xff] %v3178
    %v3184 = vld [vmem:[#allocation1] sm:$0xff]
    %v3185 = vld [vmem:[#allocation1 + $0x9] sm:$0xff]
    %v3188 = vadd.f32 %v3173, %v3184
    %v3189 = vadd.f32 %v3174, %v3185
    %v3192 = vrot.slane %v3189, 7
    %v3193 = vsel %vm1896, %v3188, %v3192
    %v3194 = vsel %vm1898, %v3188, %v3192
    %v3195 = vrot.slane %v3194, 1
    %s3198 = scalar_lea.vmem [#allocation14], 3
    %3199 = vst.msk [vmem:[%s3198] ss:$4 sm:$0x3] %vm1906, %v3193
    %s3200 = scalar_lea.vmem [#allocation14], 11
    %3201 = vst.msk [vmem:[%s3200] ss:$4 sm:$0x3] %vm1906, %v3195
    // Predicated region
    $region42: #{tpu_custom_call.1} parent=1 // pred_check
      _
    $region43: #{tpu_custom_call.1} parent=1 // pred_check_branch
      %3203 = sbr.rel (0) target = $region45
    $region44: #{tpu_custom_call.1} parent=1 // pred_region
      %3205 = vsyncadd [#allocation6], 0
      %s3206 = sshll.u32 [#allocation14], 4
      %s3207 = int_to_ptr.vmem [resolvable:$true] %s3206
      %s3208 = sshll.u32 %s5, 4
      %s3209 = int_to_ptr.hbm [resolvable:$true] %s3208
      %3214 = dma.vmem_to_hbm [thread:$0]  %s3207, 256, %s3209, [#allocation6], 128, 128, 8
    $region45: #{tpu_custom_call.1} parent=1 // pred_fallthru
      _
    // Predicated region
    $region46: #{tpu_custom_call.1} parent=1 // pred_check
      _
    $region47: #{tpu_custom_call.1} parent=1 // pred_check_branch
      %3216 = sbr.rel (0) target = $region49
    $region48: #{tpu_custom_call.1} parent=1 // pred_region
      %3218 = dma.done [#allocation6], 256
    $region49: #{tpu_custom_call.1} parent=1 // pred_fallthru
      _
    %3219 = vsyncpa [#allocation5], 1
    %3220 = vsyncpa [#allocation6], 1
    %3221 = vsyncpa [#allocation7], 1
    %3222 = vsyncpa [#allocation8], 1
    %3223 = vsyncpa [#allocation12], 1

</llo_original>
